<compile_context>
chip_gen: v7x
topology: tpu7x:2x2x1
jax: 0.10.0
libtpu: 0.0.40
codegen_flags: <defaults>
</compile_context>

<pallas_src>
import numpy as np
import jax
import jax.numpy as jnp
from jax.experimental import pallas as pl
from jax.experimental.pallas import tpu as pltpu

BN_EPS = 1e-5

# Geometry implied by the module (Linear(1024,...) forces the conv3 output 64*4*4):
H0, W0 = 8, 12          # input spatial, NCHW (B, 1, 8, 12)
C1, C2, C3 = 16, 32, 64
P = 2                   # padding of every conv
W1 = 12                 # conv1 output width (== W0)
HP, WP = 4, 6           # spatial after 2x2 max-pool
H2, W2 = 4, 4           # conv2 output spatial
H3, W3 = 4, 4           # conv3 output spatial
HP1 = H0 + 2 * P        # 12 padded rows per sample for conv1
HP2 = HP + 2 * P        # 8  padded rows per sample for conv2
HP3 = H2 + 2 * P        # 8  padded rows per sample for conv3
NC1 = 256               # conv1 toeplitz cols: (parity:0/128)(pooled-w:6)(chan:16), 2x128 aligned
NC2 = W2 * C2           # 128
NC3 = W3 * C3           # 256
KH1, KH2, KH3 = 5, 5, 5


# ---------------------------------------------------------------------------
# The single fused kernel (whole network, VMEM resident)
# ---------------------------------------------------------------------------
def _make_cnn_kernel(B):
    RV1 = B * HP1 - KH1 + 1
    RV2 = B * HP2 - KH2 + 1
    RV3 = B * HP3 - KH3 + 1

    def kernel(x_ref,
               t1_ref, s1_ref, b1_ref,
               t2_ref, s2_ref, b2_ref,
               t3_ref, s3_ref, b3_ref,
               w4_ref, s4_ref, b4_ref,
               w5_ref, s5_ref, b5_ref,
               w6_ref, s6_ref, b6_ref,
               wo_ref, bo_ref,
               out_ref, y3_ref,
               pad1, pad2, pad3, xf):
        f32 = jnp.float32

        # ---- conv1 (+BN+ReLU): KH matmuls against W-Toeplitz weights --------
        pad1[...] = jnp.zeros(pad1.shape, f32)
        for b in range(B):
            pad1[b * HP1 + P: b * HP1 + P + H0, :] = x_ref[b * H0:(b + 1) * H0, :]
        acc = jnp.dot(pad1[0:RV1, :], t1_ref[0], preferred_element_type=f32)
        for i in range(1, KH1):
            acc += jnp.dot(pad1[i:i + RV1, :], t1_ref[i], preferred_element_type=f32)
        y1 = jnp.maximum(acc * s1_ref[...] + b1_ref[...], 0.0)

        # ---- fused 2x2 max-pool: rows give H, aligned column halves give W ---
        pad2[...] = jnp.zeros(pad2.shape, f32)
        for b in range(B):
            for p in range(HP):
                r = b * HP1 + 2 * p
                hmax = jnp.maximum(y1[r:r + 1, :], y1[r + 1:r + 2, :])
                wmax = jnp.maximum(hmax[:, 0:WP * C1], hmax[:, 128:128 + WP * C1])
                pad2[b * HP2 + P + p: b * HP2 + P + p + 1, :] = wmax

        # ---- conv2 (+BN+ReLU) ------------------------------------------------
        acc = jnp.dot(pad2[0:RV2, :], t2_ref[0], preferred_element_type=f32)
        for i in range(1, KH2):
            acc += jnp.dot(pad2[i:i + RV2, :], t2_ref[i], preferred_element_type=f32)
        y2 = jnp.maximum(acc * s2_ref[...] + b2_ref[...], 0.0)

        pad3[...] = jnp.zeros(pad3.shape, f32)
        for b in range(B):
            pad3[b * HP3 + P: b * HP3 + P + H2, :] = y2[b * HP2: b * HP2 + H2, :]

        # ---- conv3 (+BN+ReLU) ------------------------------------------------
        acc = jnp.dot(pad3[0:RV3, :], t3_ref[0], preferred_element_type=f32)
        for i in range(1, KH3):
            acc += jnp.dot(pad3[i:i + RV3, :], t3_ref[i], preferred_element_type=f32)
        y3 = jnp.maximum(acc * s3_ref[...] + b3_ref[...], 0.0)

        # conv3 activation out (x1) + flatten into (B, 1024) scratch (lane-aligned blocks)
        for b in range(B):
            y3_ref[b * H3:(b + 1) * H3, :] = y3[b * HP3: b * HP3 + H3, :]
            for oh in range(H3):
                xf[b:b + 1, oh * NC3:(oh + 1) * NC3] = y3[b * HP3 + oh: b * HP3 + oh + 1, :]

        # ---- fused FC head: fc1/fc2/fc3 (+BN+ReLU) and out (+log_softmax) ----
        h = xf[...]
        h = jnp.maximum(jnp.dot(h, w4_ref[...], preferred_element_type=f32)
                        * s4_ref[...] + b4_ref[...], 0.0)
        h = jnp.maximum(jnp.dot(h, w5_ref[...], preferred_element_type=f32)
                        * s5_ref[...] + b5_ref[...], 0.0)
        h = jnp.maximum(jnp.dot(h, w6_ref[...], preferred_element_type=f32)
                        * s6_ref[...] + b6_ref[...], 0.0)
        logits = jnp.dot(h, wo_ref[...], preferred_element_type=f32) + bo_ref[...]
        z = logits - jnp.max(logits, axis=-1, keepdims=True)
        out_ref[...] = z - jnp.log(jnp.sum(jnp.exp(z), axis=-1, keepdims=True))

    return kernel


def cnn_forward(kparams, x):
    """x: NCHW (B, 1, 8, 12) -> (log_softmax output (B, 9), conv3 activation (B, 64, 4, 4))."""
    B = x.shape[0]
    x2d = x.reshape(B * H0, W0)                    # (b*h, w) layout, Cin == 1
    vmem = pl.BlockSpec(memory_space=pltpu.MemorySpace.VMEM)
    out, y3 = pl.pallas_call(
        _make_cnn_kernel(B),
        out_shape=(jax.ShapeDtypeStruct((B, 9), jnp.float32),
                   jax.ShapeDtypeStruct((B * H3, NC3), jnp.float32)),
        in_specs=[vmem] * 21,
        out_specs=(vmem, vmem),
        scratch_shapes=[
            pltpu.VMEM((B * HP1, W0), jnp.float32),        # padded conv1 input
            pltpu.VMEM((B * HP2, WP * C1), jnp.float32),   # padded (pooled) conv2 input
            pltpu.VMEM((B * HP3, W2 * C2), jnp.float32),   # padded conv3 input
            pltpu.VMEM((B, H3 * NC3), jnp.float32),        # flattened FC input (B, 1024)
        ],
    )(x2d,
      kparams["t1"], kparams["s1"], kparams["b1"],
      kparams["t2"], kparams["s2"], kparams["b2"],
      kparams["t3"], kparams["s3"], kparams["b3"],
      kparams["w4"], kparams["s4"], kparams["b4"],
      kparams["w5"], kparams["s5"], kparams["b5"],
      kparams["w6"], kparams["s6"], kparams["b6"],
      kparams["wo"], kparams["bo"])
    x1 = y3.reshape(B, H3, W3, C3).transpose(0, 3, 1, 2)   # tiny NHWC->NCHW for the aux output
    return out, x1


# ---------------------------------------------------------------------------
# Init-time constant preparation (BN folding, Toeplitz expansion, permutations)
# ---------------------------------------------------------------------------
def _fold_bn(bias, bn):
    gamma, beta, mean, var = (np.asarray(a, np.float32) for a in bn)
    scale = gamma / np.sqrt(var + BN_EPS)
    shift = beta + (np.asarray(bias, np.float32) - mean) * scale
    return scale, shift


def _toeplitz(w, w_in, n_ow, pad_w, ncols, col_of):
    """Per-row-offset conv weight: t[i, w*Cin+c, col_of(ow)+co] = w[co, c, i, w+pad-ow]."""
    w = np.asarray(w, np.float32)
    cout, cin, kh, kw = w.shape
    t = np.zeros((kh, w_in * cin, ncols), np.float32)
    for i in range(kh):
        for ow in range(n_ow):
            for j in range(kw):
                wi = ow + j - pad_w
                if 0 <= wi < w_in:
                    c0 = col_of(ow)
                    t[i, wi * cin:(wi + 1) * cin, c0:c0 + cout] = w[:, :, i, j].T
    return t


def prepare_params(params):
    s1, b1 = _fold_bn(params["conv1_b"], params["bn1"])
    s2, b2 = _fold_bn(params["conv2_b"], params["bn2"])
    s3, b3 = _fold_bn(params["conv3_b"], params["bn3"])
    s4, b4 = _fold_bn(params["fc1_b"], params["bn4"])
    s5, b5 = _fold_bn(params["fc2_b"], params["bn5"])
    s6, b6 = _fold_bn(params["fc3_b"], params["bn6"])

    # conv1 output columns laid out (w-parity | pooled-w | chan) so the W-pool is a
    # max of two 128-lane-aligned column halves.
    t1 = _toeplitz(params["conv1_w"], W0, W1, P, NC1,
                   lambda ow: (ow % 2) * (NC1 // 2) + (ow // 2) * C1)
    t2 = _toeplitz(params["conv2_w"], WP, W2, P, NC2, lambda ow: ow * C2)
    t3 = _toeplitz(params["conv3_w"], W2, W3, P, NC3, lambda ow: ow * C3)

    # fc1 rows permuted so it consumes the kernel's (oh, ow, chan) flatten order
    # exactly as PyTorch's (chan, oh, ow) .view() would.
    w4 = np.asarray(params["fc1_w"], np.float32)
    w4 = w4.reshape(256, C3, H3, W3).transpose(2, 3, 1, 0).reshape(H3 * W3 * C3, 256)
    w5 = np.asarray(params["fc2_w"], np.float32).T
    w6 = np.asarray(params["fc3_w"], np.float32).T
    wo = np.asarray(params["out_w"], np.float32).T
    bo = np.asarray(params["out_b"], np.float32)[None, :]

    j = jnp.asarray
    return {
        "t1": j(t1), "s1": j(np.tile(s1, NC1 // C1)[None, :]), "b1": j(np.tile(b1, NC1 // C1)[None, :]),
        "t2": j(t2), "s2": j(np.tile(s2, NC2 // C2)[None, :]), "b2": j(np.tile(b2, NC2 // C2)[None, :]),
        "t3": j(t3), "s3": j(np.tile(s3, NC3 // C3)[None, :]), "b3": j(np.tile(b3, NC3 // C3)[None, :]),
        "w4": j(w4), "s4": j(s4[None, :]), "b4": j(b4[None, :]),
        "w5": j(w5), "s5": j(s5[None, :]), "b5": j(b5[None, :]),
        "w6": j(w6), "s6": j(s6[None, :]), "b6": j(b6[None, :]),
        "wo": j(wo), "bo": j(bo),
    }


# ---------------------------------------------------------------------------
# Deterministic synthetic parameters (torch layout) and a pure-JAX reference
# ---------------------------------------------------------------------------
def _bn_params(dim):
    r = jnp.arange(dim, dtype=jnp.float32)
    gamma = 1.0 + 0.01 * r
    beta = 0.02 * r - 0.1
    mean = 0.01 * jnp.sin(r)
    var = 1.0 + 0.05 * jnp.cos(r) ** 2
    return (gamma, beta, mean, var)


def init_params(key):
    ks = jax.random.split(key, 14)
    n = lambda k, shape, s=0.05: jax.random.normal(k, shape, jnp.float32) * s
    return {
        "conv1_w": n(ks[0], (16, 1, 5, 5)),  "conv1_b": n(ks[1], (16,)),  "bn1": _bn_params(16),
        "conv2_w": n(ks[2], (32, 16, 5, 7)), "conv2_b": n(ks[3], (32,)),  "bn2": _bn_params(32),
        "conv3_w": n(ks[4], (64, 32, 5, 5)), "conv3_b": n(ks[5], (64,)),  "bn3": _bn_params(64),
        "fc1_w": n(ks[6], (256, 1024)),      "fc1_b": n(ks[7], (256,)),   "bn4": _bn_params(256),
        "fc2_w": n(ks[8], (64, 256)),        "fc2_b": n(ks[9], (64,)),    "bn5": _bn_params(64),
        "fc3_w": n(ks[10], (16, 64)),        "fc3_b": n(ks[11], (16,)),   "bn6": _bn_params(16),
        "out_w": n(ks[12], (9, 16)),         "out_b": n(ks[13], (9,)),
    }


def _reference_forward(params, x):
    hp = jax.lax.Precision.HIGHEST

    def bn_c(y, bnp):
        g, b, m, v = bnp
        s = (g / jnp.sqrt(v + BN_EPS))
        return (y - m[None, :, None, None]) * s[None, :, None, None] + b[None, :, None, None]

    def bn_l(y, bnp):
        g, b, m, v = bnp
        return (y - m) * (g / jnp.sqrt(v + BN_EPS)) + b

    def conv(y, w, b, pad):
        o = jax.lax.conv_general_dilated(y, w, (1, 1), ((pad, pad), (pad, pad)),
                                         dimension_numbers=("NCHW", "OIHW", "NCHW"),
                                         precision=hp)
        return o + b[None, :, None, None]

    y = jnp.maximum(bn_c(conv(x, params["conv1_w"], params["conv1_b"], P), params["bn1"]), 0.0)
    B, C, H, W = y.shape
    y = y.reshape(B, C, H // 2, 2, W // 2, 2).max(axis=(3, 5))
    y = jnp.maximum(bn_c(conv(y, params["conv2_w"], params["conv2_b"], P), params["bn2"]), 0.0)
    y = jnp.maximum(bn_c(conv(y, params["conv3_w"], params["conv3_b"], P), params["bn3"]), 0.0)
    x1 = y
    f = y.reshape(B, -1)
    f = jnp.maximum(bn_l(jnp.dot(f, params["fc1_w"].T, precision=hp) + params["fc1_b"], params["bn4"]), 0.0)
    f = jnp.maximum(bn_l(jnp.dot(f, params["fc2_w"].T, precision=hp) + params["fc2_b"], params["bn5"]), 0.0)
    f = jnp.maximum(bn_l(jnp.dot(f, params["fc3_w"].T, precision=hp) + params["fc3_b"], params["bn6"]), 0.0)
    logits = jnp.dot(f, params["out_w"].T, precision=hp) + params["out_b"]
    return jax.nn.log_softmax(logits, axis=-1), x1


if __name__ == "__main__":
    key = jax.random.PRNGKey(0)
    k_params, k_x = jax.random.split(key)
    params = init_params(k_params)
    kparams = prepare_params(params)

    # Input chosen so the flattened conv3 output is 1024 = 64 * 4 * 4
    # (8x12 -> pool -> 4x6 -> conv(5,7) pad 2 -> 4x4 -> conv(5,5) pad 2 -> 4x4).
    x = jax.random.normal(k_x, (2, 1, H0, W0), jnp.float32)

    fwd = jax.jit(cnn_forward)
    output, x1 = fwd(kparams, x)
    jax.block_until_ready(output)
    jax.block_until_ready(x1)
    assert output.shape == (2, 9) and x1.shape == (2, 64, 4, 4)

    ref_out, ref_x1 = _reference_forward(params, x)
    np.testing.assert_allclose(np.asarray(x1), np.asarray(ref_x1), rtol=2e-2, atol=2e-3)
    np.testing.assert_allclose(np.asarray(output), np.asarray(ref_out), rtol=2e-2, atol=2e-3)

    print("KERNEL_OK")
</pallas_src>

<mosaic_0001>
module attributes {stable_mosaic.version = 11 : i64} {
  func.func @kernel(%arg0: memref<16x12xf32, #tpu.memory_space<vmem>>, %arg1: memref<5x12x256xf32, #tpu.memory_space<vmem>>, %arg2: memref<1x256xf32, #tpu.memory_space<vmem>>, %arg3: memref<1x256xf32, #tpu.memory_space<vmem>>, %arg4: memref<5x96x128xf32, #tpu.memory_space<vmem>>, %arg5: memref<1x128xf32, #tpu.memory_space<vmem>>, %arg6: memref<1x128xf32, #tpu.memory_space<vmem>>, %arg7: memref<5x128x256xf32, #tpu.memory_space<vmem>>, %arg8: memref<1x256xf32, #tpu.memory_space<vmem>>, %arg9: memref<1x256xf32, #tpu.memory_space<vmem>>, %arg10: memref<1024x256xf32, #tpu.memory_space<vmem>>, %arg11: memref<1x256xf32, #tpu.memory_space<vmem>>, %arg12: memref<1x256xf32, #tpu.memory_space<vmem>>, %arg13: memref<256x64xf32, #tpu.memory_space<vmem>>, %arg14: memref<1x64xf32, #tpu.memory_space<vmem>>, %arg15: memref<1x64xf32, #tpu.memory_space<vmem>>, %arg16: memref<64x16xf32, #tpu.memory_space<vmem>>, %arg17: memref<1x16xf32, #tpu.memory_space<vmem>>, %arg18: memref<1x16xf32, #tpu.memory_space<vmem>>, %arg19: memref<16x9xf32, #tpu.memory_space<vmem>>, %arg20: memref<1x9xf32, #tpu.memory_space<vmem>>, %arg21: memref<2x9xf32, #tpu.memory_space<vmem>>, %arg22: memref<8x256xf32, #tpu.memory_space<vmem>>, %arg23: memref<24x12xf32, #tpu.memory_space<vmem>>, %arg24: memref<16x96xf32, #tpu.memory_space<vmem>>, %arg25: memref<16x128xf32, #tpu.memory_space<vmem>>, %arg26: memref<2x1024xf32, #tpu.memory_space<vmem>>) attributes {dimension_semantics = [], scalar_prefetch = 0 : i64, scratch_operands = 4 : i64, tpu.core_type = #tpu.core_type<tc>} {
    %cst = arith.constant 0.000000e+00 : f32
    %0 = vector.broadcast %cst : f32 to vector<24x12xf32>
    %c0 = arith.constant 0 : index
    %c0_0 = arith.constant 0 : index
    %1 = vector.load %arg23[%c0, %c0_0] : memref<24x12xf32, #tpu.memory_space<vmem>>, vector<24x12xf32>
    tpu.vector_store %arg23[%c0, %c0_0], %0 {strides = array<i32>} : memref<24x12xf32, #tpu.memory_space<vmem>>, vector<24x12xf32>,
    %c0_1 = arith.constant 0 : index
    %c0_2 = arith.constant 0 : index
    %2 = vector.load %arg0[%c0_1, %c0_2] : memref<16x12xf32, #tpu.memory_space<vmem>>, vector<8x12xf32>
    %c2 = arith.constant 2 : index
    %c0_3 = arith.constant 0 : index
    %3 = vector.load %arg23[%c2, %c0_3] : memref<24x12xf32, #tpu.memory_space<vmem>>, vector<8x12xf32>
    tpu.vector_store %arg23[%c2, %c0_3], %2 {strides = array<i32>} : memref<24x12xf32, #tpu.memory_space<vmem>>, vector<8x12xf32>,
    %c8 = arith.constant 8 : index
    %c0_4 = arith.constant 0 : index
    %4 = vector.load %arg0[%c8, %c0_4] : memref<16x12xf32, #tpu.memory_space<vmem>>, vector<8x12xf32>
    %c14 = arith.constant 14 : index
    %c0_5 = arith.constant 0 : index
    %5 = vector.load %arg23[%c14, %c0_5] : memref<24x12xf32, #tpu.memory_space<vmem>>, vector<8x12xf32>
    tpu.vector_store %arg23[%c14, %c0_5], %4 {strides = array<i32>} : memref<24x12xf32, #tpu.memory_space<vmem>>, vector<8x12xf32>,
    %c0_6 = arith.constant 0 : index
    %c0_7 = arith.constant 0 : index
    %6 = vector.load %arg23[%c0_6, %c0_7] : memref<24x12xf32, #tpu.memory_space<vmem>>, vector<20x12xf32>
    %c0_8 = arith.constant 0 : index
    %c0_9 = arith.constant 0 : index
    %c0_10 = arith.constant 0 : index
    %7 = vector.load %arg1[%c0_8, %c0_9, %c0_10] : memref<5x12x256xf32, #tpu.memory_space<vmem>>, vector<1x12x256xf32>
    %8 = vector.shape_cast %7 : vector<1x12x256xf32> to vector<12x256xf32>
    %cst_11 = arith.constant dense<0.000000e+00> : vector<20x256xf32>
    %9 = tpu.matmul %6, %8, %cst_11 {dimension_numbers = #tpu.dot_dimension_numbers<[1], [0], [0], [1], [0, 0, 1, 1], [], []>} : vector<20x12xf32>, vector<12x256xf32>, vector<20x256xf32> -> vector<20x256xf32>
    %c1 = arith.constant 1 : index
    %c0_12 = arith.constant 0 : index
    %10 = vector.load %arg23[%c1, %c0_12] : memref<24x12xf32, #tpu.memory_space<vmem>>, vector<20x12xf32>
    %c1_13 = arith.constant 1 : index
    %c0_14 = arith.constant 0 : index
    %c0_15 = arith.constant 0 : index
    %11 = vector.load %arg1[%c1_13, %c0_14, %c0_15] : memref<5x12x256xf32, #tpu.memory_space<vmem>>, vector<1x12x256xf32>
    %12 = vector.shape_cast %11 : vector<1x12x256xf32> to vector<12x256xf32>
    %cst_16 = arith.constant dense<0.000000e+00> : vector<20x256xf32>
    %13 = tpu.matmul %10, %12, %cst_16 {dimension_numbers = #tpu.dot_dimension_numbers<[1], [0], [0], [1], [0, 0, 1, 1], [], []>} : vector<20x12xf32>, vector<12x256xf32>, vector<20x256xf32> -> vector<20x256xf32>
    %14 = arith.addf %9, %13 : vector<20x256xf32>
    %c2_17 = arith.constant 2 : index
    %c0_18 = arith.constant 0 : index
    %15 = vector.load %arg23[%c2_17, %c0_18] : memref<24x12xf32, #tpu.memory_space<vmem>>, vector<20x12xf32>
    %c2_19 = arith.constant 2 : index
    %c0_20 = arith.constant 0 : index
    %c0_21 = arith.constant 0 : index
    %16 = vector.load %arg1[%c2_19, %c0_20, %c0_21] : memref<5x12x256xf32, #tpu.memory_space<vmem>>, vector<1x12x256xf32>
    %17 = vector.shape_cast %16 : vector<1x12x256xf32> to vector<12x256xf32>
    %cst_22 = arith.constant dense<0.000000e+00> : vector<20x256xf32>
    %18 = tpu.matmul %15, %17, %cst_22 {dimension_numbers = #tpu.dot_dimension_numbers<[1], [0], [0], [1], [0, 0, 1, 1], [], []>} : vector<20x12xf32>, vector<12x256xf32>, vector<20x256xf32> -> vector<20x256xf32>
    %19 = arith.addf %14, %18 : vector<20x256xf32>
    %c3 = arith.constant 3 : index
    %c0_23 = arith.constant 0 : index
    %20 = vector.load %arg23[%c3, %c0_23] : memref<24x12xf32, #tpu.memory_space<vmem>>, vector<20x12xf32>
    %c3_24 = arith.constant 3 : index
    %c0_25 = arith.constant 0 : index
    %c0_26 = arith.constant 0 : index
    %21 = vector.load %arg1[%c3_24, %c0_25, %c0_26] : memref<5x12x256xf32, #tpu.memory_space<vmem>>, vector<1x12x256xf32>
    %22 = vector.shape_cast %21 : vector<1x12x256xf32> to vector<12x256xf32>
    %cst_27 = arith.constant dense<0.000000e+00> : vector<20x256xf32>
    %23 = tpu.matmul %20, %22, %cst_27 {dimension_numbers = #tpu.dot_dimension_numbers<[1], [0], [0], [1], [0, 0, 1, 1], [], []>} : vector<20x12xf32>, vector<12x256xf32>, vector<20x256xf32> -> vector<20x256xf32>
    %24 = arith.addf %19, %23 : vector<20x256xf32>
    %c4 = arith.constant 4 : index
    %c0_28 = arith.constant 0 : index
    %25 = vector.load %arg23[%c4, %c0_28] : memref<24x12xf32, #tpu.memory_space<vmem>>, vector<20x12xf32>
    %c4_29 = arith.constant 4 : index
    %c0_30 = arith.constant 0 : index
    %c0_31 = arith.constant 0 : index
    %26 = vector.load %arg1[%c4_29, %c0_30, %c0_31] : memref<5x12x256xf32, #tpu.memory_space<vmem>>, vector<1x12x256xf32>
    %27 = vector.shape_cast %26 : vector<1x12x256xf32> to vector<12x256xf32>
    %cst_32 = arith.constant dense<0.000000e+00> : vector<20x256xf32>
    %28 = tpu.matmul %25, %27, %cst_32 {dimension_numbers = #tpu.dot_dimension_numbers<[1], [0], [0], [1], [0, 0, 1, 1], [], []>} : vector<20x12xf32>, vector<12x256xf32>, vector<20x256xf32> -> vector<20x256xf32>
    %29 = arith.addf %24, %28 : vector<20x256xf32>
    %c0_33 = arith.constant 0 : index
    %c0_34 = arith.constant 0 : index
    %30 = vector.load %arg2[%c0_33, %c0_34] : memref<1x256xf32, #tpu.memory_space<vmem>>, vector<1x256xf32>
    %31 = vector.broadcast %30 : vector<1x256xf32> to vector<20x256xf32>
    %32 = arith.mulf %29, %31 : vector<20x256xf32>
    %c0_35 = arith.constant 0 : index
    %c0_36 = arith.constant 0 : index
    %33 = vector.load %arg3[%c0_35, %c0_36] : memref<1x256xf32, #tpu.memory_space<vmem>>, vector<1x256xf32>
    %34 = vector.broadcast %33 : vector<1x256xf32> to vector<20x256xf32>
    %35 = arith.addf %32, %34 : vector<20x256xf32>
    %cst_37 = arith.constant 0.000000e+00 : f32
    %36 = vector.broadcast %cst_37 : f32 to vector<20x256xf32>
    %37 = arith.maximumf %35, %36 : vector<20x256xf32>
    %cst_38 = arith.constant 0.000000e+00 : f32
    %38 = vector.broadcast %cst_38 : f32 to vector<16x96xf32>
    %c0_39 = arith.constant 0 : index
    %c0_40 = arith.constant 0 : index
    %39 = vector.load %arg24[%c0_39, %c0_40] : memref<16x96xf32, #tpu.memory_space<vmem>>, vector<16x96xf32>
    tpu.vector_store %arg24[%c0_39, %c0_40], %38 {strides = array<i32>} : memref<16x96xf32, #tpu.memory_space<vmem>>, vector<16x96xf32>,
    %40 = vector.extract_strided_slice %37 {offsets = [0, 0], sizes = [1, 256], strides = [1, 1]} : vector<20x256xf32> to vector<1x256xf32>
    %41 = vector.extract_strided_slice %37 {offsets = [1, 0], sizes = [1, 256], strides = [1, 1]} : vector<20x256xf32> to vector<1x256xf32>
    %42 = arith.maximumf %40, %41 : vector<1x256xf32>
    %43 = vector.extract_strided_slice %42 {offsets = [0, 0], sizes = [1, 96], strides = [1, 1]} : vector<1x256xf32> to vector<1x96xf32>
    %44 = vector.extract_strided_slice %42 {offsets = [0, 128], sizes = [1, 96], strides = [1, 1]} : vector<1x256xf32> to vector<1x96xf32>
    %45 = arith.maximumf %43, %44 : vector<1x96xf32>
    %c2_41 = arith.constant 2 : index
    %c0_42 = arith.constant 0 : index
    %46 = vector.load %arg24[%c2_41, %c0_42] : memref<16x96xf32, #tpu.memory_space<vmem>>, vector<1x96xf32>
    tpu.vector_store %arg24[%c2_41, %c0_42], %45 {strides = array<i32>} : memref<16x96xf32, #tpu.memory_space<vmem>>, vector<1x96xf32>,
    %47 = vector.extract_strided_slice %37 {offsets = [2, 0], sizes = [1, 256], strides = [1, 1]} : vector<20x256xf32> to vector<1x256xf32>
    %48 = vector.extract_strided_slice %37 {offsets = [3, 0], sizes = [1, 256], strides = [1, 1]} : vector<20x256xf32> to vector<1x256xf32>
    %49 = arith.maximumf %47, %48 : vector<1x256xf32>
    %50 = vector.extract_strided_slice %49 {offsets = [0, 0], sizes = [1, 96], strides = [1, 1]} : vector<1x256xf32> to vector<1x96xf32>
    %51 = vector.extract_strided_slice %49 {offsets = [0, 128], sizes = [1, 96], strides = [1, 1]} : vector<1x256xf32> to vector<1x96xf32>
    %52 = arith.maximumf %50, %51 : vector<1x96xf32>
    %c3_43 = arith.constant 3 : index
    %c0_44 = arith.constant 0 : index
    %53 = vector.load %arg24[%c3_43, %c0_44] : memref<16x96xf32, #tpu.memory_space<vmem>>, vector<1x96xf32>
    tpu.vector_store %arg24[%c3_43, %c0_44], %52 {strides = array<i32>} : memref<16x96xf32, #tpu.memory_space<vmem>>, vector<1x96xf32>,
    %54 = vector.extract_strided_slice %37 {offsets = [4, 0], sizes = [1, 256], strides = [1, 1]} : vector<20x256xf32> to vector<1x256xf32>
    %55 = vector.extract_strided_slice %37 {offsets = [5, 0], sizes = [1, 256], strides = [1, 1]} : vector<20x256xf32> to vector<1x256xf32>
    %56 = arith.maximumf %54, %55 : vector<1x256xf32>
    %57 = vector.extract_strided_slice %56 {offsets = [0, 0], sizes = [1, 96], strides = [1, 1]} : vector<1x256xf32> to vector<1x96xf32>
    %58 = vector.extract_strided_slice %56 {offsets = [0, 128], sizes = [1, 96], strides = [1, 1]} : vector<1x256xf32> to vector<1x96xf32>
    %59 = arith.maximumf %57, %58 : vector<1x96xf32>
    %c4_45 = arith.constant 4 : index
    %c0_46 = arith.constant 0 : index
    %60 = vector.load %arg24[%c4_45, %c0_46] : memref<16x96xf32, #tpu.memory_space<vmem>>, vector<1x96xf32>
    tpu.vector_store %arg24[%c4_45, %c0_46], %59 {strides = array<i32>} : memref<16x96xf32, #tpu.memory_space<vmem>>, vector<1x96xf32>,
    %61 = vector.extract_strided_slice %37 {offsets = [6, 0], sizes = [1, 256], strides = [1, 1]} : vector<20x256xf32> to vector<1x256xf32>
    %62 = vector.extract_strided_slice %37 {offsets = [7, 0], sizes = [1, 256], strides = [1, 1]} : vector<20x256xf32> to vector<1x256xf32>
    %63 = arith.maximumf %61, %62 : vector<1x256xf32>
    %64 = vector.extract_strided_slice %63 {offsets = [0, 0], sizes = [1, 96], strides = [1, 1]} : vector<1x256xf32> to vector<1x96xf32>
    %65 = vector.extract_strided_slice %63 {offsets = [0, 128], sizes = [1, 96], strides = [1, 1]} : vector<1x256xf32> to vector<1x96xf32>
    %66 = arith.maximumf %64, %65 : vector<1x96xf32>
    %c5 = arith.constant 5 : index
    %c0_47 = arith.constant 0 : index
    %67 = vector.load %arg24[%c5, %c0_47] : memref<16x96xf32, #tpu.memory_space<vmem>>, vector<1x96xf32>
    tpu.vector_store %arg24[%c5, %c0_47], %66 {strides = array<i32>} : memref<16x96xf32, #tpu.memory_space<vmem>>, vector<1x96xf32>,
    %68 = vector.extract_strided_slice %37 {offsets = [12, 0], sizes = [1, 256], strides = [1, 1]} : vector<20x256xf32> to vector<1x256xf32>
    %69 = vector.extract_strided_slice %37 {offsets = [13, 0], sizes = [1, 256], strides = [1, 1]} : vector<20x256xf32> to vector<1x256xf32>
    %70 = arith.maximumf %68, %69 : vector<1x256xf32>
    %71 = vector.extract_strided_slice %70 {offsets = [0, 0], sizes = [1, 96], strides = [1, 1]} : vector<1x256xf32> to vector<1x96xf32>
    %72 = vector.extract_strided_slice %70 {offsets = [0, 128], sizes = [1, 96], strides = [1, 1]} : vector<1x256xf32> to vector<1x96xf32>
    %73 = arith.maximumf %71, %72 : vector<1x96xf32>
    %c10 = arith.constant 10 : index
    %c0_48 = arith.constant 0 : index
    %74 = vector.load %arg24[%c10, %c0_48] : memref<16x96xf32, #tpu.memory_space<vmem>>, vector<1x96xf32>
    tpu.vector_store %arg24[%c10, %c0_48], %73 {strides = array<i32>} : memref<16x96xf32, #tpu.memory_space<vmem>>, vector<1x96xf32>,
    %75 = vector.extract_strided_slice %37 {offsets = [14, 0], sizes = [1, 256], strides = [1, 1]} : vector<20x256xf32> to vector<1x256xf32>
    %76 = vector.extract_strided_slice %37 {offsets = [15, 0], sizes = [1, 256], strides = [1, 1]} : vector<20x256xf32> to vector<1x256xf32>
    %77 = arith.maximumf %75, %76 : vector<1x256xf32>
    %78 = vector.extract_strided_slice %77 {offsets = [0, 0], sizes = [1, 96], strides = [1, 1]} : vector<1x256xf32> to vector<1x96xf32>
    %79 = vector.extract_strided_slice %77 {offsets = [0, 128], sizes = [1, 96], strides = [1, 1]} : vector<1x256xf32> to vector<1x96xf32>
    %80 = arith.maximumf %78, %79 : vector<1x96xf32>
    %c11 = arith.constant 11 : index
    %c0_49 = arith.constant 0 : index
    %81 = vector.load %arg24[%c11, %c0_49] : memref<16x96xf32, #tpu.memory_space<vmem>>, vector<1x96xf32>
    tpu.vector_store %arg24[%c11, %c0_49], %80 {strides = array<i32>} : memref<16x96xf32, #tpu.memory_space<vmem>>, vector<1x96xf32>,
    %82 = vector.extract_strided_slice %37 {offsets = [16, 0], sizes = [1, 256], strides = [1, 1]} : vector<20x256xf32> to vector<1x256xf32>
    %83 = vector.extract_strided_slice %37 {offsets = [17, 0], sizes = [1, 256], strides = [1, 1]} : vector<20x256xf32> to vector<1x256xf32>
    %84 = arith.maximumf %82, %83 : vector<1x256xf32>
    %85 = vector.extract_strided_slice %84 {offsets = [0, 0], sizes = [1, 96], strides = [1, 1]} : vector<1x256xf32> to vector<1x96xf32>
    %86 = vector.extract_strided_slice %84 {offsets = [0, 128], sizes = [1, 96], strides = [1, 1]} : vector<1x256xf32> to vector<1x96xf32>
    %87 = arith.maximumf %85, %86 : vector<1x96xf32>
    %c12 = arith.constant 12 : index
    %c0_50 = arith.constant 0 : index
    %88 = vector.load %arg24[%c12, %c0_50] : memref<16x96xf32, #tpu.memory_space<vmem>>, vector<1x96xf32>
    tpu.vector_store %arg24[%c12, %c0_50], %87 {strides = array<i32>} : memref<16x96xf32, #tpu.memory_space<vmem>>, vector<1x96xf32>,
    %89 = vector.extract_strided_slice %37 {offsets = [18, 0], sizes = [1, 256], strides = [1, 1]} : vector<20x256xf32> to vector<1x256xf32>
    %90 = vector.extract_strided_slice %37 {offsets = [19, 0], sizes = [1, 256], strides = [1, 1]} : vector<20x256xf32> to vector<1x256xf32>
    %91 = arith.maximumf %89, %90 : vector<1x256xf32>
    %92 = vector.extract_strided_slice %91 {offsets = [0, 0], sizes = [1, 96], strides = [1, 1]} : vector<1x256xf32> to vector<1x96xf32>
    %93 = vector.extract_strided_slice %91 {offsets = [0, 128], sizes = [1, 96], strides = [1, 1]} : vector<1x256xf32> to vector<1x96xf32>
    %94 = arith.maximumf %92, %93 : vector<1x96xf32>
    %c13 = arith.constant 13 : index
    %c0_51 = arith.constant 0 : index
    %95 = vector.load %arg24[%c13, %c0_51] : memref<16x96xf32, #tpu.memory_space<vmem>>, vector<1x96xf32>
    tpu.vector_store %arg24[%c13, %c0_51], %94 {strides = array<i32>} : memref<16x96xf32, #tpu.memory_space<vmem>>, vector<1x96xf32>,
    %c0_52 = arith.constant 0 : index
    %c0_53 = arith.constant 0 : index
    %96 = vector.load %arg24[%c0_52, %c0_53] : memref<16x96xf32, #tpu.memory_space<vmem>>, vector<12x96xf32>
    %c0_54 = arith.constant 0 : index
    %c0_55 = arith.constant 0 : index
    %c0_56 = arith.constant 0 : index
    %97 = vector.load %arg4[%c0_54, %c0_55, %c0_56] : memref<5x96x128xf32, #tpu.memory_space<vmem>>, vector<1x96x128xf32>
    %98 = vector.shape_cast %97 : vector<1x96x128xf32> to vector<96x128xf32>
    %cst_57 = arith.constant dense<0.000000e+00> : vector<12x128xf32>
    %99 = tpu.matmul %96, %98, %cst_57 {dimension_numbers = #tpu.dot_dimension_numbers<[1], [0], [0], [1], [0, 0, 1, 1], [], []>} : vector<12x96xf32>, vector<96x128xf32>, vector<12x128xf32> -> vector<12x128xf32>
    %c1_58 = arith.constant 1 : index
    %c0_59 = arith.constant 0 : index
    %100 = vector.load %arg24[%c1_58, %c0_59] : memref<16x96xf32, #tpu.memory_space<vmem>>, vector<12x96xf32>
    %c1_60 = arith.constant 1 : index
    %c0_61 = arith.constant 0 : index
    %c0_62 = arith.constant 0 : index
    %101 = vector.load %arg4[%c1_60, %c0_61, %c0_62] : memref<5x96x128xf32, #tpu.memory_space<vmem>>, vector<1x96x128xf32>
    %102 = vector.shape_cast %101 : vector<1x96x128xf32> to vector<96x128xf32>
    %cst_63 = arith.constant dense<0.000000e+00> : vector<12x128xf32>
    %103 = tpu.matmul %100, %102, %cst_63 {dimension_numbers = #tpu.dot_dimension_numbers<[1], [0], [0], [1], [0, 0, 1, 1], [], []>} : vector<12x96xf32>, vector<96x128xf32>, vector<12x128xf32> -> vector<12x128xf32>
    %104 = arith.addf %99, %103 : vector<12x128xf32>
    %c2_64 = arith.constant 2 : index
    %c0_65 = arith.constant 0 : index
    %105 = vector.load %arg24[%c2_64, %c0_65] : memref<16x96xf32, #tpu.memory_space<vmem>>, vector<12x96xf32>
    %c2_66 = arith.constant 2 : index
    %c0_67 = arith.constant 0 : index
    %c0_68 = arith.constant 0 : index
    %106 = vector.load %arg4[%c2_66, %c0_67, %c0_68] : memref<5x96x128xf32, #tpu.memory_space<vmem>>, vector<1x96x128xf32>
    %107 = vector.shape_cast %106 : vector<1x96x128xf32> to vector<96x128xf32>
    %cst_69 = arith.constant dense<0.000000e+00> : vector<12x128xf32>
    %108 = tpu.matmul %105, %107, %cst_69 {dimension_numbers = #tpu.dot_dimension_numbers<[1], [0], [0], [1], [0, 0, 1, 1], [], []>} : vector<12x96xf32>, vector<96x128xf32>, vector<12x128xf32> -> vector<12x128xf32>
    %109 = arith.addf %104, %108 : vector<12x128xf32>
    %c3_70 = arith.constant 3 : index
    %c0_71 = arith.constant 0 : index
    %110 = vector.load %arg24[%c3_70, %c0_71] : memref<16x96xf32, #tpu.memory_space<vmem>>, vector<12x96xf32>
    %c3_72 = arith.constant 3 : index
    %c0_73 = arith.constant 0 : index
    %c0_74 = arith.constant 0 : index
    %111 = vector.load %arg4[%c3_72, %c0_73, %c0_74] : memref<5x96x128xf32, #tpu.memory_space<vmem>>, vector<1x96x128xf32>
    %112 = vector.shape_cast %111 : vector<1x96x128xf32> to vector<96x128xf32>
    %cst_75 = arith.constant dense<0.000000e+00> : vector<12x128xf32>
    %113 = tpu.matmul %110, %112, %cst_75 {dimension_numbers = #tpu.dot_dimension_numbers<[1], [0], [0], [1], [0, 0, 1, 1], [], []>} : vector<12x96xf32>, vector<96x128xf32>, vector<12x128xf32> -> vector<12x128xf32>
    %114 = arith.addf %109, %113 : vector<12x128xf32>
    %c4_76 = arith.constant 4 : index
    %c0_77 = arith.constant 0 : index
    %115 = vector.load %arg24[%c4_76, %c0_77] : memref<16x96xf32, #tpu.memory_space<vmem>>, vector<12x96xf32>
    %c4_78 = arith.constant 4 : index
    %c0_79 = arith.constant 0 : index
    %c0_80 = arith.constant 0 : index
    %116 = vector.load %arg4[%c4_78, %c0_79, %c0_80] : memref<5x96x128xf32, #tpu.memory_space<vmem>>, vector<1x96x128xf32>
    %117 = vector.shape_cast %116 : vector<1x96x128xf32> to vector<96x128xf32>
    %cst_81 = arith.constant dense<0.000000e+00> : vector<12x128xf32>
    %118 = tpu.matmul %115, %117, %cst_81 {dimension_numbers = #tpu.dot_dimension_numbers<[1], [0], [0], [1], [0, 0, 1, 1], [], []>} : vector<12x96xf32>, vector<96x128xf32>, vector<12x128xf32> -> vector<12x128xf32>
    %119 = arith.addf %114, %118 : vector<12x128xf32>
    %c0_82 = arith.constant 0 : index
    %c0_83 = arith.constant 0 : index
    %120 = vector.load %arg5[%c0_82, %c0_83] : memref<1x128xf32, #tpu.memory_space<vmem>>, vector<1x128xf32>
    %121 = vector.broadcast %120 : vector<1x128xf32> to vector<12x128xf32>
    %122 = arith.mulf %119, %121 : vector<12x128xf32>
    %c0_84 = arith.constant 0 : index
    %c0_85 = arith.constant 0 : index
    %123 = vector.load %arg6[%c0_84, %c0_85] : memref<1x128xf32, #tpu.memory_space<vmem>>, vector<1x128xf32>
    %124 = vector.broadcast %123 : vector<1x128xf32> to vector<12x128xf32>
    %125 = arith.addf %122, %124 : vector<12x128xf32>
    %cst_86 = arith.constant 0.000000e+00 : f32
    %126 = vector.broadcast %cst_86 : f32 to vector<12x128xf32>
    %127 = arith.maximumf %125, %126 : vector<12x128xf32>
    %cst_87 = arith.constant 0.000000e+00 : f32
    %128 = vector.broadcast %cst_87 : f32 to vector<16x128xf32>
    %c0_88 = arith.constant 0 : index
    %c0_89 = arith.constant 0 : index
    %129 = vector.load %arg25[%c0_88, %c0_89] : memref<16x128xf32, #tpu.memory_space<vmem>>, vector<16x128xf32>
    tpu.vector_store %arg25[%c0_88, %c0_89], %128 {strides = array<i32>} : memref<16x128xf32, #tpu.memory_space<vmem>>, vector<16x128xf32>,
    %130 = vector.extract_strided_slice %127 {offsets = [0, 0], sizes = [4, 128], strides = [1, 1]} : vector<12x128xf32> to vector<4x128xf32>
    %c2_90 = arith.constant 2 : index
    %c0_91 = arith.constant 0 : index
    %131 = vector.load %arg25[%c2_90, %c0_91] : memref<16x128xf32, #tpu.memory_space<vmem>>, vector<4x128xf32>
    tpu.vector_store %arg25[%c2_90, %c0_91], %130 {strides = array<i32>} : memref<16x128xf32, #tpu.memory_space<vmem>>, vector<4x128xf32>,
    %132 = vector.extract_strided_slice %127 {offsets = [8, 0], sizes = [4, 128], strides = [1, 1]} : vector<12x128xf32> to vector<4x128xf32>
    %c10_92 = arith.constant 10 : index
    %c0_93 = arith.constant 0 : index
    %133 = vector.load %arg25[%c10_92, %c0_93] : memref<16x128xf32, #tpu.memory_space<vmem>>, vector<4x128xf32>
    tpu.vector_store %arg25[%c10_92, %c0_93], %132 {strides = array<i32>} : memref<16x128xf32, #tpu.memory_space<vmem>>, vector<4x128xf32>,
    %c0_94 = arith.constant 0 : index
    %c0_95 = arith.constant 0 : index
    %134 = vector.load %arg25[%c0_94, %c0_95] : memref<16x128xf32, #tpu.memory_space<vmem>>, vector<12x128xf32>
    %c0_96 = arith.constant 0 : index
    %c0_97 = arith.constant 0 : index
    %c0_98 = arith.constant 0 : index
    %135 = vector.load %arg7[%c0_96, %c0_97, %c0_98] : memref<5x128x256xf32, #tpu.memory_space<vmem>>, vector<1x128x256xf32>
    %136 = vector.shape_cast %135 : vector<1x128x256xf32> to vector<128x256xf32>
    %cst_99 = arith.constant dense<0.000000e+00> : vector<12x256xf32>
    %137 = tpu.matmul %134, %136, %cst_99 {dimension_numbers = #tpu.dot_dimension_numbers<[1], [0], [0], [1], [0, 0, 1, 1], [], []>} : vector<12x128xf32>, vector<128x256xf32>, vector<12x256xf32> -> vector<12x256xf32>
    %c1_100 = arith.constant 1 : index
    %c0_101 = arith.constant 0 : index
    %138 = vector.load %arg25[%c1_100, %c0_101] : memref<16x128xf32, #tpu.memory_space<vmem>>, vector<12x128xf32>
    %c1_102 = arith.constant 1 : index
    %c0_103 = arith.constant 0 : index
    %c0_104 = arith.constant 0 : index
    %139 = vector.load %arg7[%c1_102, %c0_103, %c0_104] : memref<5x128x256xf32, #tpu.memory_space<vmem>>, vector<1x128x256xf32>
    %140 = vector.shape_cast %139 : vector<1x128x256xf32> to vector<128x256xf32>
    %cst_105 = arith.constant dense<0.000000e+00> : vector<12x256xf32>
    %141 = tpu.matmul %138, %140, %cst_105 {dimension_numbers = #tpu.dot_dimension_numbers<[1], [0], [0], [1], [0, 0, 1, 1], [], []>} : vector<12x128xf32>, vector<128x256xf32>, vector<12x256xf32> -> vector<12x256xf32>
    %142 = arith.addf %137, %141 : vector<12x256xf32>
    %c2_106 = arith.constant 2 : index
    %c0_107 = arith.constant 0 : index
    %143 = vector.load %arg25[%c2_106, %c0_107] : memref<16x128xf32, #tpu.memory_space<vmem>>, vector<12x128xf32>
    %c2_108 = arith.constant 2 : index
    %c0_109 = arith.constant 0 : index
    %c0_110 = arith.constant 0 : index
    %144 = vector.load %arg7[%c2_108, %c0_109, %c0_110] : memref<5x128x256xf32, #tpu.memory_space<vmem>>, vector<1x128x256xf32>
    %145 = vector.shape_cast %144 : vector<1x128x256xf32> to vector<128x256xf32>
    %cst_111 = arith.constant dense<0.000000e+00> : vector<12x256xf32>
    %146 = tpu.matmul %143, %145, %cst_111 {dimension_numbers = #tpu.dot_dimension_numbers<[1], [0], [0], [1], [0, 0, 1, 1], [], []>} : vector<12x128xf32>, vector<128x256xf32>, vector<12x256xf32> -> vector<12x256xf32>
    %147 = arith.addf %142, %146 : vector<12x256xf32>
    %c3_112 = arith.constant 3 : index
    %c0_113 = arith.constant 0 : index
    %148 = vector.load %arg25[%c3_112, %c0_113] : memref<16x128xf32, #tpu.memory_space<vmem>>, vector<12x128xf32>
    %c3_114 = arith.constant 3 : index
    %c0_115 = arith.constant 0 : index
    %c0_116 = arith.constant 0 : index
    %149 = vector.load %arg7[%c3_114, %c0_115, %c0_116] : memref<5x128x256xf32, #tpu.memory_space<vmem>>, vector<1x128x256xf32>
    %150 = vector.shape_cast %149 : vector<1x128x256xf32> to vector<128x256xf32>
    %cst_117 = arith.constant dense<0.000000e+00> : vector<12x256xf32>
    %151 = tpu.matmul %148, %150, %cst_117 {dimension_numbers = #tpu.dot_dimension_numbers<[1], [0], [0], [1], [0, 0, 1, 1], [], []>} : vector<12x128xf32>, vector<128x256xf32>, vector<12x256xf32> -> vector<12x256xf32>
    %152 = arith.addf %147, %151 : vector<12x256xf32>
    %c4_118 = arith.constant 4 : index
    %c0_119 = arith.constant 0 : index
    %153 = vector.load %arg25[%c4_118, %c0_119] : memref<16x128xf32, #tpu.memory_space<vmem>>, vector<12x128xf32>
    %c4_120 = arith.constant 4 : index
    %c0_121 = arith.constant 0 : index
    %c0_122 = arith.constant 0 : index
    %154 = vector.load %arg7[%c4_120, %c0_121, %c0_122] : memref<5x128x256xf32, #tpu.memory_space<vmem>>, vector<1x128x256xf32>
    %155 = vector.shape_cast %154 : vector<1x128x256xf32> to vector<128x256xf32>
    %cst_123 = arith.constant dense<0.000000e+00> : vector<12x256xf32>
    %156 = tpu.matmul %153, %155, %cst_123 {dimension_numbers = #tpu.dot_dimension_numbers<[1], [0], [0], [1], [0, 0, 1, 1], [], []>} : vector<12x128xf32>, vector<128x256xf32>, vector<12x256xf32> -> vector<12x256xf32>
    %157 = arith.addf %152, %156 : vector<12x256xf32>
    %c0_124 = arith.constant 0 : index
    %c0_125 = arith.constant 0 : index
    %158 = vector.load %arg8[%c0_124, %c0_125] : memref<1x256xf32, #tpu.memory_space<vmem>>, vector<1x256xf32>
    %159 = vector.broadcast %158 : vector<1x256xf32> to vector<12x256xf32>
    %160 = arith.mulf %157, %159 : vector<12x256xf32>
    %c0_126 = arith.constant 0 : index
    %c0_127 = arith.constant 0 : index
    %161 = vector.load %arg9[%c0_126, %c0_127] : memref<1x256xf32, #tpu.memory_space<vmem>>, vector<1x256xf32>
    %162 = vector.broadcast %161 : vector<1x256xf32> to vector<12x256xf32>
    %163 = arith.addf %160, %162 : vector<12x256xf32>
    %cst_128 = arith.constant 0.000000e+00 : f32
    %164 = vector.broadcast %cst_128 : f32 to vector<12x256xf32>
    %165 = arith.maximumf %163, %164 : vector<12x256xf32>
    %166 = vector.extract_strided_slice %165 {offsets = [0, 0], sizes = [4, 256], strides = [1, 1]} : vector<12x256xf32> to vector<4x256xf32>
    %c0_129 = arith.constant 0 : index
    %c0_130 = arith.constant 0 : index
    %167 = vector.load %arg22[%c0_129, %c0_130] : memref<8x256xf32, #tpu.memory_space<vmem>>, vector<4x256xf32>
    tpu.vector_store %arg22[%c0_129, %c0_130], %166 {strides = array<i32>} : memref<8x256xf32, #tpu.memory_space<vmem>>, vector<4x256xf32>,
    %168 = vector.extract_strided_slice %165 {offsets = [0, 0], sizes = [1, 256], strides = [1, 1]} : vector<12x256xf32> to vector<1x256xf32>
    %c0_131 = arith.constant 0 : index
    %c0_132 = arith.constant 0 : index
    %169 = vector.load %arg26[%c0_131, %c0_132] : memref<2x1024xf32, #tpu.memory_space<vmem>>, vector<1x256xf32>
    tpu.vector_store %arg26[%c0_131, %c0_132], %168 {strides = array<i32>} : memref<2x1024xf32, #tpu.memory_space<vmem>>, vector<1x256xf32>,
    %170 = vector.extract_strided_slice %165 {offsets = [1, 0], sizes = [1, 256], strides = [1, 1]} : vector<12x256xf32> to vector<1x256xf32>
    %c0_133 = arith.constant 0 : index
    %c256 = arith.constant 256 : index
    %171 = vector.load %arg26[%c0_133, %c256] : memref<2x1024xf32, #tpu.memory_space<vmem>>, vector<1x256xf32>
    tpu.vector_store %arg26[%c0_133, %c256], %170 {strides = array<i32>} : memref<2x1024xf32, #tpu.memory_space<vmem>>, vector<1x256xf32>,
    %172 = vector.extract_strided_slice %165 {offsets = [2, 0], sizes = [1, 256], strides = [1, 1]} : vector<12x256xf32> to vector<1x256xf32>
    %c0_134 = arith.constant 0 : index
    %c512 = arith.constant 512 : index
    %173 = vector.load %arg26[%c0_134, %c512] : memref<2x1024xf32, #tpu.memory_space<vmem>>, vector<1x256xf32>
    tpu.vector_store %arg26[%c0_134, %c512], %172 {strides = array<i32>} : memref<2x1024xf32, #tpu.memory_space<vmem>>, vector<1x256xf32>,
    %174 = vector.extract_strided_slice %165 {offsets = [3, 0], sizes = [1, 256], strides = [1, 1]} : vector<12x256xf32> to vector<1x256xf32>
    %c0_135 = arith.constant 0 : index
    %c768 = arith.constant 768 : index
    %175 = vector.load %arg26[%c0_135, %c768] : memref<2x1024xf32, #tpu.memory_space<vmem>>, vector<1x256xf32>
    tpu.vector_store %arg26[%c0_135, %c768], %174 {strides = array<i32>} : memref<2x1024xf32, #tpu.memory_space<vmem>>, vector<1x256xf32>,
    %176 = vector.extract_strided_slice %165 {offsets = [8, 0], sizes = [4, 256], strides = [1, 1]} : vector<12x256xf32> to vector<4x256xf32>
    %c4_136 = arith.constant 4 : index
    %c0_137 = arith.constant 0 : index
    %177 = vector.load %arg22[%c4_136, %c0_137] : memref<8x256xf32, #tpu.memory_space<vmem>>, vector<4x256xf32>
    tpu.vector_store %arg22[%c4_136, %c0_137], %176 {strides = array<i32>} : memref<8x256xf32, #tpu.memory_space<vmem>>, vector<4x256xf32>,
    %178 = vector.extract_strided_slice %165 {offsets = [8, 0], sizes = [1, 256], strides = [1, 1]} : vector<12x256xf32> to vector<1x256xf32>
    %c1_138 = arith.constant 1 : index
    %c0_139 = arith.constant 0 : index
    %179 = vector.load %arg26[%c1_138, %c0_139] : memref<2x1024xf32, #tpu.memory_space<vmem>>, vector<1x256xf32>
    tpu.vector_store %arg26[%c1_138, %c0_139], %178 {strides = array<i32>} : memref<2x1024xf32, #tpu.memory_space<vmem>>, vector<1x256xf32>,
    %180 = vector.extract_strided_slice %165 {offsets = [9, 0], sizes = [1, 256], strides = [1, 1]} : vector<12x256xf32> to vector<1x256xf32>
    %c1_140 = arith.constant 1 : index
    %c256_141 = arith.constant 256 : index
    %181 = vector.load %arg26[%c1_140, %c256_141] : memref<2x1024xf32, #tpu.memory_space<vmem>>, vector<1x256xf32>
    tpu.vector_store %arg26[%c1_140, %c256_141], %180 {strides = array<i32>} : memref<2x1024xf32, #tpu.memory_space<vmem>>, vector<1x256xf32>,
    %182 = vector.extract_strided_slice %165 {offsets = [10, 0], sizes = [1, 256], strides = [1, 1]} : vector<12x256xf32> to vector<1x256xf32>
    %c1_142 = arith.constant 1 : index
    %c512_143 = arith.constant 512 : index
    %183 = vector.load %arg26[%c1_142, %c512_143] : memref<2x1024xf32, #tpu.memory_space<vmem>>, vector<1x256xf32>
    tpu.vector_store %arg26[%c1_142, %c512_143], %182 {strides = array<i32>} : memref<2x1024xf32, #tpu.memory_space<vmem>>, vector<1x256xf32>,
    %184 = vector.extract_strided_slice %165 {offsets = [11, 0], sizes = [1, 256], strides = [1, 1]} : vector<12x256xf32> to vector<1x256xf32>
    %c1_144 = arith.constant 1 : index
    %c768_145 = arith.constant 768 : index
    %185 = vector.load %arg26[%c1_144, %c768_145] : memref<2x1024xf32, #tpu.memory_space<vmem>>, vector<1x256xf32>
    tpu.vector_store %arg26[%c1_144, %c768_145], %184 {strides = array<i32>} : memref<2x1024xf32, #tpu.memory_space<vmem>>, vector<1x256xf32>,
    %c0_146 = arith.constant 0 : index
    %c0_147 = arith.constant 0 : index
    %186 = vector.load %arg26[%c0_146, %c0_147] : memref<2x1024xf32, #tpu.memory_space<vmem>>, vector<2x1024xf32>
    %c0_148 = arith.constant 0 : index
    %c0_149 = arith.constant 0 : index
    %187 = vector.load %arg10[%c0_148, %c0_149] : memref<1024x256xf32, #tpu.memory_space<vmem>>, vector<1024x256xf32>
    %cst_150 = arith.constant dense<0.000000e+00> : vector<2x256xf32>
    %188 = tpu.matmul %186, %187, %cst_150 {dimension_numbers = #tpu.dot_dimension_numbers<[1], [0], [0], [1], [0, 0, 1, 1], [], []>} : vector<2x1024xf32>, vector<1024x256xf32>, vector<2x256xf32> -> vector<2x256xf32>
    %c0_151 = arith.constant 0 : index
    %c0_152 = arith.constant 0 : index
    %189 = vector.load %arg11[%c0_151, %c0_152] : memref<1x256xf32, #tpu.memory_space<vmem>>, vector<1x256xf32>
    %190 = vector.broadcast %189 : vector<1x256xf32> to vector<2x256xf32>
    %191 = arith.mulf %188, %190 : vector<2x256xf32>
    %c0_153 = arith.constant 0 : index
    %c0_154 = arith.constant 0 : index
    %192 = vector.load %arg12[%c0_153, %c0_154] : memref<1x256xf32, #tpu.memory_space<vmem>>, vector<1x256xf32>
    %193 = vector.broadcast %192 : vector<1x256xf32> to vector<2x256xf32>
    %194 = arith.addf %191, %193 : vector<2x256xf32>
    %cst_155 = arith.constant 0.000000e+00 : f32
    %195 = vector.broadcast %cst_155 : f32 to vector<2x256xf32>
    %196 = arith.maximumf %194, %195 : vector<2x256xf32>
    %c0_156 = arith.constant 0 : index
    %c0_157 = arith.constant 0 : index
    %197 = vector.load %arg13[%c0_156, %c0_157] : memref<256x64xf32, #tpu.memory_space<vmem>>, vector<256x64xf32>
    %cst_158 = arith.constant dense<0.000000e+00> : vector<2x64xf32>
    %198 = tpu.matmul %196, %197, %cst_158 {dimension_numbers = #tpu.dot_dimension_numbers<[1], [0], [0], [1], [0, 0, 1, 1], [], []>} : vector<2x256xf32>, vector<256x64xf32>, vector<2x64xf32> -> vector<2x64xf32>
    %c0_159 = arith.constant 0 : index
    %c0_160 = arith.constant 0 : index
    %199 = vector.load %arg14[%c0_159, %c0_160] : memref<1x64xf32, #tpu.memory_space<vmem>>, vector<1x64xf32>
    %200 = vector.broadcast %199 : vector<1x64xf32> to vector<2x64xf32>
    %201 = arith.mulf %198, %200 : vector<2x64xf32>
    %c0_161 = arith.constant 0 : index
    %c0_162 = arith.constant 0 : index
    %202 = vector.load %arg15[%c0_161, %c0_162] : memref<1x64xf32, #tpu.memory_space<vmem>>, vector<1x64xf32>
    %203 = vector.broadcast %202 : vector<1x64xf32> to vector<2x64xf32>
    %204 = arith.addf %201, %203 : vector<2x64xf32>
    %cst_163 = arith.constant 0.000000e+00 : f32
    %205 = vector.broadcast %cst_163 : f32 to vector<2x64xf32>
    %206 = arith.maximumf %204, %205 : vector<2x64xf32>
    %c0_164 = arith.constant 0 : index
    %c0_165 = arith.constant 0 : index
    %207 = vector.load %arg16[%c0_164, %c0_165] : memref<64x16xf32, #tpu.memory_space<vmem>>, vector<64x16xf32>
    %cst_166 = arith.constant dense<0.000000e+00> : vector<2x16xf32>
    %208 = tpu.matmul %206, %207, %cst_166 {dimension_numbers = #tpu.dot_dimension_numbers<[1], [0], [0], [1], [0, 0, 1, 1], [], []>} : vector<2x64xf32>, vector<64x16xf32>, vector<2x16xf32> -> vector<2x16xf32>
    %c0_167 = arith.constant 0 : index
    %c0_168 = arith.constant 0 : index
    %209 = vector.load %arg17[%c0_167, %c0_168] : memref<1x16xf32, #tpu.memory_space<vmem>>, vector<1x16xf32>
    %210 = vector.broadcast %209 : vector<1x16xf32> to vector<2x16xf32>
    %211 = arith.mulf %208, %210 : vector<2x16xf32>
    %c0_169 = arith.constant 0 : index
    %c0_170 = arith.constant 0 : index
    %212 = vector.load %arg18[%c0_169, %c0_170] : memref<1x16xf32, #tpu.memory_space<vmem>>, vector<1x16xf32>
    %213 = vector.broadcast %212 : vector<1x16xf32> to vector<2x16xf32>
    %214 = arith.addf %211, %213 : vector<2x16xf32>
    %cst_171 = arith.constant 0.000000e+00 : f32
    %215 = vector.broadcast %cst_171 : f32 to vector<2x16xf32>
    %216 = arith.maximumf %214, %215 : vector<2x16xf32>
    %c0_172 = arith.constant 0 : index
    %c0_173 = arith.constant 0 : index
    %217 = vector.load %arg19[%c0_172, %c0_173] : memref<16x9xf32, #tpu.memory_space<vmem>>, vector<16x9xf32>
    %cst_174 = arith.constant dense<0.000000e+00> : vector<2x9xf32>
    %218 = tpu.matmul %216, %217, %cst_174 {dimension_numbers = #tpu.dot_dimension_numbers<[1], [0], [0], [1], [0, 0, 1, 1], [], []>} : vector<2x16xf32>, vector<16x9xf32>, vector<2x9xf32> -> vector<2x9xf32>
    %c0_175 = arith.constant 0 : index
    %c0_176 = arith.constant 0 : index
    %219 = vector.load %arg20[%c0_175, %c0_176] : memref<1x9xf32, #tpu.memory_space<vmem>>, vector<1x9xf32>
    %220 = vector.broadcast %219 : vector<1x9xf32> to vector<2x9xf32>
    %221 = arith.addf %218, %220 : vector<2x9xf32>
    %cst_177 = arith.constant dense<0xFF800000> : vector<2xf32>
    %222 = vector.multi_reduction <maximumf>, %221, %cst_177 [1] : vector<2x9xf32> to vector<2xf32>
    %223 = vector.shape_cast %222 : vector<2xf32> to vector<2x1xf32>
    %224 = vector.broadcast %223 : vector<2x1xf32> to vector<2x9xf32>
    %225 = arith.subf %221, %224 : vector<2x9xf32>
    %226 = math.exp %225 : vector<2x9xf32>
    %cst_178 = arith.constant dense<0.000000e+00> : vector<2xf32>
    %227 = vector.multi_reduction <add>, %226, %cst_178 [1] : vector<2x9xf32> to vector<2xf32>
    %228 = vector.shape_cast %227 : vector<2xf32> to vector<2x1xf32>
    %229 = math.log %228 : vector<2x1xf32>
    %230 = vector.broadcast %229 : vector<2x1xf32> to vector<2x9xf32>
    %231 = arith.subf %225, %230 : vector<2x9xf32>
    %c0_179 = arith.constant 0 : index
    %c0_180 = arith.constant 0 : index
    %232 = vector.load %arg21[%c0_179, %c0_180] : memref<2x9xf32, #tpu.memory_space<vmem>>, vector<2x9xf32>
    tpu.vector_store %arg21[%c0_179, %c0_180], %231 {strides = array<i32>} : memref<2x9xf32, #tpu.memory_space<vmem>>, vector<2x9xf32>,
    return
  }
}

</mosaic_0001>

<llo_original>
// kernel: cnn_forward.1
$region0: #{cnn_forward.1}
  #allocation0 [shape = 'u32[]', space=smem, size = 0x4, offset = 0x4, fixed_abs, tag = 'smem constant byte address 0x4 - core index']
  #allocation1 [shape = 'u32[144,128]{1,0:T(1,128)}', space=vmem, size = 0x12000, scoped, tag = 'internal scratch']
  #allocation2 [shape = 'f32[24,12]{1,0:T(8,128)}', space=vmem, size = 0x3000, scoped, tag = 'scratch operand']
  #allocation3 [shape = 'f32[16,96]{1,0:T(8,128)}', space=vmem, size = 0x2000, scoped, tag = 'scratch operand']
  #allocation4 [shape = 'f32[16,128]{1,0:T(8,128)}', space=vmem, size = 0x2000, scoped, tag = 'scratch operand']
  #allocation5 [shape = 'f32[2,1024]{1,0:T(2,128)}', space=vmem, size = 0x2000, scoped, tag = 'scratch operand']
  %s0 = inlined_call_operand.vmem [shape: f32[16,12], index: 0, kind: input, shape index: {}]
  %s1 = inlined_call_operand.hbm [shape: f32[5,12,256], index: 1, kind: input, shape index: {}]
  %s2 = inlined_call_operand.hbm [shape: f32[1,256], index: 2, kind: input, shape index: {}]
  %s3 = inlined_call_operand.hbm [shape: f32[1,256], index: 3, kind: input, shape index: {}]
  %s4 = inlined_call_operand.vmem [shape: f32[5,96,128], index: 4, kind: input, shape index: {}]
  %s5 = inlined_call_operand.hbm [shape: f32[1,128], index: 5, kind: input, shape index: {}]
  %s6 = inlined_call_operand.hbm [shape: f32[1,128], index: 6, kind: input, shape index: {}]
  %s7 = inlined_call_operand.hbm [shape: f32[5,128,256], index: 7, kind: input, shape index: {}]
  %s8 = inlined_call_operand.hbm [shape: f32[1,256], index: 8, kind: input, shape index: {}]
  %s9 = inlined_call_operand.hbm [shape: f32[1,256], index: 9, kind: input, shape index: {}]
  %s10 = inlined_call_operand.hbm [shape: f32[1024,256], index: 10, kind: input, shape index: {}]
  %s11 = inlined_call_operand.hbm [shape: f32[1,256], index: 11, kind: input, shape index: {}]
  %s12 = inlined_call_operand.hbm [shape: f32[1,256], index: 12, kind: input, shape index: {}]
  %s13 = inlined_call_operand.vmem [shape: f32[256,64], index: 13, kind: input, shape index: {}]
  %s14 = inlined_call_operand.hbm [shape: f32[1,64], index: 14, kind: input, shape index: {}]
  %s15 = inlined_call_operand.hbm [shape: f32[1,64], index: 15, kind: input, shape index: {}]
  %s16 = inlined_call_operand.vmem [shape: f32[64,16], index: 16, kind: input, shape index: {}]
  %s17 = inlined_call_operand.hbm [shape: f32[1,16], index: 17, kind: input, shape index: {}]
  %s18 = inlined_call_operand.hbm [shape: f32[1,16], index: 18, kind: input, shape index: {}]
  %s19 = inlined_call_operand.vmem [shape: f32[16,9], index: 19, kind: input, shape index: {}]
  %s20 = inlined_call_operand.hbm [shape: f32[1,9], index: 20, kind: input, shape index: {}]
  %s21 = inlined_call_operand.hbm [shape: f32[2,9], index: 21, kind: output, shape index: {0}]
  %s22 = inlined_call_operand.vmem [shape: f32[8,256], index: 22, kind: output, shape index: {1}]
  %23 = xla_tuple %s21, %s22
  %s24 = sld [smem:[#allocation0]]
  $region166: #{cnn_forward.1} parent=0
    _
  %s26 = ssub.s32 1, %s24
  %s27 = scalar_select 0, %s26, %s24
  $region1: #{cnn_forward.1} parent=0
    #allocation6 [shape = 'u8[81920]{0}', space=vmem, size = 0x14000, scoped, tag = 'input window, operand 1, single buffered']
    #allocation7 [shape = 's32[1]{0}', space=sflag, size = 0x4, scoped, tag = 'scoped memory for cnn_forward.1']
    #allocation8 [shape = 's32[1]{0}', space=sflag, size = 0x4, scoped, tag = 'scoped memory for cnn_forward.1']
    #allocation9 [shape = 'u8[1024]{0}', space=vmem, size = 0x400, scoped, tag = 'input window, operand 2, single buffered']
    #allocation10 [shape = 's32[1]{0}', space=sflag, size = 0x4, scoped, tag = 'scoped memory for cnn_forward.1']
    #allocation11 [shape = 'u8[1024]{0}', space=vmem, size = 0x400, scoped, tag = 'input window, operand 3, single buffered']
    #allocation12 [shape = 'u8[512]{0}', space=vmem, size = 0x400, scoped, tag = 'input window, operand 5, single buffered']
    #allocation13 [shape = 's32[1]{0}', space=sflag, size = 0x4, scoped, tag = 'scoped memory for cnn_forward.1']
    #allocation14 [shape = 'u8[512]{0}', space=vmem, size = 0x400, scoped, tag = 'input window, operand 6, single buffered']
    #allocation15 [shape = 'u8[655360]{0}', space=vmem, size = 0xa0000, scoped, tag = 'input window, operand 7, single buffered']
    #allocation16 [shape = 's32[1]{0}', space=sflag, size = 0x4, scoped, tag = 'scoped memory for cnn_forward.1']
    #allocation17 [shape = 'u8[1024]{0}', space=vmem, size = 0x400, scoped, tag = 'input window, operand 8, single buffered']
    #allocation18 [shape = 'u8[1024]{0}', space=vmem, size = 0x400, scoped, tag = 'input window, operand 9, single buffered']
    #allocation19 [shape = 's32[1]{0}', space=sflag, size = 0x4, scoped, tag = 'scoped memory for cnn_forward.1']
    #allocation20 [shape = 'u8[1048576]{0}', space=vmem, size = 0x100000, scoped, tag = 'input window, operand 10, single buffered']
    #allocation21 [shape = 'u8[1024]{0}', space=vmem, size = 0x400, scoped, tag = 'input window, operand 11, single buffered']
    #allocation22 [shape = 's32[1]{0}', space=sflag, size = 0x4, scoped, tag = 'scoped memory for cnn_forward.1']
    #allocation23 [shape = 'u8[1024]{0}', space=vmem, size = 0x400, scoped, tag = 'input window, operand 12, single buffered']
    #allocation24 [shape = 'u8[512]{0}', space=vmem, size = 0x400, scoped, tag = 'input window, operand 14, single buffered']
    #allocation25 [shape = 's32[1]{0}', space=sflag, size = 0x4, scoped, tag = 'scoped memory for cnn_forward.1']
    #allocation26 [shape = 'u8[512]{0}', space=vmem, size = 0x400, scoped, tag = 'input window, operand 15, single buffered']
    #allocation27 [shape = 'u8[512]{0}', space=vmem, size = 0x400, scoped, tag = 'input window, operand 17, single buffered']
    #allocation28 [shape = 's32[1]{0}', space=sflag, size = 0x4, scoped, tag = 'scoped memory for cnn_forward.1']
    #allocation29 [shape = 'u8[512]{0}', space=vmem, size = 0x400, scoped, tag = 'input window, operand 18, single buffered']
    #allocation30 [shape = 'u8[512]{0}', space=vmem, size = 0x400, scoped, tag = 'input window, operand 20, single buffered']
    #allocation31 [shape = 's32[1]{0}', space=sflag, size = 0x4, scoped, tag = 'scoped memory for cnn_forward.1']
    #allocation32 [shape = 'u8[1024]{0}', space=vmem, size = 0x400, scoped, tag = 'output window, operand 0, single buffered']
    %28 = vsyncpa [#allocation7], 0
    %29 = vsyncpa [#allocation10], 0
    %30 = vsyncpa [#allocation13], 0
    %31 = vsyncpa [#allocation16], 0
    %32 = vsyncpa [#allocation19], 0
    %33 = vsyncpa [#allocation22], 0
    %34 = vsyncpa [#allocation25], 0
    %35 = vsyncpa [#allocation28], 0
    %36 = vsyncpa [#allocation31], 0
    %37 = vsyncpa [#allocation8], 0
    // Predicated region
    $region2: #{cnn_forward.1} parent=1 // pred_check
      _
    $region3: #{cnn_forward.1} parent=1 // pred_check_branch
      %39 = sbr.rel (0) target = $region5
    $region4: #{cnn_forward.1} parent=1 // pred_region
      _
    $region5: #{cnn_forward.1} parent=1 // pred_fallthru
      _
    // Predicated region
    $region6: #{cnn_forward.1} parent=1 // pred_check
      _
    $region7: #{cnn_forward.1} parent=1 // pred_check_branch
      %41 = sbr.rel (0) target = $region9
    $region8: #{cnn_forward.1} parent=1 // pred_region
      %s43 = ssub.s32 2560, 2560
      %44 = vsyncadd [#allocation7], %s43
      %s45 = sshll.u32 [#allocation6], 4
      %s46 = int_to_ptr.vmem [resolvable:$true] %s45
      %51 = dma.hbm_to_vmem [thread:$0]  %s1, 2560, %s46, [#allocation7], 256, 256, 16
    $region9: #{cnn_forward.1} parent=1 // pred_fallthru
      _
    // Predicated region
    $region10: #{cnn_forward.1} parent=1 // pred_check
      _
    $region11: #{cnn_forward.1} parent=1 // pred_check_branch
      %53 = sbr.rel (0) target = $region13
    $region12: #{cnn_forward.1} parent=1 // pred_region
      %s55 = ssub.s32 32, 32
      %56 = vsyncadd [#allocation10], %s55
      %s58 = sshll.u32 [#allocation9], 4
      %s59 = int_to_ptr.vmem [resolvable:$true] %s58
      %61 = dma.hbm_to_vmem [thread:$0]  %s2, 32, %s59, [#allocation10]
    $region13: #{cnn_forward.1} parent=1 // pred_fallthru
      _
    // Predicated region
    $region14: #{cnn_forward.1} parent=1 // pred_check
      _
    $region15: #{cnn_forward.1} parent=1 // pred_check_branch
      %63 = sbr.rel (0) target = $region17
    $region16: #{cnn_forward.1} parent=1 // pred_region
      %s65 = ssub.s32 32, 32
      %66 = vsyncadd [#allocation10], %s65
      %s68 = sshll.u32 [#allocation11], 4
      %s69 = int_to_ptr.vmem [resolvable:$true] %s68
      %71 = dma.hbm_to_vmem [thread:$0]  %s3, 32, %s69, [#allocation10]
    $region17: #{cnn_forward.1} parent=1 // pred_fallthru
      _
    // Predicated region
    $region18: #{cnn_forward.1} parent=1 // pred_check
      _
    $region19: #{cnn_forward.1} parent=1 // pred_check_branch
      %73 = sbr.rel (0) target = $region21
    $region20: #{cnn_forward.1} parent=1 // pred_region
      _
    $region21: #{cnn_forward.1} parent=1 // pred_fallthru
      _
    // Predicated region
    $region22: #{cnn_forward.1} parent=1 // pred_check
      _
    $region23: #{cnn_forward.1} parent=1 // pred_check_branch
      %75 = sbr.rel (0) target = $region25
    $region24: #{cnn_forward.1} parent=1 // pred_region
      %s77 = ssub.s32 16, 16
      %78 = vsyncadd [#allocation13], %s77
      %s80 = sshll.u32 [#allocation12], 4
      %s81 = int_to_ptr.vmem [resolvable:$true] %s80
      %83 = dma.hbm_to_vmem [thread:$0]  %s5, 16, %s81, [#allocation13]
    $region25: #{cnn_forward.1} parent=1 // pred_fallthru
      _
    // Predicated region
    $region26: #{cnn_forward.1} parent=1 // pred_check
      _
    $region27: #{cnn_forward.1} parent=1 // pred_check_branch
      %85 = sbr.rel (0) target = $region29
    $region28: #{cnn_forward.1} parent=1 // pred_region
      %s87 = ssub.s32 16, 16
      %88 = vsyncadd [#allocation13], %s87
      %s90 = sshll.u32 [#allocation14], 4
      %s91 = int_to_ptr.vmem [resolvable:$true] %s90
      %93 = dma.hbm_to_vmem [thread:$0]  %s6, 16, %s91, [#allocation13]
    $region29: #{cnn_forward.1} parent=1 // pred_fallthru
      _
    // Predicated region
    $region30: #{cnn_forward.1} parent=1 // pred_check
      _
    $region31: #{cnn_forward.1} parent=1 // pred_check_branch
      %95 = sbr.rel (0) target = $region33
    $region32: #{cnn_forward.1} parent=1 // pred_region
      %s97 = ssub.s32 20480, 20480
      %98 = vsyncadd [#allocation16], %s97
      %s99 = sshll.u32 [#allocation15], 4
      %s100 = int_to_ptr.vmem [resolvable:$true] %s99
      %105 = dma.hbm_to_vmem [thread:$0]  %s7, 20480, %s100, [#allocation16], 256, 256, 16
    $region33: #{cnn_forward.1} parent=1 // pred_fallthru
      _
    // Predicated region
    $region34: #{cnn_forward.1} parent=1 // pred_check
      _
    $region35: #{cnn_forward.1} parent=1 // pred_check_branch
      %107 = sbr.rel (0) target = $region37
    $region36: #{cnn_forward.1} parent=1 // pred_region
      %s109 = ssub.s32 32, 32
      %110 = vsyncadd [#allocation16], %s109
      %s112 = sshll.u32 [#allocation17], 4
      %s113 = int_to_ptr.vmem [resolvable:$true] %s112
      %115 = dma.hbm_to_vmem [thread:$0]  %s8, 32, %s113, [#allocation16]
    $region37: #{cnn_forward.1} parent=1 // pred_fallthru
      _
    // Predicated region
    $region38: #{cnn_forward.1} parent=1 // pred_check
      _
    $region39: #{cnn_forward.1} parent=1 // pred_check_branch
      %117 = sbr.rel (0) target = $region41
    $region40: #{cnn_forward.1} parent=1 // pred_region
      %s119 = ssub.s32 32, 32
      %120 = vsyncadd [#allocation19], %s119
      %s122 = sshll.u32 [#allocation18], 4
      %s123 = int_to_ptr.vmem [resolvable:$true] %s122
      %125 = dma.hbm_to_vmem [thread:$0]  %s9, 32, %s123, [#allocation19]
    $region41: #{cnn_forward.1} parent=1 // pred_fallthru
      _
    // Predicated region
    $region42: #{cnn_forward.1} parent=1 // pred_check
      _
    $region43: #{cnn_forward.1} parent=1 // pred_check_branch
      %127 = sbr.rel (0) target = $region45
    $region44: #{cnn_forward.1} parent=1 // pred_region
      %s129 = ssub.s32 32768, 32768
      %130 = vsyncadd [#allocation19], %s129
      %s131 = sshll.u32 [#allocation20], 4
      %s132 = int_to_ptr.vmem [resolvable:$true] %s131
      %137 = dma.hbm_to_vmem [thread:$0]  %s10, 32768, %s132, [#allocation19], 256, 256, 16
    $region45: #{cnn_forward.1} parent=1 // pred_fallthru
      _
    // Predicated region
    $region46: #{cnn_forward.1} parent=1 // pred_check
      _
    $region47: #{cnn_forward.1} parent=1 // pred_check_branch
      %139 = sbr.rel (0) target = $region49
    $region48: #{cnn_forward.1} parent=1 // pred_region
      %s141 = ssub.s32 32, 32
      %142 = vsyncadd [#allocation22], %s141
      %s144 = sshll.u32 [#allocation21], 4
      %s145 = int_to_ptr.vmem [resolvable:$true] %s144
      %147 = dma.hbm_to_vmem [thread:$0]  %s11, 32, %s145, [#allocation22]
    $region49: #{cnn_forward.1} parent=1 // pred_fallthru
      _
    // Predicated region
    $region50: #{cnn_forward.1} parent=1 // pred_check
      _
    $region51: #{cnn_forward.1} parent=1 // pred_check_branch
      %149 = sbr.rel (0) target = $region53
    $region52: #{cnn_forward.1} parent=1 // pred_region
      %s151 = ssub.s32 32, 32
      %152 = vsyncadd [#allocation22], %s151
      %s154 = sshll.u32 [#allocation23], 4
      %s155 = int_to_ptr.vmem [resolvable:$true] %s154
      %157 = dma.hbm_to_vmem [thread:$0]  %s12, 32, %s155, [#allocation22]
    $region53: #{cnn_forward.1} parent=1 // pred_fallthru
      _
    // Predicated region
    $region54: #{cnn_forward.1} parent=1 // pred_check
      _
    $region55: #{cnn_forward.1} parent=1 // pred_check_branch
      %159 = sbr.rel (0) target = $region57
    $region56: #{cnn_forward.1} parent=1 // pred_region
      _
    $region57: #{cnn_forward.1} parent=1 // pred_fallthru
      _
    // Predicated region
    $region58: #{cnn_forward.1} parent=1 // pred_check
      _
    $region59: #{cnn_forward.1} parent=1 // pred_check_branch
      %161 = sbr.rel (0) target = $region61
    $region60: #{cnn_forward.1} parent=1 // pred_region
      %s163 = ssub.s32 16, 16
      %164 = vsyncadd [#allocation25], %s163
      %s166 = sshll.u32 [#allocation24], 4
      %s167 = int_to_ptr.vmem [resolvable:$true] %s166
      %169 = dma.hbm_to_vmem [thread:$0]  %s14, 16, %s167, [#allocation25]
    $region61: #{cnn_forward.1} parent=1 // pred_fallthru
      _
    // Predicated region
    $region62: #{cnn_forward.1} parent=1 // pred_check
      _
    $region63: #{cnn_forward.1} parent=1 // pred_check_branch
      %171 = sbr.rel (0) target = $region65
    $region64: #{cnn_forward.1} parent=1 // pred_region
      %s173 = ssub.s32 16, 16
      %174 = vsyncadd [#allocation25], %s173
      %s176 = sshll.u32 [#allocation26], 4
      %s177 = int_to_ptr.vmem [resolvable:$true] %s176
      %179 = dma.hbm_to_vmem [thread:$0]  %s15, 16, %s177, [#allocation25]
    $region65: #{cnn_forward.1} parent=1 // pred_fallthru
      _
    // Predicated region
    $region66: #{cnn_forward.1} parent=1 // pred_check
      _
    $region67: #{cnn_forward.1} parent=1 // pred_check_branch
      %181 = sbr.rel (0) target = $region69
    $region68: #{cnn_forward.1} parent=1 // pred_region
      _
    $region69: #{cnn_forward.1} parent=1 // pred_fallthru
      _
    // Predicated region
    $region70: #{cnn_forward.1} parent=1 // pred_check
      _
    $region71: #{cnn_forward.1} parent=1 // pred_check_branch
      %183 = sbr.rel (0) target = $region73
    $region72: #{cnn_forward.1} parent=1 // pred_region
      %s185 = ssub.s32 16, 16
      %186 = vsyncadd [#allocation28], %s185
      %s188 = sshll.u32 [#allocation27], 4
      %s189 = int_to_ptr.vmem [resolvable:$true] %s188
      %191 = dma.hbm_to_vmem [thread:$0]  %s17, 16, %s189, [#allocation28]
    $region73: #{cnn_forward.1} parent=1 // pred_fallthru
      _
    // Predicated region
    $region74: #{cnn_forward.1} parent=1 // pred_check
      _
    $region75: #{cnn_forward.1} parent=1 // pred_check_branch
      %193 = sbr.rel (0) target = $region77
    $region76: #{cnn_forward.1} parent=1 // pred_region
      %s195 = ssub.s32 16, 16
      %196 = vsyncadd [#allocation28], %s195
      %s198 = sshll.u32 [#allocation29], 4
      %s199 = int_to_ptr.vmem [resolvable:$true] %s198
      %201 = dma.hbm_to_vmem [thread:$0]  %s18, 16, %s199, [#allocation28]
    $region77: #{cnn_forward.1} parent=1 // pred_fallthru
      _
    // Predicated region
    $region78: #{cnn_forward.1} parent=1 // pred_check
      _
    $region79: #{cnn_forward.1} parent=1 // pred_check_branch
      %203 = sbr.rel (0) target = $region81
    $region80: #{cnn_forward.1} parent=1 // pred_region
      _
    $region81: #{cnn_forward.1} parent=1 // pred_fallthru
      _
    // Predicated region
    $region82: #{cnn_forward.1} parent=1 // pred_check
      _
    $region83: #{cnn_forward.1} parent=1 // pred_check_branch
      %205 = sbr.rel (0) target = $region85
    $region84: #{cnn_forward.1} parent=1 // pred_region
      %s207 = ssub.s32 16, 16
      %208 = vsyncadd [#allocation31], %s207
      %s210 = sshll.u32 [#allocation30], 4
      %s211 = int_to_ptr.vmem [resolvable:$true] %s210
      %213 = dma.hbm_to_vmem [thread:$0]  %s20, 16, %s211, [#allocation31]
    $region85: #{cnn_forward.1} parent=1 // pred_fallthru
      _
    // Predicated region
    $region86: #{cnn_forward.1} parent=1 // pred_check
      _
    $region87: #{cnn_forward.1} parent=1 // pred_check_branch
      %215 = sbr.rel (0) target = $region89
    $region88: #{cnn_forward.1} parent=1 // pred_region
      %216 = dma.done [#allocation7], 2560
    $region89: #{cnn_forward.1} parent=1 // pred_fallthru
      _
    // Predicated region
    $region90: #{cnn_forward.1} parent=1 // pred_check
      _
    $region91: #{cnn_forward.1} parent=1 // pred_check_branch
      %218 = sbr.rel (0) target = $region93
    $region92: #{cnn_forward.1} parent=1 // pred_region
      %219 = dma.done [#allocation10], 32
    $region93: #{cnn_forward.1} parent=1 // pred_fallthru
      _
    // Predicated region
    $region94: #{cnn_forward.1} parent=1 // pred_check
      _
    $region95: #{cnn_forward.1} parent=1 // pred_check_branch
      %221 = sbr.rel (0) target = $region97
    $region96: #{cnn_forward.1} parent=1 // pred_region
      %222 = dma.done [#allocation10], 32
    $region97: #{cnn_forward.1} parent=1 // pred_fallthru
      _
    // Predicated region
    $region98: #{cnn_forward.1} parent=1 // pred_check
      _
    $region99: #{cnn_forward.1} parent=1 // pred_check_branch
      %224 = sbr.rel (0) target = $region101
    $region100: #{cnn_forward.1} parent=1 // pred_region
      %225 = dma.done [#allocation13], 16
    $region101: #{cnn_forward.1} parent=1 // pred_fallthru
      _
    // Predicated region
    $region102: #{cnn_forward.1} parent=1 // pred_check
      _
    $region103: #{cnn_forward.1} parent=1 // pred_check_branch
      %227 = sbr.rel (0) target = $region105
    $region104: #{cnn_forward.1} parent=1 // pred_region
      %228 = dma.done [#allocation13], 16
    $region105: #{cnn_forward.1} parent=1 // pred_fallthru
      _
    // Predicated region
    $region106: #{cnn_forward.1} parent=1 // pred_check
      _
    $region107: #{cnn_forward.1} parent=1 // pred_check_branch
      %230 = sbr.rel (0) target = $region109
    $region108: #{cnn_forward.1} parent=1 // pred_region
      %231 = dma.done [#allocation16], 20480
    $region109: #{cnn_forward.1} parent=1 // pred_fallthru
      _
    // Predicated region
    $region110: #{cnn_forward.1} parent=1 // pred_check
      _
    $region111: #{cnn_forward.1} parent=1 // pred_check_branch
      %233 = sbr.rel (0) target = $region113
    $region112: #{cnn_forward.1} parent=1 // pred_region
      %234 = dma.done [#allocation16], 32
    $region113: #{cnn_forward.1} parent=1 // pred_fallthru
      _
    // Predicated region
    $region114: #{cnn_forward.1} parent=1 // pred_check
      _
    $region115: #{cnn_forward.1} parent=1 // pred_check_branch
      %236 = sbr.rel (0) target = $region117
    $region116: #{cnn_forward.1} parent=1 // pred_region
      %237 = dma.done [#allocation19], 32
    $region117: #{cnn_forward.1} parent=1 // pred_fallthru
      _
    // Predicated region
    $region118: #{cnn_forward.1} parent=1 // pred_check
      _
    $region119: #{cnn_forward.1} parent=1 // pred_check_branch
      %239 = sbr.rel (0) target = $region121
    $region120: #{cnn_forward.1} parent=1 // pred_region
      %240 = dma.done [#allocation19], 32768
    $region121: #{cnn_forward.1} parent=1 // pred_fallthru
      _
    // Predicated region
    $region122: #{cnn_forward.1} parent=1 // pred_check
      _
    $region123: #{cnn_forward.1} parent=1 // pred_check_branch
      %242 = sbr.rel (0) target = $region125
    $region124: #{cnn_forward.1} parent=1 // pred_region
      %243 = dma.done [#allocation22], 32
    $region125: #{cnn_forward.1} parent=1 // pred_fallthru
      _
    // Predicated region
    $region126: #{cnn_forward.1} parent=1 // pred_check
      _
    $region127: #{cnn_forward.1} parent=1 // pred_check_branch
      %245 = sbr.rel (0) target = $region129
    $region128: #{cnn_forward.1} parent=1 // pred_region
      %246 = dma.done [#allocation22], 32
    $region129: #{cnn_forward.1} parent=1 // pred_fallthru
      _
    // Predicated region
    $region130: #{cnn_forward.1} parent=1 // pred_check
      _
    $region131: #{cnn_forward.1} parent=1 // pred_check_branch
      %248 = sbr.rel (0) target = $region133
    $region132: #{cnn_forward.1} parent=1 // pred_region
      %249 = dma.done [#allocation25], 16
    $region133: #{cnn_forward.1} parent=1 // pred_fallthru
      _
    // Predicated region
    $region134: #{cnn_forward.1} parent=1 // pred_check
      _
    $region135: #{cnn_forward.1} parent=1 // pred_check_branch
      %251 = sbr.rel (0) target = $region137
    $region136: #{cnn_forward.1} parent=1 // pred_region
      %252 = dma.done [#allocation25], 16
    $region137: #{cnn_forward.1} parent=1 // pred_fallthru
      _
    // Predicated region
    $region138: #{cnn_forward.1} parent=1 // pred_check
      _
    $region139: #{cnn_forward.1} parent=1 // pred_check_branch
      %254 = sbr.rel (0) target = $region141
    $region140: #{cnn_forward.1} parent=1 // pred_region
      %255 = dma.done [#allocation28], 16
    $region141: #{cnn_forward.1} parent=1 // pred_fallthru
      _
    // Predicated region
    $region142: #{cnn_forward.1} parent=1 // pred_check
      _
    $region143: #{cnn_forward.1} parent=1 // pred_check_branch
      %257 = sbr.rel (0) target = $region145
    $region144: #{cnn_forward.1} parent=1 // pred_region
      %258 = dma.done [#allocation28], 16
    $region145: #{cnn_forward.1} parent=1 // pred_fallthru
      _
    // Predicated region
    $region146: #{cnn_forward.1} parent=1 // pred_check
      _
    $region147: #{cnn_forward.1} parent=1 // pred_check_branch
      %260 = sbr.rel (0) target = $region149
    $region148: #{cnn_forward.1} parent=1 // pred_region
      %261 = dma.done [#allocation31], 16
    $region149: #{cnn_forward.1} parent=1 // pred_fallthru
      _
    %vm262 = vcmask 97280
    %263 = vst.msk [vmem:[#allocation2] sm:$0xff] %vm262, 0.0
    %264 = vst.msk [vmem:[#allocation2 + $0x8] sm:$0xff] %vm262, 0.0
    %265 = vst.msk [vmem:[#allocation2 + $0x10] sm:$0xff] %vm262, 0.0
    %v266 = vld [vmem:[%s0] sm:$0xff]
    %267 = vst.msk [vmem:[#allocation2 + $0x2] sm:$0xff] %vm262, %v266
    %v268 = vld [vmem:[%s0 + $0x8] sm:$0xff]
    %269 = vst.msk [vmem:[#allocation2 + $0xe] sm:$0xff] %vm262, %v268
    %v270 = vld [vmem:[#allocation2] sm:$0xff]
    %v271 = vld [vmem:[#allocation2 + $0x8] sm:$0xff]
    %v272 = vld [vmem:[#allocation2 + $0x10] sm:$0xf]
    %v273 = vld [vmem:[#allocation6] sm:$0xff]
    %v274 = vld [vmem:[#allocation6 + $0x8] sm:$0xff]
    %v275 = vld [vmem:[#allocation6 + $0x10] sm:$0xf]
    %v276 = vld [vmem:[#allocation6 + $0x18] sm:$0xf]
    %v277 = vld [vmem:[#allocation2 + $0x1] sm:$0xff]
    %v278 = vld [vmem:[#allocation2 + $0x9] sm:$0xff]
    %v279 = vld [vmem:[#allocation2 + $0x11] sm:$0xf]
    %s280 = scalar_lea.vmem [#allocation6], 32
    %v281 = vld [vmem:[%s280] sm:$0xff]
    %v282 = vld [vmem:[%s280 + $0x8] sm:$0xff]
    %v283 = vld [vmem:[%s280 + $0x10] sm:$0xf]
    %v284 = vld [vmem:[%s280 + $0x18] sm:$0xf]
    %v286 = vsel %vm262, %v277, 0
    %v289 = vsel %vm262, %v278, 0
    %v292 = vsel %vm262, %v279, 0
    %vm294 = vcmask 1043456
    %v296 = vsel %vm294, %v283, 0
    %v299 = vsel %vm294, %v284, 0
    %301 = vmatprep.subr.mxu0 %v282
    %302 = vmatpush1.msra.mxu0 %v281
    %303 = vmatprep.subr.mxu0 %v299
    %304 = vmatpush1.msra.mxu0 %v296
    %305 = vmatprep.subr.mxu0 0.0
    %306 = vmatpush1.msra.mxu0 0.0
    %307 = vmatprep.subr.mxu0 0.0
    %308 = vmatpush1.msra.mxu0 0.0
    %309 = vmatprep.subr.mxu0 0.0
    %310 = vmatpush1.msra.mxu0 0.0
    %311 = vmatprep.subr.mxu0 0.0
    %312 = vmatpush1.msra.mxu0 0.0
    %313 = vmatprep.subr.mxu0 0.0
    %314 = vmatpush1.msra.mxu0 0.0
    %315 = vmatprep.subr.mxu0 0.0
    %316 = vmatpush1.msra.mxu0 0.0
    %317 = vmatprep.subr.mxu0 0.0
    %318 = vmatpush1.msra.mxu0 0.0
    %319 = vmatprep.subr.mxu0 0.0
    %320 = vmatpush1.msra.mxu0 0.0
    %321 = vmatprep.subr.mxu0 0.0
    %322 = vmatpush1.msra.mxu0 0.0
    %323 = vmatprep.subr.mxu0 0.0
    %324 = vmatpush1.msra.mxu0 0.0
    %325 = vmatprep.subr.mxu0 0.0
    %326 = vmatpush1.msra.mxu0 0.0
    %327 = vmatprep.subr.mxu0 0.0
    %328 = vmatpush1.msra.mxu0 0.0
    %329 = vmatprep.subr.mxu0 0.0
    %330 = vmatpush1.msra.mxu0 0.0
    %331 = vmatprep.subr.mxu0 0.0
    %332 = vmatpush1.msra.mxu0 0.0
    %333 = vmatprep.subr.mxu0 0.0
    %334 = vmatpush1.msra.mxu0 0.0
    %335 = vmatprep.subr.mxu0 0.0
    %336 = vmatpush1.msra.mxu0 0.0
    %337 = vmatprep.subr.mxu0 0.0
    %338 = vmatpush1.msra.mxu0 0.0
    %339 = vmatprep.subr.mxu0 0.0
    %340 = vmatpush1.msra.mxu0 0.0
    %341 = vmatprep.subr.mxu0 0.0
    %342 = vmatpush1.msra.mxu0 0.0
    %343 = vmatprep.subr.mxu0 0.0
    %344 = vmatpush1.msra.mxu0 0.0
    %345 = vmatprep.subr.mxu0 0.0
    %346 = vmatpush1.msra.mxu0 0.0
    %347 = vmatprep.subr.mxu0 0.0
    %348 = vmatpush1.msra.mxu0 0.0
    %349 = vmatprep.subr.mxu0 0.0
    %350 = vmatpush1.msra.mxu0 0.0
    %351 = vmatprep.subr.mxu0 0.0
    %352 = vmatpush1.msra.mxu0 0.0
    %353 = vmatprep.subr.mxu0 0.0
    %354 = vmatpush1.msra.mxu0 0.0
    %355 = vmatprep.subr.mxu0 0.0
    %356 = vmatpush1.msra.mxu0 0.0
    %357 = vmatprep.subr.mxu0 0.0
    %358 = vmatpush1.msra.mxu0 0.0
    %359 = vmatprep.subr.mxu0 0.0
    %360 = vmatpush1.msra.mxu0 0.0
    %361 = vmatprep.subr.mxu0 0.0
    %362 = vmatpush1.msra.mxu0 0.0
    %363 = vmatprep.subr.mxu0 0.0
    %364 = vmatpush1.msra.mxu0 0.0
    %365 = vmatprep.mubr.f32.mxu0 0.0
    %366 = vmatmul.mubr.f32.gmra.mrb[0].mxu0 %v286
    %v367 = vpop.f32.mrb[0].mxu0
    %v368 = vadd.f32 0.0, %v367
    %v369 = vpop.f32.mrb[0].mxu0
    %v370 = vadd.f32 0.0, %v369
    %371 = vmatprep.mubr.f32.mxu0 0.0
    %372 = vmatmul.mubr.f32.gmra.mrb[0].mxu0 %v289
    %v373 = vpop.f32.mrb[0].mxu0
    %v374 = vadd.f32 0.0, %v373
    %v375 = vpop.f32.mrb[0].mxu0
    %v376 = vadd.f32 0.0, %v375
    %377 = vmatprep.mubr.f32.mxu0 0.0
    %378 = vmatmul.mubr.f32.gmra.mrb[0].mxu0 %v292
    %v379 = vpop.f32.mrb[0].mxu0
    %v380 = vadd.f32 0.0, %v379
    %v381 = vpop.f32.mrb[0].mxu0
    %v382 = vadd.f32 0.0, %v381
    %383 = vdwg.mxu0
    %v385 = vsel %vm262, %v270, 0
    %v388 = vsel %vm262, %v271, 0
    %v391 = vsel %vm262, %v272, 0
    %v394 = vsel %vm294, %v275, 0
    %v397 = vsel %vm294, %v276, 0
    %399 = vmatprep.subr.mxu0 %v274
    %400 = vmatpush1.msra.mxu0 %v273
    %401 = vmatprep.subr.mxu0 %v397
    %402 = vmatpush1.msra.mxu0 %v394
    %403 = vmatprep.subr.mxu0 0.0
    %404 = vmatpush1.msra.mxu0 0.0
    %405 = vmatprep.subr.mxu0 0.0
    %406 = vmatpush1.msra.mxu0 0.0
    %407 = vmatprep.subr.mxu0 0.0
    %408 = vmatpush1.msra.mxu0 0.0
    %409 = vmatprep.subr.mxu0 0.0
    %410 = vmatpush1.msra.mxu0 0.0
    %411 = vmatprep.subr.mxu0 0.0
    %412 = vmatpush1.msra.mxu0 0.0
    %413 = vmatprep.subr.mxu0 0.0
    %414 = vmatpush1.msra.mxu0 0.0
    %415 = vmatprep.subr.mxu0 0.0
    %416 = vmatpush1.msra.mxu0 0.0
    %417 = vmatprep.subr.mxu0 0.0
    %418 = vmatpush1.msra.mxu0 0.0
    %419 = vmatprep.subr.mxu0 0.0
    %420 = vmatpush1.msra.mxu0 0.0
    %421 = vmatprep.subr.mxu0 0.0
    %422 = vmatpush1.msra.mxu0 0.0
    %423 = vmatprep.subr.mxu0 0.0
    %424 = vmatpush1.msra.mxu0 0.0
    %425 = vmatprep.subr.mxu0 0.0
    %426 = vmatpush1.msra.mxu0 0.0
    %427 = vmatprep.subr.mxu0 0.0
    %428 = vmatpush1.msra.mxu0 0.0
    %429 = vmatprep.subr.mxu0 0.0
    %430 = vmatpush1.msra.mxu0 0.0
    %431 = vmatprep.subr.mxu0 0.0
    %432 = vmatpush1.msra.mxu0 0.0
    %433 = vmatprep.subr.mxu0 0.0
    %434 = vmatpush1.msra.mxu0 0.0
    %435 = vmatprep.subr.mxu0 0.0
    %436 = vmatpush1.msra.mxu0 0.0
    %437 = vmatprep.subr.mxu0 0.0
    %438 = vmatpush1.msra.mxu0 0.0
    %439 = vmatprep.subr.mxu0 0.0
    %440 = vmatpush1.msra.mxu0 0.0
    %441 = vmatprep.subr.mxu0 0.0
    %442 = vmatpush1.msra.mxu0 0.0
    %443 = vmatprep.subr.mxu0 0.0
    %444 = vmatpush1.msra.mxu0 0.0
    %445 = vmatprep.subr.mxu0 0.0
    %446 = vmatpush1.msra.mxu0 0.0
    %447 = vmatprep.subr.mxu0 0.0
    %448 = vmatpush1.msra.mxu0 0.0
    %449 = vmatprep.subr.mxu0 0.0
    %450 = vmatpush1.msra.mxu0 0.0
    %451 = vmatprep.subr.mxu0 0.0
    %452 = vmatpush1.msra.mxu0 0.0
    %453 = vmatprep.subr.mxu0 0.0
    %454 = vmatpush1.msra.mxu0 0.0
    %455 = vmatprep.subr.mxu0 0.0
    %456 = vmatpush1.msra.mxu0 0.0
    %457 = vmatprep.subr.mxu0 0.0
    %458 = vmatpush1.msra.mxu0 0.0
    %459 = vmatprep.subr.mxu0 0.0
    %460 = vmatpush1.msra.mxu0 0.0
    %461 = vmatprep.subr.mxu0 0.0
    %462 = vmatpush1.msra.mxu0 0.0
    %463 = vmatprep.mubr.f32.mxu0 0.0
    %464 = vmatmul.mubr.f32.gmra.mrb[0].mxu0 %v385
    %v465 = vpop.f32.mrb[0].mxu0
    %v466 = vadd.f32 %v368, %v465
    %v467 = vpop.f32.mrb[0].mxu0
    %v468 = vadd.f32 %v370, %v467
    %469 = vmatprep.mubr.f32.mxu0 0.0
    %470 = vmatmul.mubr.f32.gmra.mrb[0].mxu0 %v388
    %v471 = vpop.f32.mrb[0].mxu0
    %v472 = vadd.f32 %v374, %v471
    %v473 = vpop.f32.mrb[0].mxu0
    %v474 = vadd.f32 %v376, %v473
    %475 = vmatprep.mubr.f32.mxu0 0.0
    %476 = vmatmul.mubr.f32.gmra.mrb[0].mxu0 %v391
    %v477 = vpop.f32.mrb[0].mxu0
    %v478 = vadd.f32 %v380, %v477
    %v479 = vpop.f32.mrb[0].mxu0
    %v480 = vadd.f32 %v382, %v479
    %481 = vdwg.mxu0
    %v482 = vld [vmem:[#allocation2 + $0x2] sm:$0xff]
    %v483 = vld [vmem:[#allocation2 + $0xa] sm:$0xff]
    %v484 = vld [vmem:[#allocation2 + $0x12] sm:$0xf]
    %s485 = scalar_lea.vmem [#allocation6], 64
    %v486 = vld [vmem:[%s485] sm:$0xff]
    %v487 = vld [vmem:[%s485 + $0x8] sm:$0xff]
    %v488 = vld [vmem:[%s485 + $0x10] sm:$0xf]
    %v489 = vld [vmem:[%s485 + $0x18] sm:$0xf]
    %v491 = vsel %vm262, %v482, 0
    %v494 = vsel %vm262, %v483, 0
    %v497 = vsel %vm262, %v484, 0
    %v500 = vsel %vm294, %v488, 0
    %v503 = vsel %vm294, %v489, 0
    %505 = vmatprep.subr.mxu0 %v487
    %506 = vmatpush1.msra.mxu0 %v486
    %507 = vmatprep.subr.mxu0 %v503
    %508 = vmatpush1.msra.mxu0 %v500
    %509 = vmatprep.subr.mxu0 0.0
    %510 = vmatpush1.msra.mxu0 0.0
    %511 = vmatprep.subr.mxu0 0.0
    %512 = vmatpush1.msra.mxu0 0.0
    %513 = vmatprep.subr.mxu0 0.0
    %514 = vmatpush1.msra.mxu0 0.0
    %515 = vmatprep.subr.mxu0 0.0
    %516 = vmatpush1.msra.mxu0 0.0
    %517 = vmatprep.subr.mxu0 0.0
    %518 = vmatpush1.msra.mxu0 0.0
    %519 = vmatprep.subr.mxu0 0.0
    %520 = vmatpush1.msra.mxu0 0.0
    %521 = vmatprep.subr.mxu0 0.0
    %522 = vmatpush1.msra.mxu0 0.0
    %523 = vmatprep.subr.mxu0 0.0
    %524 = vmatpush1.msra.mxu0 0.0
    %525 = vmatprep.subr.mxu0 0.0
    %526 = vmatpush1.msra.mxu0 0.0
    %527 = vmatprep.subr.mxu0 0.0
    %528 = vmatpush1.msra.mxu0 0.0
    %529 = vmatprep.subr.mxu0 0.0
    %530 = vmatpush1.msra.mxu0 0.0
    %531 = vmatprep.subr.mxu0 0.0
    %532 = vmatpush1.msra.mxu0 0.0
    %533 = vmatprep.subr.mxu0 0.0
    %534 = vmatpush1.msra.mxu0 0.0
    %535 = vmatprep.subr.mxu0 0.0
    %536 = vmatpush1.msra.mxu0 0.0
    %537 = vmatprep.subr.mxu0 0.0
    %538 = vmatpush1.msra.mxu0 0.0
    %539 = vmatprep.subr.mxu0 0.0
    %540 = vmatpush1.msra.mxu0 0.0
    %541 = vmatprep.subr.mxu0 0.0
    %542 = vmatpush1.msra.mxu0 0.0
    %543 = vmatprep.subr.mxu0 0.0
    %544 = vmatpush1.msra.mxu0 0.0
    %545 = vmatprep.subr.mxu0 0.0
    %546 = vmatpush1.msra.mxu0 0.0
    %547 = vmatprep.subr.mxu0 0.0
    %548 = vmatpush1.msra.mxu0 0.0
    %549 = vmatprep.subr.mxu0 0.0
    %550 = vmatpush1.msra.mxu0 0.0
    %551 = vmatprep.subr.mxu0 0.0
    %552 = vmatpush1.msra.mxu0 0.0
    %553 = vmatprep.subr.mxu0 0.0
    %554 = vmatpush1.msra.mxu0 0.0
    %555 = vmatprep.subr.mxu0 0.0
    %556 = vmatpush1.msra.mxu0 0.0
    %557 = vmatprep.subr.mxu0 0.0
    %558 = vmatpush1.msra.mxu0 0.0
    %559 = vmatprep.subr.mxu0 0.0
    %560 = vmatpush1.msra.mxu0 0.0
    %561 = vmatprep.subr.mxu0 0.0
    %562 = vmatpush1.msra.mxu0 0.0
    %563 = vmatprep.subr.mxu0 0.0
    %564 = vmatpush1.msra.mxu0 0.0
    %565 = vmatprep.subr.mxu0 0.0
    %566 = vmatpush1.msra.mxu0 0.0
    %567 = vmatprep.subr.mxu0 0.0
    %568 = vmatpush1.msra.mxu0 0.0
    %569 = vmatprep.mubr.f32.mxu0 0.0
    %570 = vmatmul.mubr.f32.gmra.mrb[0].mxu0 %v491
    %v571 = vpop.f32.mrb[0].mxu0
    %v572 = vadd.f32 0.0, %v571
    %v573 = vpop.f32.mrb[0].mxu0
    %v574 = vadd.f32 0.0, %v573
    %575 = vmatprep.mubr.f32.mxu0 0.0
    %576 = vmatmul.mubr.f32.gmra.mrb[0].mxu0 %v494
    %v577 = vpop.f32.mrb[0].mxu0
    %v578 = vadd.f32 0.0, %v577
    %v579 = vpop.f32.mrb[0].mxu0
    %v580 = vadd.f32 0.0, %v579
    %581 = vmatprep.mubr.f32.mxu0 0.0
    %582 = vmatmul.mubr.f32.gmra.mrb[0].mxu0 %v497
    %v583 = vpop.f32.mrb[0].mxu0
    %v584 = vadd.f32 0.0, %v583
    %v585 = vpop.f32.mrb[0].mxu0
    %v586 = vadd.f32 0.0, %v585
    %587 = vdwg.mxu0
    %v588 = vadd.f32 %v466, %v572
    %v589 = vadd.f32 %v468, %v574
    %v590 = vadd.f32 %v472, %v578
    %v591 = vadd.f32 %v474, %v580
    %v592 = vadd.f32 %v478, %v584
    %v593 = vadd.f32 %v480, %v586
    %v594 = vld [vmem:[#allocation2 + $0x3] sm:$0xff]
    %v595 = vld [vmem:[#allocation2 + $0xb] sm:$0xff]
    %v596 = vld [vmem:[#allocation2 + $0x13] sm:$0xf]
    %s597 = scalar_lea.vmem [#allocation6], 96
    %v598 = vld [vmem:[%s597] sm:$0xff]
    %v599 = vld [vmem:[%s597 + $0x8] sm:$0xff]
    %v600 = vld [vmem:[%s597 + $0x10] sm:$0xf]
    %v601 = vld [vmem:[%s597 + $0x18] sm:$0xf]
    %v603 = vsel %vm262, %v594, 0
    %v606 = vsel %vm262, %v595, 0
    %v609 = vsel %vm262, %v596, 0
    %v612 = vsel %vm294, %v600, 0
    %v615 = vsel %vm294, %v601, 0
    %617 = vmatprep.subr.mxu0 %v599
    %618 = vmatpush1.msra.mxu0 %v598
    %619 = vmatprep.subr.mxu0 %v615
    %620 = vmatpush1.msra.mxu0 %v612
    %621 = vmatprep.subr.mxu0 0.0
    %622 = vmatpush1.msra.mxu0 0.0
    %623 = vmatprep.subr.mxu0 0.0
    %624 = vmatpush1.msra.mxu0 0.0
    %625 = vmatprep.subr.mxu0 0.0
    %626 = vmatpush1.msra.mxu0 0.0
    %627 = vmatprep.subr.mxu0 0.0
    %628 = vmatpush1.msra.mxu0 0.0
    %629 = vmatprep.subr.mxu0 0.0
    %630 = vmatpush1.msra.mxu0 0.0
    %631 = vmatprep.subr.mxu0 0.0
    %632 = vmatpush1.msra.mxu0 0.0
    %633 = vmatprep.subr.mxu0 0.0
    %634 = vmatpush1.msra.mxu0 0.0
    %635 = vmatprep.subr.mxu0 0.0
    %636 = vmatpush1.msra.mxu0 0.0
    %637 = vmatprep.subr.mxu0 0.0
    %638 = vmatpush1.msra.mxu0 0.0
    %639 = vmatprep.subr.mxu0 0.0
    %640 = vmatpush1.msra.mxu0 0.0
    %641 = vmatprep.subr.mxu0 0.0
    %642 = vmatpush1.msra.mxu0 0.0
    %643 = vmatprep.subr.mxu0 0.0
    %644 = vmatpush1.msra.mxu0 0.0
    %645 = vmatprep.subr.mxu0 0.0
    %646 = vmatpush1.msra.mxu0 0.0
    %647 = vmatprep.subr.mxu0 0.0
    %648 = vmatpush1.msra.mxu0 0.0
    %649 = vmatprep.subr.mxu0 0.0
    %650 = vmatpush1.msra.mxu0 0.0
    %651 = vmatprep.subr.mxu0 0.0
    %652 = vmatpush1.msra.mxu0 0.0
    %653 = vmatprep.subr.mxu0 0.0
    %654 = vmatpush1.msra.mxu0 0.0
    %655 = vmatprep.subr.mxu0 0.0
    %656 = vmatpush1.msra.mxu0 0.0
    %657 = vmatprep.subr.mxu0 0.0
    %658 = vmatpush1.msra.mxu0 0.0
    %659 = vmatprep.subr.mxu0 0.0
    %660 = vmatpush1.msra.mxu0 0.0
    %661 = vmatprep.subr.mxu0 0.0
    %662 = vmatpush1.msra.mxu0 0.0
    %663 = vmatprep.subr.mxu0 0.0
    %664 = vmatpush1.msra.mxu0 0.0
    %665 = vmatprep.subr.mxu0 0.0
    %666 = vmatpush1.msra.mxu0 0.0
    %667 = vmatprep.subr.mxu0 0.0
    %668 = vmatpush1.msra.mxu0 0.0
    %669 = vmatprep.subr.mxu0 0.0
    %670 = vmatpush1.msra.mxu0 0.0
    %671 = vmatprep.subr.mxu0 0.0
    %672 = vmatpush1.msra.mxu0 0.0
    %673 = vmatprep.subr.mxu0 0.0
    %674 = vmatpush1.msra.mxu0 0.0
    %675 = vmatprep.subr.mxu0 0.0
    %676 = vmatpush1.msra.mxu0 0.0
    %677 = vmatprep.subr.mxu0 0.0
    %678 = vmatpush1.msra.mxu0 0.0
    %679 = vmatprep.subr.mxu0 0.0
    %680 = vmatpush1.msra.mxu0 0.0
    %681 = vmatprep.mubr.f32.mxu0 0.0
    %682 = vmatmul.mubr.f32.gmra.mrb[0].mxu0 %v603
    %v683 = vpop.f32.mrb[0].mxu0
    %v684 = vadd.f32 0.0, %v683
    %v685 = vpop.f32.mrb[0].mxu0
    %v686 = vadd.f32 0.0, %v685
    %687 = vmatprep.mubr.f32.mxu0 0.0
    %688 = vmatmul.mubr.f32.gmra.mrb[0].mxu0 %v606
    %v689 = vpop.f32.mrb[0].mxu0
    %v690 = vadd.f32 0.0, %v689
    %v691 = vpop.f32.mrb[0].mxu0
    %v692 = vadd.f32 0.0, %v691
    %693 = vmatprep.mubr.f32.mxu0 0.0
    %694 = vmatmul.mubr.f32.gmra.mrb[0].mxu0 %v609
    %v695 = vpop.f32.mrb[0].mxu0
    %v696 = vadd.f32 0.0, %v695
    %v697 = vpop.f32.mrb[0].mxu0
    %v698 = vadd.f32 0.0, %v697
    %699 = vdwg.mxu0
    %v700 = vadd.f32 %v588, %v684
    %v701 = vadd.f32 %v589, %v686
    %v702 = vadd.f32 %v590, %v690
    %v703 = vadd.f32 %v591, %v692
    %v704 = vadd.f32 %v592, %v696
    %v705 = vadd.f32 %v593, %v698
    %v706 = vld [vmem:[#allocation2 + $0x4] sm:$0xff]
    %v707 = vld [vmem:[#allocation2 + $0xc] sm:$0xff]
    %v708 = vld [vmem:[#allocation2 + $0x14] sm:$0xf]
    %s709 = scalar_lea.vmem [#allocation6], 128
    %v710 = vld [vmem:[%s709] sm:$0xff]
    %v711 = vld [vmem:[%s709 + $0x8] sm:$0xff]
    %v712 = vld [vmem:[%s709 + $0x10] sm:$0xf]
    %v713 = vld [vmem:[%s709 + $0x18] sm:$0xf]
    %v715 = vsel %vm262, %v706, 0
    %v718 = vsel %vm262, %v707, 0
    %v721 = vsel %vm262, %v708, 0
    %v724 = vsel %vm294, %v712, 0
    %v727 = vsel %vm294, %v713, 0
    %729 = vmatprep.subr.mxu0 %v711
    %730 = vmatpush1.msra.mxu0 %v710
    %731 = vmatprep.subr.mxu0 %v727
    %732 = vmatpush1.msra.mxu0 %v724
    %733 = vmatprep.subr.mxu0 0.0
    %734 = vmatpush1.msra.mxu0 0.0
    %735 = vmatprep.subr.mxu0 0.0
    %736 = vmatpush1.msra.mxu0 0.0
    %737 = vmatprep.subr.mxu0 0.0
    %738 = vmatpush1.msra.mxu0 0.0
    %739 = vmatprep.subr.mxu0 0.0
    %740 = vmatpush1.msra.mxu0 0.0
    %741 = vmatprep.subr.mxu0 0.0
    %742 = vmatpush1.msra.mxu0 0.0
    %743 = vmatprep.subr.mxu0 0.0
    %744 = vmatpush1.msra.mxu0 0.0
    %745 = vmatprep.subr.mxu0 0.0
    %746 = vmatpush1.msra.mxu0 0.0
    %747 = vmatprep.subr.mxu0 0.0
    %748 = vmatpush1.msra.mxu0 0.0
    %749 = vmatprep.subr.mxu0 0.0
    %750 = vmatpush1.msra.mxu0 0.0
    %751 = vmatprep.subr.mxu0 0.0
    %752 = vmatpush1.msra.mxu0 0.0
    %753 = vmatprep.subr.mxu0 0.0
    %754 = vmatpush1.msra.mxu0 0.0
    %755 = vmatprep.subr.mxu0 0.0
    %756 = vmatpush1.msra.mxu0 0.0
    %757 = vmatprep.subr.mxu0 0.0
    %758 = vmatpush1.msra.mxu0 0.0
    %759 = vmatprep.subr.mxu0 0.0
    %760 = vmatpush1.msra.mxu0 0.0
    %761 = vmatprep.subr.mxu0 0.0
    %762 = vmatpush1.msra.mxu0 0.0
    %763 = vmatprep.subr.mxu0 0.0
    %764 = vmatpush1.msra.mxu0 0.0
    %765 = vmatprep.subr.mxu0 0.0
    %766 = vmatpush1.msra.mxu0 0.0
    %767 = vmatprep.subr.mxu0 0.0
    %768 = vmatpush1.msra.mxu0 0.0
    %769 = vmatprep.subr.mxu0 0.0
    %770 = vmatpush1.msra.mxu0 0.0
    %771 = vmatprep.subr.mxu0 0.0
    %772 = vmatpush1.msra.mxu0 0.0
    %773 = vmatprep.subr.mxu0 0.0
    %774 = vmatpush1.msra.mxu0 0.0
    %775 = vmatprep.subr.mxu0 0.0
    %776 = vmatpush1.msra.mxu0 0.0
    %777 = vmatprep.subr.mxu0 0.0
    %778 = vmatpush1.msra.mxu0 0.0
    %779 = vmatprep.subr.mxu0 0.0
    %780 = vmatpush1.msra.mxu0 0.0
    %781 = vmatprep.subr.mxu0 0.0
    %782 = vmatpush1.msra.mxu0 0.0
    %783 = vmatprep.subr.mxu0 0.0
    %784 = vmatpush1.msra.mxu0 0.0
    %785 = vmatprep.subr.mxu0 0.0
    %786 = vmatpush1.msra.mxu0 0.0
    %787 = vmatprep.subr.mxu0 0.0
    %788 = vmatpush1.msra.mxu0 0.0
    %789 = vmatprep.subr.mxu0 0.0
    %790 = vmatpush1.msra.mxu0 0.0
    %791 = vmatprep.subr.mxu0 0.0
    %792 = vmatpush1.msra.mxu0 0.0
    %793 = vmatprep.mubr.f32.mxu0 0.0
    %794 = vmatmul.mubr.f32.gmra.mrb[0].mxu0 %v715
    %v795 = vpop.f32.mrb[0].mxu0
    %v796 = vadd.f32 0.0, %v795
    %v797 = vpop.f32.mrb[0].mxu0
    %v798 = vadd.f32 0.0, %v797
    %799 = vmatprep.mubr.f32.mxu0 0.0
    %800 = vmatmul.mubr.f32.gmra.mrb[0].mxu0 %v718
    %v801 = vpop.f32.mrb[0].mxu0
    %v802 = vadd.f32 0.0, %v801
    %v803 = vpop.f32.mrb[0].mxu0
    %v804 = vadd.f32 0.0, %v803
    %805 = vmatprep.mubr.f32.mxu0 0.0
    %806 = vmatmul.mubr.f32.gmra.mrb[0].mxu0 %v721
    %v807 = vpop.f32.mrb[0].mxu0
    %v808 = vadd.f32 0.0, %v807
    %v809 = vpop.f32.mrb[0].mxu0
    %v810 = vadd.f32 0.0, %v809
    %811 = vdwg.mxu0
    %v812 = vadd.f32 %v700, %v796
    %v813 = vadd.f32 %v701, %v798
    %v814 = vadd.f32 %v702, %v802
    %v815 = vadd.f32 %v703, %v804
    %v816 = vadd.f32 %v704, %v808
    %v817 = vadd.f32 %v705, %v810
    %v818 = vld [vmem:[#allocation9] sm:$0x3]
    %v820 = vlaneseq
    %v821 = vshrl.u32 %v820, 7
    %v822 = vsub.s32 0, %v821
    %v823 = vrot.slane %v818, %v822
    %v824 = vlaneseq
    %v825 = vshrl.u32 %v824, 7
    %v826 = vsub.s32 1, %v825
    %v827 = vrot.slane %v818, %v826
    %v830 = vmul.f32 %v812, %v823
    %v831 = vmul.f32 %v813, %v827
    %v832 = vmul.f32 %v814, %v823
    %v833 = vmul.f32 %v815, %v827
    %v834 = vmul.f32 %v816, %v823
    %v835 = vmul.f32 %v817, %v827
    %v836 = vld [vmem:[#allocation11] sm:$0x3]
    %v838 = vlaneseq
    %v839 = vshrl.u32 %v838, 7
    %v840 = vsub.s32 0, %v839
    %v841 = vrot.slane %v836, %v840
    %v842 = vlaneseq
    %v843 = vshrl.u32 %v842, 7
    %v844 = vsub.s32 1, %v843
    %v845 = vrot.slane %v836, %v844
    %v848 = vadd.f32 %v830, %v841
    %v849 = vadd.f32 %v831, %v845
    %v850 = vadd.f32 %v832, %v841
    %v851 = vadd.f32 %v833, %v845
    %v852 = vadd.f32 %v834, %v841
    %v853 = vadd.f32 %v835, %v845
    %v854 = vmax.f32 %v848, 0.0
    %v855 = vmax.f32 %v849, 0.0
    %v856 = vmax.f32 %v850, 0.0
    %v857 = vmax.f32 %v851, 0.0
    %v858 = vmax.f32 %v852, 0.0
    %v859 = vmax.f32 %v853, 0.0
    %vm860 = vcmask 785408
    %861 = vst.msk [vmem:[#allocation3] sm:$0xff] %vm860, 0.0
    %862 = vst.msk [vmem:[#allocation3 + $0x8] sm:$0xff] %vm860, 0.0
    %v865 = vrot.slane %v854, 1
    %v866 = vrot.slane %v855, 1
    %v869 = vmax.f32 %v854, %v865
    %v870 = vmax.f32 %v855, %v866
    %v871 = vmax.f32 %v869, %v870
    %vm872 = vcmask 778240
    %873 = vst.msk [vmem:[#allocation3 + $0x2] sm:$0x1] %vm872, %v871
    %vm874 = vcmask 780290
    %875 = vst.msk [vmem:[#allocation3 + $0x1] sm:$0x4] %vm874, %v871
    %vm876 = vcmask 782340
    %877 = vst.msk [vmem:[#allocation3] sm:$0x10] %vm876, %v871
    %vm878 = vcmask 784390
    %879 = vst.msk [vmem:[#allocation3 - $0x1] sm:$0x40] %vm878, %v871
    %v882 = vrot.slane %v856, 1
    %v883 = vrot.slane %v857, 1
    %v886 = vmax.f32 %v856, %v882
    %v887 = vmax.f32 %v857, %v883
    %v888 = vmax.f32 %v886, %v887
    %889 = vst.msk [vmem:[#allocation3 + $0x6] sm:$0x10] %vm876, %v888
    %890 = vst.msk [vmem:[#allocation3 + $0x5] sm:$0x40] %vm878, %v888
    %v893 = vrot.slane %v858, 1
    %v894 = vrot.slane %v859, 1
    %v897 = vmax.f32 %v858, %v893
    %v898 = vmax.f32 %v859, %v894
    %v899 = vmax.f32 %v897, %v898
    %900 = vst.msk [vmem:[#allocation3 + $0xc] sm:$0x1] %vm872, %v899
    %901 = vst.msk [vmem:[#allocation3 + $0xb] sm:$0x4] %vm874, %v899
    %v902 = vld [vmem:[#allocation3] sm:$0xff]
    %v903 = vld [vmem:[#allocation3 + $0x8] sm:$0xf]
    %v904 = vld [vmem:[%s4] sm:$0xff]
    %v905 = vld [vmem:[%s4 + $0x8] sm:$0xff]
    %v906 = vld [vmem:[%s4 + $0x10] sm:$0xff]
    %v907 = vld [vmem:[%s4 + $0x18] sm:$0xff]
    %v908 = vld [vmem:[%s4 + $0x20] sm:$0xff]
    %v909 = vld [vmem:[%s4 + $0x28] sm:$0xff]
    %v910 = vld [vmem:[%s4 + $0x30] sm:$0xff]
    %v911 = vld [vmem:[%s4 + $0x38] sm:$0xff]
    %v912 = vld [vmem:[%s4 + $0x40] sm:$0xff]
    %v913 = vld [vmem:[%s4 + $0x48] sm:$0xff]
    %v914 = vld [vmem:[%s4 + $0x50] sm:$0xff]
    %v915 = vld [vmem:[%s4 + $0x58] sm:$0xff]
    %v916 = vld [vmem:[#allocation3 + $0x1] sm:$0xff]
    %v917 = vld [vmem:[#allocation3 + $0x9] sm:$0xf]
    %s918 = scalar_lea.vmem %s4, 96
    %v919 = vld [vmem:[%s918] sm:$0xff]
    %v920 = vld [vmem:[%s918 + $0x8] sm:$0xff]
    %v921 = vld [vmem:[%s918 + $0x10] sm:$0xff]
    %v922 = vld [vmem:[%s918 + $0x18] sm:$0xff]
    %v923 = vld [vmem:[%s918 + $0x20] sm:$0xff]
    %v924 = vld [vmem:[%s918 + $0x28] sm:$0xff]
    %v925 = vld [vmem:[%s918 + $0x30] sm:$0xff]
    %v926 = vld [vmem:[%s918 + $0x38] sm:$0xff]
    %v927 = vld [vmem:[%s918 + $0x40] sm:$0xff]
    %v928 = vld [vmem:[%s918 + $0x48] sm:$0xff]
    %v929 = vld [vmem:[%s918 + $0x50] sm:$0xff]
    %v930 = vld [vmem:[%s918 + $0x58] sm:$0xff]
    %v932 = vsel %vm860, %v916, 0
    %v935 = vsel %vm860, %v917, 0
    %937 = vmatprep.subr.mxu0 0.0
    %938 = vmatpush1.msra.mxu0 %v919
    %939 = vmatprep.subr.mxu0 0.0
    %940 = vmatpush1.msra.mxu0 %v920
    %941 = vmatprep.subr.mxu0 0.0
    %942 = vmatpush1.msra.mxu0 %v921
    %943 = vmatprep.subr.mxu0 0.0
    %944 = vmatpush1.msra.mxu0 %v922
    %945 = vmatprep.subr.mxu0 0.0
    %946 = vmatpush1.msra.mxu0 %v923
    %947 = vmatprep.subr.mxu0 0.0
    %948 = vmatpush1.msra.mxu0 %v924
    %949 = vmatprep.subr.mxu0 0.0
    %950 = vmatpush1.msra.mxu0 %v925
    %951 = vmatprep.subr.mxu0 0.0
    %952 = vmatpush1.msra.mxu0 %v926
    %953 = vmatprep.subr.mxu0 0.0
    %954 = vmatpush1.msra.mxu0 %v927
    %955 = vmatprep.subr.mxu0 0.0
    %956 = vmatpush1.msra.mxu0 %v928
    %957 = vmatprep.subr.mxu0 0.0
    %958 = vmatpush1.msra.mxu0 %v929
    %959 = vmatprep.subr.mxu0 0.0
    %960 = vmatpush1.msra.mxu0 %v930
    %961 = vmatprep.subr.mxu0 0.0
    %962 = vmatpush1.msra.mxu0 0.0
    %963 = vmatprep.subr.mxu0 0.0
    %964 = vmatpush1.msra.mxu0 0.0
    %965 = vmatprep.subr.mxu0 0.0
    %966 = vmatpush1.msra.mxu0 0.0
    %967 = vmatprep.subr.mxu0 0.0
    %968 = vmatpush1.msra.mxu0 0.0
    %969 = vmatprep.subr.mxu0 0.0
    %970 = vmatpush1.msra.mxu0 0.0
    %971 = vmatprep.subr.mxu0 0.0
    %972 = vmatpush1.msra.mxu0 0.0
    %973 = vmatprep.subr.mxu0 0.0
    %974 = vmatpush1.msra.mxu0 0.0
    %975 = vmatprep.subr.mxu0 0.0
    %976 = vmatpush1.msra.mxu0 0.0
    %977 = vmatprep.subr.mxu0 0.0
    %978 = vmatpush1.msra.mxu0 0.0
    %979 = vmatprep.subr.mxu0 0.0
    %980 = vmatpush1.msra.mxu0 0.0
    %981 = vmatprep.subr.mxu0 0.0
    %982 = vmatpush1.msra.mxu0 0.0
    %983 = vmatprep.subr.mxu0 0.0
    %984 = vmatpush1.msra.mxu0 0.0
    %985 = vmatprep.subr.mxu0 0.0
    %986 = vmatpush1.msra.mxu0 0.0
    %987 = vmatprep.subr.mxu0 0.0
    %988 = vmatpush1.msra.mxu0 0.0
    %989 = vmatprep.subr.mxu0 0.0
    %990 = vmatpush1.msra.mxu0 0.0
    %991 = vmatprep.subr.mxu0 0.0
    %992 = vmatpush1.msra.mxu0 0.0
    %993 = vmatprep.subr.mxu0 0.0
    %994 = vmatpush1.msra.mxu0 0.0
    %995 = vmatprep.subr.mxu0 0.0
    %996 = vmatpush1.msra.mxu0 0.0
    %997 = vmatprep.subr.mxu0 0.0
    %998 = vmatpush1.msra.mxu0 0.0
    %999 = vmatprep.subr.mxu0 0.0
    %1000 = vmatpush1.msra.mxu0 0.0
    %1001 = vmatprep.mubr.f32.mxu0 0.0
    %1002 = vmatmul.mubr.f32.gmra.mrb[0].mxu0 %v932
    %v1003 = vpop.f32.mrb[0].mxu0
    %v1004 = vadd.f32 0.0, %v1003
    %v1005 = vpop.f32.mrb[0].mxu0
    %1006 = vmatprep.mubr.f32.mxu0 0.0
    %1007 = vmatmul.mubr.f32.gmra.mrb[0].mxu0 %v935
    %v1008 = vpop.f32.mrb[0].mxu0
    %v1009 = vadd.f32 0.0, %v1008
    %v1010 = vpop.f32.mrb[0].mxu0
    %1011 = vdwg.mxu0
    %v1013 = vsel %vm860, %v902, 0
    %v1016 = vsel %vm860, %v903, 0
    %1018 = vmatprep.subr.mxu0 0.0
    %1019 = vmatpush1.msra.mxu0 %v904
    %1020 = vmatprep.subr.mxu0 0.0
    %1021 = vmatpush1.msra.mxu0 %v905
    %1022 = vmatprep.subr.mxu0 0.0
    %1023 = vmatpush1.msra.mxu0 %v906
    %1024 = vmatprep.subr.mxu0 0.0
    %1025 = vmatpush1.msra.mxu0 %v907
    %1026 = vmatprep.subr.mxu0 0.0
    %1027 = vmatpush1.msra.mxu0 %v908
    %1028 = vmatprep.subr.mxu0 0.0
    %1029 = vmatpush1.msra.mxu0 %v909
    %1030 = vmatprep.subr.mxu0 0.0
    %1031 = vmatpush1.msra.mxu0 %v910
    %1032 = vmatprep.subr.mxu0 0.0
    %1033 = vmatpush1.msra.mxu0 %v911
    %1034 = vmatprep.subr.mxu0 0.0
    %1035 = vmatpush1.msra.mxu0 %v912
    %1036 = vmatprep.subr.mxu0 0.0
    %1037 = vmatpush1.msra.mxu0 %v913
    %1038 = vmatprep.subr.mxu0 0.0
    %1039 = vmatpush1.msra.mxu0 %v914
    %1040 = vmatprep.subr.mxu0 0.0
    %1041 = vmatpush1.msra.mxu0 %v915
    %1042 = vmatprep.subr.mxu0 0.0
    %1043 = vmatpush1.msra.mxu0 0.0
    %1044 = vmatprep.subr.mxu0 0.0
    %1045 = vmatpush1.msra.mxu0 0.0
    %1046 = vmatprep.subr.mxu0 0.0
    %1047 = vmatpush1.msra.mxu0 0.0
    %1048 = vmatprep.subr.mxu0 0.0
    %1049 = vmatpush1.msra.mxu0 0.0
    %1050 = vmatprep.subr.mxu0 0.0
    %1051 = vmatpush1.msra.mxu0 0.0
    %1052 = vmatprep.subr.mxu0 0.0
    %1053 = vmatpush1.msra.mxu0 0.0
    %1054 = vmatprep.subr.mxu0 0.0
    %1055 = vmatpush1.msra.mxu0 0.0
    %1056 = vmatprep.subr.mxu0 0.0
    %1057 = vmatpush1.msra.mxu0 0.0
    %1058 = vmatprep.subr.mxu0 0.0
    %1059 = vmatpush1.msra.mxu0 0.0
    %1060 = vmatprep.subr.mxu0 0.0
    %1061 = vmatpush1.msra.mxu0 0.0
    %1062 = vmatprep.subr.mxu0 0.0
    %1063 = vmatpush1.msra.mxu0 0.0
    %1064 = vmatprep.subr.mxu0 0.0
    %1065 = vmatpush1.msra.mxu0 0.0
    %1066 = vmatprep.subr.mxu0 0.0
    %1067 = vmatpush1.msra.mxu0 0.0
    %1068 = vmatprep.subr.mxu0 0.0
    %1069 = vmatpush1.msra.mxu0 0.0
    %1070 = vmatprep.subr.mxu0 0.0
    %1071 = vmatpush1.msra.mxu0 0.0
    %1072 = vmatprep.subr.mxu0 0.0
    %1073 = vmatpush1.msra.mxu0 0.0
    %1074 = vmatprep.subr.mxu0 0.0
    %1075 = vmatpush1.msra.mxu0 0.0
    %1076 = vmatprep.subr.mxu0 0.0
    %1077 = vmatpush1.msra.mxu0 0.0
    %1078 = vmatprep.subr.mxu0 0.0
    %1079 = vmatpush1.msra.mxu0 0.0
    %1080 = vmatprep.subr.mxu0 0.0
    %1081 = vmatpush1.msra.mxu0 0.0
    %1082 = vmatprep.mubr.f32.mxu0 0.0
    %1083 = vmatmul.mubr.f32.gmra.mrb[0].mxu0 %v1013
    %v1084 = vpop.f32.mrb[0].mxu0
    %v1085 = vadd.f32 %v1004, %v1084
    %v1086 = vpop.f32.mrb[0].mxu0
    %1087 = vmatprep.mubr.f32.mxu0 0.0
    %1088 = vmatmul.mubr.f32.gmra.mrb[0].mxu0 %v1016
    %v1089 = vpop.f32.mrb[0].mxu0
    %v1090 = vadd.f32 %v1009, %v1089
    %v1091 = vpop.f32.mrb[0].mxu0
    %1092 = vdwg.mxu0
    %v1093 = vld [vmem:[#allocation3 + $0x2] sm:$0xff]
    %v1094 = vld [vmem:[#allocation3 + $0xa] sm:$0xf]
    %s1095 = scalar_lea.vmem %s4, 192
    %v1096 = vld [vmem:[%s1095] sm:$0xff]
    %v1097 = vld [vmem:[%s1095 + $0x8] sm:$0xff]
    %v1098 = vld [vmem:[%s1095 + $0x10] sm:$0xff]
    %v1099 = vld [vmem:[%s1095 + $0x18] sm:$0xff]
    %v1100 = vld [vmem:[%s1095 + $0x20] sm:$0xff]
    %v1101 = vld [vmem:[%s1095 + $0x28] sm:$0xff]
    %v1102 = vld [vmem:[%s1095 + $0x30] sm:$0xff]
    %v1103 = vld [vmem:[%s1095 + $0x38] sm:$0xff]
    %v1104 = vld [vmem:[%s1095 + $0x40] sm:$0xff]
    %v1105 = vld [vmem:[%s1095 + $0x48] sm:$0xff]
    %v1106 = vld [vmem:[%s1095 + $0x50] sm:$0xff]
    %v1107 = vld [vmem:[%s1095 + $0x58] sm:$0xff]
    %v1109 = vsel %vm860, %v1093, 0
    %v1112 = vsel %vm860, %v1094, 0
    %1114 = vmatprep.subr.mxu0 0.0
    %1115 = vmatpush1.msra.mxu0 %v1096
    %1116 = vmatprep.subr.mxu0 0.0
    %1117 = vmatpush1.msra.mxu0 %v1097
    %1118 = vmatprep.subr.mxu0 0.0
    %1119 = vmatpush1.msra.mxu0 %v1098
    %1120 = vmatprep.subr.mxu0 0.0
    %1121 = vmatpush1.msra.mxu0 %v1099
    %1122 = vmatprep.subr.mxu0 0.0
    %1123 = vmatpush1.msra.mxu0 %v1100
    %1124 = vmatprep.subr.mxu0 0.0
    %1125 = vmatpush1.msra.mxu0 %v1101
    %1126 = vmatprep.subr.mxu0 0.0
    %1127 = vmatpush1.msra.mxu0 %v1102
    %1128 = vmatprep.subr.mxu0 0.0
    %1129 = vmatpush1.msra.mxu0 %v1103
    %1130 = vmatprep.subr.mxu0 0.0
    %1131 = vmatpush1.msra.mxu0 %v1104
    %1132 = vmatprep.subr.mxu0 0.0
    %1133 = vmatpush1.msra.mxu0 %v1105
    %1134 = vmatprep.subr.mxu0 0.0
    %1135 = vmatpush1.msra.mxu0 %v1106
    %1136 = vmatprep.subr.mxu0 0.0
    %1137 = vmatpush1.msra.mxu0 %v1107
    %1138 = vmatprep.subr.mxu0 0.0
    %1139 = vmatpush1.msra.mxu0 0.0
    %1140 = vmatprep.subr.mxu0 0.0
    %1141 = vmatpush1.msra.mxu0 0.0
    %1142 = vmatprep.subr.mxu0 0.0
    %1143 = vmatpush1.msra.mxu0 0.0
    %1144 = vmatprep.subr.mxu0 0.0
    %1145 = vmatpush1.msra.mxu0 0.0
    %1146 = vmatprep.subr.mxu0 0.0
    %1147 = vmatpush1.msra.mxu0 0.0
    %1148 = vmatprep.subr.mxu0 0.0
    %1149 = vmatpush1.msra.mxu0 0.0
    %1150 = vmatprep.subr.mxu0 0.0
    %1151 = vmatpush1.msra.mxu0 0.0
    %1152 = vmatprep.subr.mxu0 0.0
    %1153 = vmatpush1.msra.mxu0 0.0
    %1154 = vmatprep.subr.mxu0 0.0
    %1155 = vmatpush1.msra.mxu0 0.0
    %1156 = vmatprep.subr.mxu0 0.0
    %1157 = vmatpush1.msra.mxu0 0.0
    %1158 = vmatprep.subr.mxu0 0.0
    %1159 = vmatpush1.msra.mxu0 0.0
    %1160 = vmatprep.subr.mxu0 0.0
    %1161 = vmatpush1.msra.mxu0 0.0
    %1162 = vmatprep.subr.mxu0 0.0
    %1163 = vmatpush1.msra.mxu0 0.0
    %1164 = vmatprep.subr.mxu0 0.0
    %1165 = vmatpush1.msra.mxu0 0.0
    %1166 = vmatprep.subr.mxu0 0.0
    %1167 = vmatpush1.msra.mxu0 0.0
    %1168 = vmatprep.subr.mxu0 0.0
    %1169 = vmatpush1.msra.mxu0 0.0
    %1170 = vmatprep.subr.mxu0 0.0
    %1171 = vmatpush1.msra.mxu0 0.0
    %1172 = vmatprep.subr.mxu0 0.0
    %1173 = vmatpush1.msra.mxu0 0.0
    %1174 = vmatprep.subr.mxu0 0.0
    %1175 = vmatpush1.msra.mxu0 0.0
    %1176 = vmatprep.subr.mxu0 0.0
    %1177 = vmatpush1.msra.mxu0 0.0
    %1178 = vmatprep.mubr.f32.mxu0 0.0
    %1179 = vmatmul.mubr.f32.gmra.mrb[0].mxu0 %v1109
    %v1180 = vpop.f32.mrb[0].mxu0
    %v1181 = vadd.f32 0.0, %v1180
    %v1182 = vpop.f32.mrb[0].mxu0
    %1183 = vmatprep.mubr.f32.mxu0 0.0
    %1184 = vmatmul.mubr.f32.gmra.mrb[0].mxu0 %v1112
    %v1185 = vpop.f32.mrb[0].mxu0
    %v1186 = vadd.f32 0.0, %v1185
    %v1187 = vpop.f32.mrb[0].mxu0
    %1188 = vdwg.mxu0
    %v1189 = vadd.f32 %v1085, %v1181
    %v1190 = vadd.f32 %v1090, %v1186
    %v1191 = vld [vmem:[#allocation3 + $0x3] sm:$0xff]
    %v1192 = vld [vmem:[#allocation3 + $0xb] sm:$0xf]
    %s1193 = scalar_lea.vmem %s4, 288
    %v1194 = vld [vmem:[%s1193] sm:$0xff]
    %v1195 = vld [vmem:[%s1193 + $0x8] sm:$0xff]
    %v1196 = vld [vmem:[%s1193 + $0x10] sm:$0xff]
    %v1197 = vld [vmem:[%s1193 + $0x18] sm:$0xff]
    %v1198 = vld [vmem:[%s1193 + $0x20] sm:$0xff]
    %v1199 = vld [vmem:[%s1193 + $0x28] sm:$0xff]
    %v1200 = vld [vmem:[%s1193 + $0x30] sm:$0xff]
    %v1201 = vld [vmem:[%s1193 + $0x38] sm:$0xff]
    %v1202 = vld [vmem:[%s1193 + $0x40] sm:$0xff]
    %v1203 = vld [vmem:[%s1193 + $0x48] sm:$0xff]
    %v1204 = vld [vmem:[%s1193 + $0x50] sm:$0xff]
    %v1205 = vld [vmem:[%s1193 + $0x58] sm:$0xff]
    %v1207 = vsel %vm860, %v1191, 0
    %v1210 = vsel %vm860, %v1192, 0
    %1212 = vmatprep.subr.mxu0 0.0
    %1213 = vmatpush1.msra.mxu0 %v1194
    %1214 = vmatprep.subr.mxu0 0.0
    %1215 = vmatpush1.msra.mxu0 %v1195
    %1216 = vmatprep.subr.mxu0 0.0
    %1217 = vmatpush1.msra.mxu0 %v1196
    %1218 = vmatprep.subr.mxu0 0.0
    %1219 = vmatpush1.msra.mxu0 %v1197
    %1220 = vmatprep.subr.mxu0 0.0
    %1221 = vmatpush1.msra.mxu0 %v1198
    %1222 = vmatprep.subr.mxu0 0.0
    %1223 = vmatpush1.msra.mxu0 %v1199
    %1224 = vmatprep.subr.mxu0 0.0
    %1225 = vmatpush1.msra.mxu0 %v1200
    %1226 = vmatprep.subr.mxu0 0.0
    %1227 = vmatpush1.msra.mxu0 %v1201
    %1228 = vmatprep.subr.mxu0 0.0
    %1229 = vmatpush1.msra.mxu0 %v1202
    %1230 = vmatprep.subr.mxu0 0.0
    %1231 = vmatpush1.msra.mxu0 %v1203
    %1232 = vmatprep.subr.mxu0 0.0
    %1233 = vmatpush1.msra.mxu0 %v1204
    %1234 = vmatprep.subr.mxu0 0.0
    %1235 = vmatpush1.msra.mxu0 %v1205
    %1236 = vmatprep.subr.mxu0 0.0
    %1237 = vmatpush1.msra.mxu0 0.0
    %1238 = vmatprep.subr.mxu0 0.0
    %1239 = vmatpush1.msra.mxu0 0.0
    %1240 = vmatprep.subr.mxu0 0.0
    %1241 = vmatpush1.msra.mxu0 0.0
    %1242 = vmatprep.subr.mxu0 0.0
    %1243 = vmatpush1.msra.mxu0 0.0
    %1244 = vmatprep.subr.mxu0 0.0
    %1245 = vmatpush1.msra.mxu0 0.0
    %1246 = vmatprep.subr.mxu0 0.0
    %1247 = vmatpush1.msra.mxu0 0.0
    %1248 = vmatprep.subr.mxu0 0.0
    %1249 = vmatpush1.msra.mxu0 0.0
    %1250 = vmatprep.subr.mxu0 0.0
    %1251 = vmatpush1.msra.mxu0 0.0
    %1252 = vmatprep.subr.mxu0 0.0
    %1253 = vmatpush1.msra.mxu0 0.0
    %1254 = vmatprep.subr.mxu0 0.0
    %1255 = vmatpush1.msra.mxu0 0.0
    %1256 = vmatprep.subr.mxu0 0.0
    %1257 = vmatpush1.msra.mxu0 0.0
    %1258 = vmatprep.subr.mxu0 0.0
    %1259 = vmatpush1.msra.mxu0 0.0
    %1260 = vmatprep.subr.mxu0 0.0
    %1261 = vmatpush1.msra.mxu0 0.0
    %1262 = vmatprep.subr.mxu0 0.0
    %1263 = vmatpush1.msra.mxu0 0.0
    %1264 = vmatprep.subr.mxu0 0.0
    %1265 = vmatpush1.msra.mxu0 0.0
    %1266 = vmatprep.subr.mxu0 0.0
    %1267 = vmatpush1.msra.mxu0 0.0
    %1268 = vmatprep.subr.mxu0 0.0
    %1269 = vmatpush1.msra.mxu0 0.0
    %1270 = vmatprep.subr.mxu0 0.0
    %1271 = vmatpush1.msra.mxu0 0.0
    %1272 = vmatprep.subr.mxu0 0.0
    %1273 = vmatpush1.msra.mxu0 0.0
    %1274 = vmatprep.subr.mxu0 0.0
    %1275 = vmatpush1.msra.mxu0 0.0
    %1276 = vmatprep.mubr.f32.mxu0 0.0
    %1277 = vmatmul.mubr.f32.gmra.mrb[0].mxu0 %v1207
    %v1278 = vpop.f32.mrb[0].mxu0
    %v1279 = vadd.f32 0.0, %v1278
    %v1280 = vpop.f32.mrb[0].mxu0
    %1281 = vmatprep.mubr.f32.mxu0 0.0
    %1282 = vmatmul.mubr.f32.gmra.mrb[0].mxu0 %v1210
    %v1283 = vpop.f32.mrb[0].mxu0
    %v1284 = vadd.f32 0.0, %v1283
    %v1285 = vpop.f32.mrb[0].mxu0
    %1286 = vdwg.mxu0
    %v1287 = vadd.f32 %v1189, %v1279
    %v1288 = vadd.f32 %v1190, %v1284
    %v1289 = vld [vmem:[#allocation3 + $0x4] sm:$0xff]
    %v1290 = vld [vmem:[#allocation3 + $0xc] sm:$0xf]
    %s1291 = scalar_lea.vmem %s4, 384
    %v1292 = vld [vmem:[%s1291] sm:$0xff]
    %v1293 = vld [vmem:[%s1291 + $0x8] sm:$0xff]
    %v1294 = vld [vmem:[%s1291 + $0x10] sm:$0xff]
    %v1295 = vld [vmem:[%s1291 + $0x18] sm:$0xff]
    %v1296 = vld [vmem:[%s1291 + $0x20] sm:$0xff]
    %v1297 = vld [vmem:[%s1291 + $0x28] sm:$0xff]
    %v1298 = vld [vmem:[%s1291 + $0x30] sm:$0xff]
    %v1299 = vld [vmem:[%s1291 + $0x38] sm:$0xff]
    %v1300 = vld [vmem:[%s1291 + $0x40] sm:$0xff]
    %v1301 = vld [vmem:[%s1291 + $0x48] sm:$0xff]
    %v1302 = vld [vmem:[%s1291 + $0x50] sm:$0xff]
    %v1303 = vld [vmem:[%s1291 + $0x58] sm:$0xff]
    %v1305 = vsel %vm860, %v1289, 0
    %v1308 = vsel %vm860, %v1290, 0
    %1310 = vmatprep.subr.mxu0 0.0
    %1311 = vmatpush1.msra.mxu0 %v1292
    %1312 = vmatprep.subr.mxu0 0.0
    %1313 = vmatpush1.msra.mxu0 %v1293
    %1314 = vmatprep.subr.mxu0 0.0
    %1315 = vmatpush1.msra.mxu0 %v1294
    %1316 = vmatprep.subr.mxu0 0.0
    %1317 = vmatpush1.msra.mxu0 %v1295
    %1318 = vmatprep.subr.mxu0 0.0
    %1319 = vmatpush1.msra.mxu0 %v1296
    %1320 = vmatprep.subr.mxu0 0.0
    %1321 = vmatpush1.msra.mxu0 %v1297
    %1322 = vmatprep.subr.mxu0 0.0
    %1323 = vmatpush1.msra.mxu0 %v1298
    %1324 = vmatprep.subr.mxu0 0.0
    %1325 = vmatpush1.msra.mxu0 %v1299
    %1326 = vmatprep.subr.mxu0 0.0
    %1327 = vmatpush1.msra.mxu0 %v1300
    %1328 = vmatprep.subr.mxu0 0.0
    %1329 = vmatpush1.msra.mxu0 %v1301
    %1330 = vmatprep.subr.mxu0 0.0
    %1331 = vmatpush1.msra.mxu0 %v1302
    %1332 = vmatprep.subr.mxu0 0.0
    %1333 = vmatpush1.msra.mxu0 %v1303
    %1334 = vmatprep.subr.mxu0 0.0
    %1335 = vmatpush1.msra.mxu0 0.0
    %1336 = vmatprep.subr.mxu0 0.0
    %1337 = vmatpush1.msra.mxu0 0.0
    %1338 = vmatprep.subr.mxu0 0.0
    %1339 = vmatpush1.msra.mxu0 0.0
    %1340 = vmatprep.subr.mxu0 0.0
    %1341 = vmatpush1.msra.mxu0 0.0
    %1342 = vmatprep.subr.mxu0 0.0
    %1343 = vmatpush1.msra.mxu0 0.0
    %1344 = vmatprep.subr.mxu0 0.0
    %1345 = vmatpush1.msra.mxu0 0.0
    %1346 = vmatprep.subr.mxu0 0.0
    %1347 = vmatpush1.msra.mxu0 0.0
    %1348 = vmatprep.subr.mxu0 0.0
    %1349 = vmatpush1.msra.mxu0 0.0
    %1350 = vmatprep.subr.mxu0 0.0
    %1351 = vmatpush1.msra.mxu0 0.0
    %1352 = vmatprep.subr.mxu0 0.0
    %1353 = vmatpush1.msra.mxu0 0.0
    %1354 = vmatprep.subr.mxu0 0.0
    %1355 = vmatpush1.msra.mxu0 0.0
    %1356 = vmatprep.subr.mxu0 0.0
    %1357 = vmatpush1.msra.mxu0 0.0
    %1358 = vmatprep.subr.mxu0 0.0
    %1359 = vmatpush1.msra.mxu0 0.0
    %1360 = vmatprep.subr.mxu0 0.0
    %1361 = vmatpush1.msra.mxu0 0.0
    %1362 = vmatprep.subr.mxu0 0.0
    %1363 = vmatpush1.msra.mxu0 0.0
    %1364 = vmatprep.subr.mxu0 0.0
    %1365 = vmatpush1.msra.mxu0 0.0
    %1366 = vmatprep.subr.mxu0 0.0
    %1367 = vmatpush1.msra.mxu0 0.0
    %1368 = vmatprep.subr.mxu0 0.0
    %1369 = vmatpush1.msra.mxu0 0.0
    %1370 = vmatprep.subr.mxu0 0.0
    %1371 = vmatpush1.msra.mxu0 0.0
    %1372 = vmatprep.subr.mxu0 0.0
    %1373 = vmatpush1.msra.mxu0 0.0
    %1374 = vmatprep.mubr.f32.mxu0 0.0
    %1375 = vmatmul.mubr.f32.gmra.mrb[0].mxu0 %v1305
    %v1376 = vpop.f32.mrb[0].mxu0
    %v1377 = vadd.f32 0.0, %v1376
    %v1378 = vpop.f32.mrb[0].mxu0
    %1379 = vmatprep.mubr.f32.mxu0 0.0
    %1380 = vmatmul.mubr.f32.gmra.mrb[0].mxu0 %v1308
    %v1381 = vpop.f32.mrb[0].mxu0
    %v1382 = vadd.f32 0.0, %v1381
    %v1383 = vpop.f32.mrb[0].mxu0
    %1384 = vdwg.mxu0
    %v1385 = vadd.f32 %v1287, %v1377
    %v1386 = vadd.f32 %v1288, %v1382
    %v1387 = vld [vmem:[#allocation12] sm:$0x1]
    %v1389 = vlaneseq
    %v1390 = vshrl.u32 %v1389, 7
    %v1391 = vsub.s32 0, %v1390
    %v1392 = vrot.slane %v1387, %v1391
    %v1394 = vmul.f32 %v1385, %v1392
    %v1395 = vmul.f32 %v1386, %v1392
    %v1396 = vld [vmem:[#allocation14] sm:$0x1]
    %v1398 = vlaneseq
    %v1399 = vshrl.u32 %v1398, 7
    %v1400 = vsub.s32 0, %v1399
    %v1401 = vrot.slane %v1396, %v1400
    %v1403 = vadd.f32 %v1394, %v1401
    %v1404 = vadd.f32 %v1395, %v1401
    %v1405 = vmax.f32 %v1403, 0.0
    %v1406 = vmax.f32 %v1404, 0.0
    %1407 = vst [vmem:[#allocation4] sm:$0xff] 0.0
    %1408 = vst [vmem:[#allocation4 + $0x8] sm:$0xff] 0.0
    %1409 = vst [vmem:[#allocation4 + $0x2] sm:$0xf] %v1405
    %1410 = vst [vmem:[#allocation4 + $0xa] sm:$0xf] %v1406
    %v1411 = vld [vmem:[#allocation4] sm:$0xff]
    %v1412 = vld [vmem:[#allocation4 + $0x8] sm:$0xf]
    %v1413 = vld [vmem:[#allocation15] sm:$0xff]
    %v1414 = vld [vmem:[#allocation15 + $0x8] sm:$0xff]
    %v1415 = vld [vmem:[#allocation15 + $0x10] sm:$0xff]
    %v1416 = vld [vmem:[#allocation15 + $0x18] sm:$0xff]
    %v1417 = vld [vmem:[#allocation15 + $0x20] sm:$0xff]
    %v1418 = vld [vmem:[#allocation15 + $0x28] sm:$0xff]
    %v1419 = vld [vmem:[#allocation15 + $0x30] sm:$0xff]
    %v1420 = vld [vmem:[#allocation15 + $0x38] sm:$0xff]
    %v1421 = vld [vmem:[#allocation15 + $0x40] sm:$0xff]
    %v1422 = vld [vmem:[#allocation15 + $0x48] sm:$0xff]
    %v1423 = vld [vmem:[#allocation15 + $0x50] sm:$0xff]
    %v1424 = vld [vmem:[#allocation15 + $0x58] sm:$0xff]
    %v1425 = vld [vmem:[#allocation15 + $0x60] sm:$0xff]
    %v1426 = vld [vmem:[#allocation15 + $0x68] sm:$0xff]
    %v1427 = vld [vmem:[#allocation15 + $0x70] sm:$0xff]
    %v1428 = vld [vmem:[#allocation15 + $0x78] sm:$0xff]
    %v1429 = vld [vmem:[#allocation15 + $0x80] sm:$0xff]
    %v1430 = vld [vmem:[#allocation15 + $0x88] sm:$0xff]
    %v1431 = vld [vmem:[#allocation15 + $0x90] sm:$0xff]
    %v1432 = vld [vmem:[#allocation15 + $0x98] sm:$0xff]
    %v1433 = vld [vmem:[#allocation15 + $0xa0] sm:$0xff]
    %v1434 = vld [vmem:[#allocation15 + $0xa8] sm:$0xff]
    %v1435 = vld [vmem:[#allocation15 + $0xb0] sm:$0xff]
    %v1436 = vld [vmem:[#allocation15 + $0xb8] sm:$0xff]
    %v1437 = vld [vmem:[#allocation15 + $0xc0] sm:$0xff]
    %v1438 = vld [vmem:[#allocation15 + $0xc8] sm:$0xff]
    %v1439 = vld [vmem:[#allocation15 + $0xd0] sm:$0xff]
    %v1440 = vld [vmem:[#allocation15 + $0xd8] sm:$0xff]
    %v1441 = vld [vmem:[#allocation15 + $0xe0] sm:$0xff]
    %v1442 = vld [vmem:[#allocation15 + $0xe8] sm:$0xff]
    %v1443 = vld [vmem:[#allocation15 + $0xf0] sm:$0xff]
    %v1444 = vld [vmem:[#allocation15 + $0xf8] sm:$0xff]
    %v1445 = vld [vmem:[#allocation4 + $0x1] sm:$0xff]
    %v1446 = vld [vmem:[#allocation4 + $0x9] sm:$0xf]
    %s1447 = scalar_lea.vmem [#allocation15], 256
    %v1448 = vld [vmem:[%s1447] sm:$0xff]
    %v1449 = vld [vmem:[%s1447 + $0x8] sm:$0xff]
    %v1450 = vld [vmem:[%s1447 + $0x10] sm:$0xff]
    %v1451 = vld [vmem:[%s1447 + $0x18] sm:$0xff]
    %v1452 = vld [vmem:[%s1447 + $0x20] sm:$0xff]
    %v1453 = vld [vmem:[%s1447 + $0x28] sm:$0xff]
    %v1454 = vld [vmem:[%s1447 + $0x30] sm:$0xff]
    %v1455 = vld [vmem:[%s1447 + $0x38] sm:$0xff]
    %v1456 = vld [vmem:[%s1447 + $0x40] sm:$0xff]
    %v1457 = vld [vmem:[%s1447 + $0x48] sm:$0xff]
    %v1458 = vld [vmem:[%s1447 + $0x50] sm:$0xff]
    %v1459 = vld [vmem:[%s1447 + $0x58] sm:$0xff]
    %v1460 = vld [vmem:[%s1447 + $0x60] sm:$0xff]
    %v1461 = vld [vmem:[%s1447 + $0x68] sm:$0xff]
    %v1462 = vld [vmem:[%s1447 + $0x70] sm:$0xff]
    %v1463 = vld [vmem:[%s1447 + $0x78] sm:$0xff]
    %v1464 = vld [vmem:[%s1447 + $0x80] sm:$0xff]
    %v1465 = vld [vmem:[%s1447 + $0x88] sm:$0xff]
    %v1466 = vld [vmem:[%s1447 + $0x90] sm:$0xff]
    %v1467 = vld [vmem:[%s1447 + $0x98] sm:$0xff]
    %v1468 = vld [vmem:[%s1447 + $0xa0] sm:$0xff]
    %v1469 = vld [vmem:[%s1447 + $0xa8] sm:$0xff]
    %v1470 = vld [vmem:[%s1447 + $0xb0] sm:$0xff]
    %v1471 = vld [vmem:[%s1447 + $0xb8] sm:$0xff]
    %v1472 = vld [vmem:[%s1447 + $0xc0] sm:$0xff]
    %v1473 = vld [vmem:[%s1447 + $0xc8] sm:$0xff]
    %v1474 = vld [vmem:[%s1447 + $0xd0] sm:$0xff]
    %v1475 = vld [vmem:[%s1447 + $0xd8] sm:$0xff]
    %v1476 = vld [vmem:[%s1447 + $0xe0] sm:$0xff]
    %v1477 = vld [vmem:[%s1447 + $0xe8] sm:$0xff]
    %v1478 = vld [vmem:[%s1447 + $0xf0] sm:$0xff]
    %v1479 = vld [vmem:[%s1447 + $0xf8] sm:$0xff]
    %1480 = vmatprep.subr.mxu0 %v1449
    %1481 = vmatpush1.msra.mxu0 %v1448
    %1482 = vmatprep.subr.mxu0 %v1451
    %1483 = vmatpush1.msra.mxu0 %v1450
    %1484 = vmatprep.subr.mxu0 %v1453
    %1485 = vmatpush1.msra.mxu0 %v1452
    %1486 = vmatprep.subr.mxu0 %v1455
    %1487 = vmatpush1.msra.mxu0 %v1454
    %1488 = vmatprep.subr.mxu0 %v1457
    %1489 = vmatpush1.msra.mxu0 %v1456
    %1490 = vmatprep.subr.mxu0 %v1459
    %1491 = vmatpush1.msra.mxu0 %v1458
    %1492 = vmatprep.subr.mxu0 %v1461
    %1493 = vmatpush1.msra.mxu0 %v1460
    %1494 = vmatprep.subr.mxu0 %v1463
    %1495 = vmatpush1.msra.mxu0 %v1462
    %1496 = vmatprep.subr.mxu0 %v1465
    %1497 = vmatpush1.msra.mxu0 %v1464
    %1498 = vmatprep.subr.mxu0 %v1467
    %1499 = vmatpush1.msra.mxu0 %v1466
    %1500 = vmatprep.subr.mxu0 %v1469
    %1501 = vmatpush1.msra.mxu0 %v1468
    %1502 = vmatprep.subr.mxu0 %v1471
    %1503 = vmatpush1.msra.mxu0 %v1470
    %1504 = vmatprep.subr.mxu0 %v1473
    %1505 = vmatpush1.msra.mxu0 %v1472
    %1506 = vmatprep.subr.mxu0 %v1475
    %1507 = vmatpush1.msra.mxu0 %v1474
    %1508 = vmatprep.subr.mxu0 %v1477
    %1509 = vmatpush1.msra.mxu0 %v1476
    %1510 = vmatprep.subr.mxu0 %v1479
    %1511 = vmatpush1.msra.mxu0 %v1478
    %1512 = vmatprep.subr.mxu0 0.0
    %1513 = vmatpush1.msra.mxu0 0.0
    %1514 = vmatprep.subr.mxu0 0.0
    %1515 = vmatpush1.msra.mxu0 0.0
    %1516 = vmatprep.subr.mxu0 0.0
    %1517 = vmatpush1.msra.mxu0 0.0
    %1518 = vmatprep.subr.mxu0 0.0
    %1519 = vmatpush1.msra.mxu0 0.0
    %1520 = vmatprep.subr.mxu0 0.0
    %1521 = vmatpush1.msra.mxu0 0.0
    %1522 = vmatprep.subr.mxu0 0.0
    %1523 = vmatpush1.msra.mxu0 0.0
    %1524 = vmatprep.subr.mxu0 0.0
    %1525 = vmatpush1.msra.mxu0 0.0
    %1526 = vmatprep.subr.mxu0 0.0
    %1527 = vmatpush1.msra.mxu0 0.0
    %1528 = vmatprep.subr.mxu0 0.0
    %1529 = vmatpush1.msra.mxu0 0.0
    %1530 = vmatprep.subr.mxu0 0.0
    %1531 = vmatpush1.msra.mxu0 0.0
    %1532 = vmatprep.subr.mxu0 0.0
    %1533 = vmatpush1.msra.mxu0 0.0
    %1534 = vmatprep.subr.mxu0 0.0
    %1535 = vmatpush1.msra.mxu0 0.0
    %1536 = vmatprep.subr.mxu0 0.0
    %1537 = vmatpush1.msra.mxu0 0.0
    %1538 = vmatprep.subr.mxu0 0.0
    %1539 = vmatpush1.msra.mxu0 0.0
    %1540 = vmatprep.subr.mxu0 0.0
    %1541 = vmatpush1.msra.mxu0 0.0
    %1542 = vmatprep.subr.mxu0 0.0
    %1543 = vmatpush1.msra.mxu0 0.0
    %1544 = vmatprep.mubr.f32.mxu0 0.0
    %1545 = vmatmul.mubr.f32.gmra.mrb[0].mxu0 %v1445
    %v1546 = vpop.f32.mrb[0].mxu0
    %v1547 = vadd.f32 0.0, %v1546
    %v1548 = vpop.f32.mrb[0].mxu0
    %v1549 = vadd.f32 0.0, %v1548
    %1550 = vmatprep.mubr.f32.mxu0 0.0
    %1551 = vmatmul.mubr.f32.gmra.mrb[0].mxu0 %v1446
    %v1552 = vpop.f32.mrb[0].mxu0
    %v1553 = vadd.f32 0.0, %v1552
    %v1554 = vpop.f32.mrb[0].mxu0
    %v1555 = vadd.f32 0.0, %v1554
    %1556 = vdwg.mxu0
    %1557 = vmatprep.subr.mxu0 %v1414
    %1558 = vmatpush1.msra.mxu0 %v1413
    %1559 = vmatprep.subr.mxu0 %v1416
    %1560 = vmatpush1.msra.mxu0 %v1415
    %1561 = vmatprep.subr.mxu0 %v1418
    %1562 = vmatpush1.msra.mxu0 %v1417
    %1563 = vmatprep.subr.mxu0 %v1420
    %1564 = vmatpush1.msra.mxu0 %v1419
    %1565 = vmatprep.subr.mxu0 %v1422
    %1566 = vmatpush1.msra.mxu0 %v1421
    %1567 = vmatprep.subr.mxu0 %v1424
    %1568 = vmatpush1.msra.mxu0 %v1423
    %1569 = vmatprep.subr.mxu0 %v1426
    %1570 = vmatpush1.msra.mxu0 %v1425
    %1571 = vmatprep.subr.mxu0 %v1428
    %1572 = vmatpush1.msra.mxu0 %v1427
    %1573 = vmatprep.subr.mxu0 %v1430
    %1574 = vmatpush1.msra.mxu0 %v1429
    %1575 = vmatprep.subr.mxu0 %v1432
    %1576 = vmatpush1.msra.mxu0 %v1431
    %1577 = vmatprep.subr.mxu0 %v1434
    %1578 = vmatpush1.msra.mxu0 %v1433
    %1579 = vmatprep.subr.mxu0 %v1436
    %1580 = vmatpush1.msra.mxu0 %v1435
    %1581 = vmatprep.subr.mxu0 %v1438
    %1582 = vmatpush1.msra.mxu0 %v1437
    %1583 = vmatprep.subr.mxu0 %v1440
    %1584 = vmatpush1.msra.mxu0 %v1439
    %1585 = vmatprep.subr.mxu0 %v1442
    %1586 = vmatpush1.msra.mxu0 %v1441
    %1587 = vmatprep.subr.mxu0 %v1444
    %1588 = vmatpush1.msra.mxu0 %v1443
    %1589 = vmatprep.subr.mxu0 0.0
    %1590 = vmatpush1.msra.mxu0 0.0
    %1591 = vmatprep.subr.mxu0 0.0
    %1592 = vmatpush1.msra.mxu0 0.0
    %1593 = vmatprep.subr.mxu0 0.0
    %1594 = vmatpush1.msra.mxu0 0.0
    %1595 = vmatprep.subr.mxu0 0.0
    %1596 = vmatpush1.msra.mxu0 0.0
    %1597 = vmatprep.subr.mxu0 0.0
    %1598 = vmatpush1.msra.mxu0 0.0
    %1599 = vmatprep.subr.mxu0 0.0
    %1600 = vmatpush1.msra.mxu0 0.0
    %1601 = vmatprep.subr.mxu0 0.0
    %1602 = vmatpush1.msra.mxu0 0.0
    %1603 = vmatprep.subr.mxu0 0.0
    %1604 = vmatpush1.msra.mxu0 0.0
    %1605 = vmatprep.subr.mxu0 0.0
    %1606 = vmatpush1.msra.mxu0 0.0
    %1607 = vmatprep.subr.mxu0 0.0
    %1608 = vmatpush1.msra.mxu0 0.0
    %1609 = vmatprep.subr.mxu0 0.0
    %1610 = vmatpush1.msra.mxu0 0.0
    %1611 = vmatprep.subr.mxu0 0.0
    %1612 = vmatpush1.msra.mxu0 0.0
    %1613 = vmatprep.subr.mxu0 0.0
    %1614 = vmatpush1.msra.mxu0 0.0
    %1615 = vmatprep.subr.mxu0 0.0
    %1616 = vmatpush1.msra.mxu0 0.0
    %1617 = vmatprep.subr.mxu0 0.0
    %1618 = vmatpush1.msra.mxu0 0.0
    %1619 = vmatprep.subr.mxu0 0.0
    %1620 = vmatpush1.msra.mxu0 0.0
    %1621 = vmatprep.mubr.f32.mxu0 0.0
    %1622 = vmatmul.mubr.f32.gmra.mrb[0].mxu0 %v1411
    %v1623 = vpop.f32.mrb[0].mxu0
    %v1624 = vadd.f32 %v1547, %v1623
    %v1625 = vpop.f32.mrb[0].mxu0
    %v1626 = vadd.f32 %v1549, %v1625
    %1627 = vmatprep.mubr.f32.mxu0 0.0
    %1628 = vmatmul.mubr.f32.gmra.mrb[0].mxu0 %v1412
    %v1629 = vpop.f32.mrb[0].mxu0
    %v1630 = vadd.f32 %v1553, %v1629
    %v1631 = vpop.f32.mrb[0].mxu0
    %v1632 = vadd.f32 %v1555, %v1631
    %1633 = vdwg.mxu0
    %v1634 = vld [vmem:[#allocation4 + $0x2] sm:$0xff]
    %v1635 = vld [vmem:[#allocation4 + $0xa] sm:$0xf]
    %s1636 = scalar_lea.vmem [#allocation15], 512
    %v1637 = vld [vmem:[%s1636] sm:$0xff]
    %v1638 = vld [vmem:[%s1636 + $0x8] sm:$0xff]
    %v1639 = vld [vmem:[%s1636 + $0x10] sm:$0xff]
    %v1640 = vld [vmem:[%s1636 + $0x18] sm:$0xff]
    %v1641 = vld [vmem:[%s1636 + $0x20] sm:$0xff]
    %v1642 = vld [vmem:[%s1636 + $0x28] sm:$0xff]
    %v1643 = vld [vmem:[%s1636 + $0x30] sm:$0xff]
    %v1644 = vld [vmem:[%s1636 + $0x38] sm:$0xff]
    %v1645 = vld [vmem:[%s1636 + $0x40] sm:$0xff]
    %v1646 = vld [vmem:[%s1636 + $0x48] sm:$0xff]
    %v1647 = vld [vmem:[%s1636 + $0x50] sm:$0xff]
    %v1648 = vld [vmem:[%s1636 + $0x58] sm:$0xff]
    %v1649 = vld [vmem:[%s1636 + $0x60] sm:$0xff]
    %v1650 = vld [vmem:[%s1636 + $0x68] sm:$0xff]
    %v1651 = vld [vmem:[%s1636 + $0x70] sm:$0xff]
    %v1652 = vld [vmem:[%s1636 + $0x78] sm:$0xff]
    %v1653 = vld [vmem:[%s1636 + $0x80] sm:$0xff]
    %v1654 = vld [vmem:[%s1636 + $0x88] sm:$0xff]
    %v1655 = vld [vmem:[%s1636 + $0x90] sm:$0xff]
    %v1656 = vld [vmem:[%s1636 + $0x98] sm:$0xff]
    %v1657 = vld [vmem:[%s1636 + $0xa0] sm:$0xff]
    %v1658 = vld [vmem:[%s1636 + $0xa8] sm:$0xff]
    %v1659 = vld [vmem:[%s1636 + $0xb0] sm:$0xff]
    %v1660 = vld [vmem:[%s1636 + $0xb8] sm:$0xff]
    %v1661 = vld [vmem:[%s1636 + $0xc0] sm:$0xff]
    %v1662 = vld [vmem:[%s1636 + $0xc8] sm:$0xff]
    %v1663 = vld [vmem:[%s1636 + $0xd0] sm:$0xff]
    %v1664 = vld [vmem:[%s1636 + $0xd8] sm:$0xff]
    %v1665 = vld [vmem:[%s1636 + $0xe0] sm:$0xff]
    %v1666 = vld [vmem:[%s1636 + $0xe8] sm:$0xff]
    %v1667 = vld [vmem:[%s1636 + $0xf0] sm:$0xff]
    %v1668 = vld [vmem:[%s1636 + $0xf8] sm:$0xff]
    %1669 = vmatprep.subr.mxu0 %v1638
    %1670 = vmatpush1.msra.mxu0 %v1637
    %1671 = vmatprep.subr.mxu0 %v1640
    %1672 = vmatpush1.msra.mxu0 %v1639
    %1673 = vmatprep.subr.mxu0 %v1642
    %1674 = vmatpush1.msra.mxu0 %v1641
    %1675 = vmatprep.subr.mxu0 %v1644
    %1676 = vmatpush1.msra.mxu0 %v1643
    %1677 = vmatprep.subr.mxu0 %v1646
    %1678 = vmatpush1.msra.mxu0 %v1645
    %1679 = vmatprep.subr.mxu0 %v1648
    %1680 = vmatpush1.msra.mxu0 %v1647
    %1681 = vmatprep.subr.mxu0 %v1650
    %1682 = vmatpush1.msra.mxu0 %v1649
    %1683 = vmatprep.subr.mxu0 %v1652
    %1684 = vmatpush1.msra.mxu0 %v1651
    %1685 = vmatprep.subr.mxu0 %v1654
    %1686 = vmatpush1.msra.mxu0 %v1653
    %1687 = vmatprep.subr.mxu0 %v1656
    %1688 = vmatpush1.msra.mxu0 %v1655
    %1689 = vmatprep.subr.mxu0 %v1658
    %1690 = vmatpush1.msra.mxu0 %v1657
    %1691 = vmatprep.subr.mxu0 %v1660
    %1692 = vmatpush1.msra.mxu0 %v1659
    %1693 = vmatprep.subr.mxu0 %v1662
    %1694 = vmatpush1.msra.mxu0 %v1661
    %1695 = vmatprep.subr.mxu0 %v1664
    %1696 = vmatpush1.msra.mxu0 %v1663
    %1697 = vmatprep.subr.mxu0 %v1666
    %1698 = vmatpush1.msra.mxu0 %v1665
    %1699 = vmatprep.subr.mxu0 %v1668
    %1700 = vmatpush1.msra.mxu0 %v1667
    %1701 = vmatprep.subr.mxu0 0.0
    %1702 = vmatpush1.msra.mxu0 0.0
    %1703 = vmatprep.subr.mxu0 0.0
    %1704 = vmatpush1.msra.mxu0 0.0
    %1705 = vmatprep.subr.mxu0 0.0
    %1706 = vmatpush1.msra.mxu0 0.0
    %1707 = vmatprep.subr.mxu0 0.0
    %1708 = vmatpush1.msra.mxu0 0.0
    %1709 = vmatprep.subr.mxu0 0.0
    %1710 = vmatpush1.msra.mxu0 0.0
    %1711 = vmatprep.subr.mxu0 0.0
    %1712 = vmatpush1.msra.mxu0 0.0
    %1713 = vmatprep.subr.mxu0 0.0
    %1714 = vmatpush1.msra.mxu0 0.0
    %1715 = vmatprep.subr.mxu0 0.0
    %1716 = vmatpush1.msra.mxu0 0.0
    %1717 = vmatprep.subr.mxu0 0.0
    %1718 = vmatpush1.msra.mxu0 0.0
    %1719 = vmatprep.subr.mxu0 0.0
    %1720 = vmatpush1.msra.mxu0 0.0
    %1721 = vmatprep.subr.mxu0 0.0
    %1722 = vmatpush1.msra.mxu0 0.0
    %1723 = vmatprep.subr.mxu0 0.0
    %1724 = vmatpush1.msra.mxu0 0.0
    %1725 = vmatprep.subr.mxu0 0.0
    %1726 = vmatpush1.msra.mxu0 0.0
    %1727 = vmatprep.subr.mxu0 0.0
    %1728 = vmatpush1.msra.mxu0 0.0
    %1729 = vmatprep.subr.mxu0 0.0
    %1730 = vmatpush1.msra.mxu0 0.0
    %1731 = vmatprep.subr.mxu0 0.0
    %1732 = vmatpush1.msra.mxu0 0.0
    %1733 = vmatprep.mubr.f32.mxu0 0.0
    %1734 = vmatmul.mubr.f32.gmra.mrb[0].mxu0 %v1634
    %v1735 = vpop.f32.mrb[0].mxu0
    %v1736 = vadd.f32 0.0, %v1735
    %v1737 = vpop.f32.mrb[0].mxu0
    %v1738 = vadd.f32 0.0, %v1737
    %1739 = vmatprep.mubr.f32.mxu0 0.0
    %1740 = vmatmul.mubr.f32.gmra.mrb[0].mxu0 %v1635
    %v1741 = vpop.f32.mrb[0].mxu0
    %v1742 = vadd.f32 0.0, %v1741
    %v1743 = vpop.f32.mrb[0].mxu0
    %v1744 = vadd.f32 0.0, %v1743
    %1745 = vdwg.mxu0
    %v1746 = vadd.f32 %v1624, %v1736
    %v1747 = vadd.f32 %v1626, %v1738
    %v1748 = vadd.f32 %v1630, %v1742
    %v1749 = vadd.f32 %v1632, %v1744
    %v1750 = vld [vmem:[#allocation4 + $0x3] sm:$0xff]
    %v1751 = vld [vmem:[#allocation4 + $0xb] sm:$0xf]
    %s1752 = scalar_lea.vmem [#allocation15], 768
    %v1753 = vld [vmem:[%s1752] sm:$0xff]
    %v1754 = vld [vmem:[%s1752 + $0x8] sm:$0xff]
    %v1755 = vld [vmem:[%s1752 + $0x10] sm:$0xff]
    %v1756 = vld [vmem:[%s1752 + $0x18] sm:$0xff]
    %v1757 = vld [vmem:[%s1752 + $0x20] sm:$0xff]
    %v1758 = vld [vmem:[%s1752 + $0x28] sm:$0xff]
    %v1759 = vld [vmem:[%s1752 + $0x30] sm:$0xff]
    %v1760 = vld [vmem:[%s1752 + $0x38] sm:$0xff]
    %v1761 = vld [vmem:[%s1752 + $0x40] sm:$0xff]
    %v1762 = vld [vmem:[%s1752 + $0x48] sm:$0xff]
    %v1763 = vld [vmem:[%s1752 + $0x50] sm:$0xff]
    %v1764 = vld [vmem:[%s1752 + $0x58] sm:$0xff]
    %v1765 = vld [vmem:[%s1752 + $0x60] sm:$0xff]
    %v1766 = vld [vmem:[%s1752 + $0x68] sm:$0xff]
    %v1767 = vld [vmem:[%s1752 + $0x70] sm:$0xff]
    %v1768 = vld [vmem:[%s1752 + $0x78] sm:$0xff]
    %v1769 = vld [vmem:[%s1752 + $0x80] sm:$0xff]
    %v1770 = vld [vmem:[%s1752 + $0x88] sm:$0xff]
    %v1771 = vld [vmem:[%s1752 + $0x90] sm:$0xff]
    %v1772 = vld [vmem:[%s1752 + $0x98] sm:$0xff]
    %v1773 = vld [vmem:[%s1752 + $0xa0] sm:$0xff]
    %v1774 = vld [vmem:[%s1752 + $0xa8] sm:$0xff]
    %v1775 = vld [vmem:[%s1752 + $0xb0] sm:$0xff]
    %v1776 = vld [vmem:[%s1752 + $0xb8] sm:$0xff]
    %v1777 = vld [vmem:[%s1752 + $0xc0] sm:$0xff]
    %v1778 = vld [vmem:[%s1752 + $0xc8] sm:$0xff]
    %v1779 = vld [vmem:[%s1752 + $0xd0] sm:$0xff]
    %v1780 = vld [vmem:[%s1752 + $0xd8] sm:$0xff]
    %v1781 = vld [vmem:[%s1752 + $0xe0] sm:$0xff]
    %v1782 = vld [vmem:[%s1752 + $0xe8] sm:$0xff]
    %v1783 = vld [vmem:[%s1752 + $0xf0] sm:$0xff]
    %v1784 = vld [vmem:[%s1752 + $0xf8] sm:$0xff]
    %1785 = vmatprep.subr.mxu0 %v1754
    %1786 = vmatpush1.msra.mxu0 %v1753
    %1787 = vmatprep.subr.mxu0 %v1756
    %1788 = vmatpush1.msra.mxu0 %v1755
    %1789 = vmatprep.subr.mxu0 %v1758
    %1790 = vmatpush1.msra.mxu0 %v1757
    %1791 = vmatprep.subr.mxu0 %v1760
    %1792 = vmatpush1.msra.mxu0 %v1759
    %1793 = vmatprep.subr.mxu0 %v1762
    %1794 = vmatpush1.msra.mxu0 %v1761
    %1795 = vmatprep.subr.mxu0 %v1764
    %1796 = vmatpush1.msra.mxu0 %v1763
    %1797 = vmatprep.subr.mxu0 %v1766
    %1798 = vmatpush1.msra.mxu0 %v1765
    %1799 = vmatprep.subr.mxu0 %v1768
    %1800 = vmatpush1.msra.mxu0 %v1767
    %1801 = vmatprep.subr.mxu0 %v1770
    %1802 = vmatpush1.msra.mxu0 %v1769
    %1803 = vmatprep.subr.mxu0 %v1772
    %1804 = vmatpush1.msra.mxu0 %v1771
    %1805 = vmatprep.subr.mxu0 %v1774
    %1806 = vmatpush1.msra.mxu0 %v1773
    %1807 = vmatprep.subr.mxu0 %v1776
    %1808 = vmatpush1.msra.mxu0 %v1775
    %1809 = vmatprep.subr.mxu0 %v1778
    %1810 = vmatpush1.msra.mxu0 %v1777
    %1811 = vmatprep.subr.mxu0 %v1780
    %1812 = vmatpush1.msra.mxu0 %v1779
    %1813 = vmatprep.subr.mxu0 %v1782
    %1814 = vmatpush1.msra.mxu0 %v1781
    %1815 = vmatprep.subr.mxu0 %v1784
    %1816 = vmatpush1.msra.mxu0 %v1783
    %1817 = vmatprep.subr.mxu0 0.0
    %1818 = vmatpush1.msra.mxu0 0.0
    %1819 = vmatprep.subr.mxu0 0.0
    %1820 = vmatpush1.msra.mxu0 0.0
    %1821 = vmatprep.subr.mxu0 0.0
    %1822 = vmatpush1.msra.mxu0 0.0
    %1823 = vmatprep.subr.mxu0 0.0
    %1824 = vmatpush1.msra.mxu0 0.0
    %1825 = vmatprep.subr.mxu0 0.0
    %1826 = vmatpush1.msra.mxu0 0.0
    %1827 = vmatprep.subr.mxu0 0.0
    %1828 = vmatpush1.msra.mxu0 0.0
    %1829 = vmatprep.subr.mxu0 0.0
    %1830 = vmatpush1.msra.mxu0 0.0
    %1831 = vmatprep.subr.mxu0 0.0
    %1832 = vmatpush1.msra.mxu0 0.0
    %1833 = vmatprep.subr.mxu0 0.0
    %1834 = vmatpush1.msra.mxu0 0.0
    %1835 = vmatprep.subr.mxu0 0.0
    %1836 = vmatpush1.msra.mxu0 0.0
    %1837 = vmatprep.subr.mxu0 0.0
    %1838 = vmatpush1.msra.mxu0 0.0
    %1839 = vmatprep.subr.mxu0 0.0
    %1840 = vmatpush1.msra.mxu0 0.0
    %1841 = vmatprep.subr.mxu0 0.0
    %1842 = vmatpush1.msra.mxu0 0.0
    %1843 = vmatprep.subr.mxu0 0.0
    %1844 = vmatpush1.msra.mxu0 0.0
    %1845 = vmatprep.subr.mxu0 0.0
    %1846 = vmatpush1.msra.mxu0 0.0
    %1847 = vmatprep.subr.mxu0 0.0
    %1848 = vmatpush1.msra.mxu0 0.0
    %1849 = vmatprep.mubr.f32.mxu0 0.0
    %1850 = vmatmul.mubr.f32.gmra.mrb[0].mxu0 %v1750
    %v1851 = vpop.f32.mrb[0].mxu0
    %v1852 = vadd.f32 0.0, %v1851
    %v1853 = vpop.f32.mrb[0].mxu0
    %v1854 = vadd.f32 0.0, %v1853
    %1855 = vmatprep.mubr.f32.mxu0 0.0
    %1856 = vmatmul.mubr.f32.gmra.mrb[0].mxu0 %v1751
    %v1857 = vpop.f32.mrb[0].mxu0
    %v1858 = vadd.f32 0.0, %v1857
    %v1859 = vpop.f32.mrb[0].mxu0
    %v1860 = vadd.f32 0.0, %v1859
    %1861 = vdwg.mxu0
    %v1862 = vadd.f32 %v1746, %v1852
    %v1863 = vadd.f32 %v1747, %v1854
    %v1864 = vadd.f32 %v1748, %v1858
    %v1865 = vadd.f32 %v1749, %v1860
    %v1866 = vld [vmem:[#allocation4 + $0x4] sm:$0xff]
    %v1867 = vld [vmem:[#allocation4 + $0xc] sm:$0xf]
    %s1868 = scalar_lea.vmem [#allocation15], 1024
    %v1869 = vld [vmem:[%s1868] sm:$0xff]
    %v1870 = vld [vmem:[%s1868 + $0x8] sm:$0xff]
    %v1871 = vld [vmem:[%s1868 + $0x10] sm:$0xff]
    %v1872 = vld [vmem:[%s1868 + $0x18] sm:$0xff]
    %v1873 = vld [vmem:[%s1868 + $0x20] sm:$0xff]
    %v1874 = vld [vmem:[%s1868 + $0x28] sm:$0xff]
    %v1875 = vld [vmem:[%s1868 + $0x30] sm:$0xff]
    %v1876 = vld [vmem:[%s1868 + $0x38] sm:$0xff]
    %v1877 = vld [vmem:[%s1868 + $0x40] sm:$0xff]
    %v1878 = vld [vmem:[%s1868 + $0x48] sm:$0xff]
    %v1879 = vld [vmem:[%s1868 + $0x50] sm:$0xff]
    %v1880 = vld [vmem:[%s1868 + $0x58] sm:$0xff]
    %v1881 = vld [vmem:[%s1868 + $0x60] sm:$0xff]
    %v1882 = vld [vmem:[%s1868 + $0x68] sm:$0xff]
    %v1883 = vld [vmem:[%s1868 + $0x70] sm:$0xff]
    %v1884 = vld [vmem:[%s1868 + $0x78] sm:$0xff]
    %v1885 = vld [vmem:[%s1868 + $0x80] sm:$0xff]
    %v1886 = vld [vmem:[%s1868 + $0x88] sm:$0xff]
    %v1887 = vld [vmem:[%s1868 + $0x90] sm:$0xff]
    %v1888 = vld [vmem:[%s1868 + $0x98] sm:$0xff]
    %v1889 = vld [vmem:[%s1868 + $0xa0] sm:$0xff]
    %v1890 = vld [vmem:[%s1868 + $0xa8] sm:$0xff]
    %v1891 = vld [vmem:[%s1868 + $0xb0] sm:$0xff]
    %v1892 = vld [vmem:[%s1868 + $0xb8] sm:$0xff]
    %v1893 = vld [vmem:[%s1868 + $0xc0] sm:$0xff]
    %v1894 = vld [vmem:[%s1868 + $0xc8] sm:$0xff]
    %v1895 = vld [vmem:[%s1868 + $0xd0] sm:$0xff]
    %v1896 = vld [vmem:[%s1868 + $0xd8] sm:$0xff]
    %v1897 = vld [vmem:[%s1868 + $0xe0] sm:$0xff]
    %v1898 = vld [vmem:[%s1868 + $0xe8] sm:$0xff]
    %v1899 = vld [vmem:[%s1868 + $0xf0] sm:$0xff]
    %v1900 = vld [vmem:[%s1868 + $0xf8] sm:$0xff]
    %1901 = vmatprep.subr.mxu0 %v1870
    %1902 = vmatpush1.msra.mxu0 %v1869
    %1903 = vmatprep.subr.mxu0 %v1872
    %1904 = vmatpush1.msra.mxu0 %v1871
    %1905 = vmatprep.subr.mxu0 %v1874
    %1906 = vmatpush1.msra.mxu0 %v1873
    %1907 = vmatprep.subr.mxu0 %v1876
    %1908 = vmatpush1.msra.mxu0 %v1875
    %1909 = vmatprep.subr.mxu0 %v1878
    %1910 = vmatpush1.msra.mxu0 %v1877
    %1911 = vmatprep.subr.mxu0 %v1880
    %1912 = vmatpush1.msra.mxu0 %v1879
    %1913 = vmatprep.subr.mxu0 %v1882
    %1914 = vmatpush1.msra.mxu0 %v1881
    %1915 = vmatprep.subr.mxu0 %v1884
    %1916 = vmatpush1.msra.mxu0 %v1883
    %1917 = vmatprep.subr.mxu0 %v1886
    %1918 = vmatpush1.msra.mxu0 %v1885
    %1919 = vmatprep.subr.mxu0 %v1888
    %1920 = vmatpush1.msra.mxu0 %v1887
    %1921 = vmatprep.subr.mxu0 %v1890
    %1922 = vmatpush1.msra.mxu0 %v1889
    %1923 = vmatprep.subr.mxu0 %v1892
    %1924 = vmatpush1.msra.mxu0 %v1891
    %1925 = vmatprep.subr.mxu0 %v1894
    %1926 = vmatpush1.msra.mxu0 %v1893
    %1927 = vmatprep.subr.mxu0 %v1896
    %1928 = vmatpush1.msra.mxu0 %v1895
    %1929 = vmatprep.subr.mxu0 %v1898
    %1930 = vmatpush1.msra.mxu0 %v1897
    %1931 = vmatprep.subr.mxu0 %v1900
    %1932 = vmatpush1.msra.mxu0 %v1899
    %1933 = vmatprep.subr.mxu0 0.0
    %1934 = vmatpush1.msra.mxu0 0.0
    %1935 = vmatprep.subr.mxu0 0.0
    %1936 = vmatpush1.msra.mxu0 0.0
    %1937 = vmatprep.subr.mxu0 0.0
    %1938 = vmatpush1.msra.mxu0 0.0
    %1939 = vmatprep.subr.mxu0 0.0
    %1940 = vmatpush1.msra.mxu0 0.0
    %1941 = vmatprep.subr.mxu0 0.0
    %1942 = vmatpush1.msra.mxu0 0.0
    %1943 = vmatprep.subr.mxu0 0.0
    %1944 = vmatpush1.msra.mxu0 0.0
    %1945 = vmatprep.subr.mxu0 0.0
    %1946 = vmatpush1.msra.mxu0 0.0
    %1947 = vmatprep.subr.mxu0 0.0
    %1948 = vmatpush1.msra.mxu0 0.0
    %1949 = vmatprep.subr.mxu0 0.0
    %1950 = vmatpush1.msra.mxu0 0.0
    %1951 = vmatprep.subr.mxu0 0.0
    %1952 = vmatpush1.msra.mxu0 0.0
    %1953 = vmatprep.subr.mxu0 0.0
    %1954 = vmatpush1.msra.mxu0 0.0
    %1955 = vmatprep.subr.mxu0 0.0
    %1956 = vmatpush1.msra.mxu0 0.0
    %1957 = vmatprep.subr.mxu0 0.0
    %1958 = vmatpush1.msra.mxu0 0.0
    %1959 = vmatprep.subr.mxu0 0.0
    %1960 = vmatpush1.msra.mxu0 0.0
    %1961 = vmatprep.subr.mxu0 0.0
    %1962 = vmatpush1.msra.mxu0 0.0
    %1963 = vmatprep.subr.mxu0 0.0
    %1964 = vmatpush1.msra.mxu0 0.0
    %1965 = vmatprep.mubr.f32.mxu0 0.0
    %1966 = vmatmul.mubr.f32.gmra.mrb[0].mxu0 %v1866
    %v1967 = vpop.f32.mrb[0].mxu0
    %v1968 = vadd.f32 0.0, %v1967
    %v1969 = vpop.f32.mrb[0].mxu0
    %v1970 = vadd.f32 0.0, %v1969
    %1971 = vmatprep.mubr.f32.mxu0 0.0
    %1972 = vmatmul.mubr.f32.gmra.mrb[0].mxu0 %v1867
    %v1973 = vpop.f32.mrb[0].mxu0
    %v1974 = vadd.f32 0.0, %v1973
    %v1975 = vpop.f32.mrb[0].mxu0
    %v1976 = vadd.f32 0.0, %v1975
    %1977 = vdwg.mxu0
    %v1978 = vadd.f32 %v1862, %v1968
    %v1979 = vadd.f32 %v1863, %v1970
    %v1980 = vadd.f32 %v1864, %v1974
    %v1981 = vadd.f32 %v1865, %v1976
    %v1982 = vld [vmem:[#allocation17] sm:$0x3]
    %v1984 = vlaneseq
    %v1985 = vshrl.u32 %v1984, 7
    %v1986 = vsub.s32 0, %v1985
    %v1987 = vrot.slane %v1982, %v1986
    %v1988 = vlaneseq
    %v1989 = vshrl.u32 %v1988, 7
    %v1990 = vsub.s32 1, %v1989
    %v1991 = vrot.slane %v1982, %v1990
    %v1994 = vmul.f32 %v1978, %v1987
    %v1995 = vmul.f32 %v1979, %v1991
    %v1996 = vmul.f32 %v1980, %v1987
    %v1997 = vmul.f32 %v1981, %v1991
    %v1998 = vld [vmem:[#allocation18] sm:$0x3]
    %v2000 = vlaneseq
    %v2001 = vshrl.u32 %v2000, 7
    %v2002 = vsub.s32 0, %v2001
    %v2003 = vrot.slane %v1998, %v2002
    %v2004 = vlaneseq
    %v2005 = vshrl.u32 %v2004, 7
    %v2006 = vsub.s32 1, %v2005
    %v2007 = vrot.slane %v1998, %v2006
    %v2010 = vadd.f32 %v1994, %v2003
    %v2011 = vadd.f32 %v1995, %v2007
    %v2012 = vadd.f32 %v1996, %v2003
    %v2013 = vadd.f32 %v1997, %v2007
    %v2014 = vmax.f32 %v2010, 0.0
    %v2015 = vmax.f32 %v2011, 0.0
    %v2016 = vmax.f32 %v2012, 0.0
    %v2017 = vmax.f32 %v2013, 0.0
    %2018 = vst [vmem:[%s22] sm:$0xf] %v2014
    %2019 = vst [vmem:[%s22 + $0x8] sm:$0xf] %v2015
    %v2022 = vcombine.low %v2014, %v2015
    %v2024 = vunpack.c.l.s4 1966171168
    %v2025 = vunpack.c.0.s8 %v2024
    %v2026 = vlaneseq
    %v2027 = vshrl.u32 %v2026, 7
    %v2028 = vsub.s32 %v2025, %v2027
    %v2029 = vrot.slane %v2022, %v2028
    %v2031 = vunpack.c.l.s4 1966171168
    %v2032 = vunpack.c.0.s8 %v2031
    %v2033 = vlaneseq
    %v2034 = vshrl.u32 %v2033, 7
    %v2035 = vsub.s32 %v2032, %v2034
    %v2036 = vrot.slane %v2029, %v2035
    %v2038 = vlaneseq
    %vm2039 = vcmp.ge.s32.totalorder %v2038, 0
    %vm2040 = vcmp.lt.s32.totalorder %v2038, 256
    %vm2041 = vmand %vm2039, %vm2040
    %2042 = vst.msk [vmem:[#allocation5] ss:$2 sm:$0x3] %vm2041, %v2036
    %v2043 = vcombine.high %v2029, %v2029
    %v2045 = vunpack.c.l.s4 1966171168
    %v2046 = vunpack.c.0.s8 %v2045
    %v2047 = vlaneseq
    %v2048 = vshrl.u32 %v2047, 7
    %v2049 = vsub.s32 %v2046, %v2048
    %v2050 = vrot.slane %v2043, %v2049
    %s2052 = scalar_lea.vmem [#allocation5], 4
    %2053 = vst.msk [vmem:[%s2052] ss:$2 sm:$0x3] %vm2041, %v2050
    %v2054 = vcombine.high %v2036, %v2036
    %s2056 = scalar_lea.vmem [#allocation5], 8
    %2057 = vst.msk [vmem:[%s2056] ss:$2 sm:$0x3] %vm2041, %v2054
    %v2058 = vcombine.high %v2050, %v2050
    %s2060 = scalar_lea.vmem [#allocation5], 12
    %2061 = vst.msk [vmem:[%s2060] ss:$2 sm:$0x3] %vm2041, %v2058
    %v2064 = vrot.slane %v2016, 4
    %v2065 = vrot.slane %v2017, 4
    %2068 = vst [vmem:[%s22] sm:$0xf0] %v2064
    %2069 = vst [vmem:[%s22 + $0x8] sm:$0xf0] %v2065
    %v2070 = vcombine.low %v2016, %v2017
    %v2072 = vunpack.c.l.s4 1966171168
    %v2073 = vunpack.c.0.s8 %v2072
    %v2074 = vlaneseq
    %v2075 = vshrl.u32 %v2074, 7
    %v2076 = vsub.s32 %v2073, %v2075
    %v2077 = vrot.slane %v2070, %v2076
    %v2079 = vunpack.c.l.s4 1966171168
    %v2080 = vunpack.c.0.s8 %v2079
    %v2081 = vlaneseq
    %v2082 = vshrl.u32 %v2081, 7
    %v2083 = vsub.s32 %v2080, %v2082
    %v2084 = vrot.slane %v2077, %v2083
    %s2086 = scalar_lea.vmem [#allocation5], 1
    %2087 = vst.msk [vmem:[%s2086] ss:$2 sm:$0x3] %vm2041, %v2084
    %v2088 = vcombine.high %v2077, %v2077
    %v2090 = vunpack.c.l.s4 1966171168
    %v2091 = vunpack.c.0.s8 %v2090
    %v2092 = vlaneseq
    %v2093 = vshrl.u32 %v2092, 7
    %v2094 = vsub.s32 %v2091, %v2093
    %v2095 = vrot.slane %v2088, %v2094
    %s2097 = scalar_lea.vmem [#allocation5], 5
    %2098 = vst.msk [vmem:[%s2097] ss:$2 sm:$0x3] %vm2041, %v2095
    %v2099 = vcombine.high %v2084, %v2084
    %s2101 = scalar_lea.vmem [#allocation5], 9
    %2102 = vst.msk [vmem:[%s2101] ss:$2 sm:$0x3] %vm2041, %v2099
    %v2103 = vcombine.high %v2095, %v2095
    %s2105 = scalar_lea.vmem [#allocation5], 13
    %2106 = vst.msk [vmem:[%s2105] ss:$2 sm:$0x3] %vm2041, %v2103
    %v2107 = vld [vmem:[#allocation5] sm:$0xff]
    %v2108 = vld [vmem:[#allocation5 + $0x8] sm:$0xff]
    %v2109 = vld [vmem:[#allocation20] sm:$0xff]
    %v2110 = vld [vmem:[#allocation20 + $0x8] sm:$0xff]
    %v2111 = vld [vmem:[#allocation20 + $0x10] sm:$0xff]
    %v2112 = vld [vmem:[#allocation20 + $0x18] sm:$0xff]
    %v2113 = vld [vmem:[#allocation20 + $0x20] sm:$0xff]
    %v2114 = vld [vmem:[#allocation20 + $0x28] sm:$0xff]
    %v2115 = vld [vmem:[#allocation20 + $0x30] sm:$0xff]
    %v2116 = vld [vmem:[#allocation20 + $0x38] sm:$0xff]
    %v2117 = vld [vmem:[#allocation20 + $0x40] sm:$0xff]
    %v2118 = vld [vmem:[#allocation20 + $0x48] sm:$0xff]
    %v2119 = vld [vmem:[#allocation20 + $0x50] sm:$0xff]
    %v2120 = vld [vmem:[#allocation20 + $0x58] sm:$0xff]
    %v2121 = vld [vmem:[#allocation20 + $0x60] sm:$0xff]
    %v2122 = vld [vmem:[#allocation20 + $0x68] sm:$0xff]
    %v2123 = vld [vmem:[#allocation20 + $0x70] sm:$0xff]
    %v2124 = vld [vmem:[#allocation20 + $0x78] sm:$0xff]
    %v2125 = vld [vmem:[#allocation20 + $0x80] sm:$0xff]
    %v2126 = vld [vmem:[#allocation20 + $0x88] sm:$0xff]
    %v2127 = vld [vmem:[#allocation20 + $0x90] sm:$0xff]
    %v2128 = vld [vmem:[#allocation20 + $0x98] sm:$0xff]
    %v2129 = vld [vmem:[#allocation20 + $0xa0] sm:$0xff]
    %v2130 = vld [vmem:[#allocation20 + $0xa8] sm:$0xff]
    %v2131 = vld [vmem:[#allocation20 + $0xb0] sm:$0xff]
    %v2132 = vld [vmem:[#allocation20 + $0xb8] sm:$0xff]
    %v2133 = vld [vmem:[#allocation20 + $0xc0] sm:$0xff]
    %v2134 = vld [vmem:[#allocation20 + $0xc8] sm:$0xff]
    %v2135 = vld [vmem:[#allocation20 + $0xd0] sm:$0xff]
    %v2136 = vld [vmem:[#allocation20 + $0xd8] sm:$0xff]
    %v2137 = vld [vmem:[#allocation20 + $0xe0] sm:$0xff]
    %v2138 = vld [vmem:[#allocation20 + $0xe8] sm:$0xff]
    %v2139 = vld [vmem:[#allocation20 + $0xf0] sm:$0xff]
    %v2140 = vld [vmem:[#allocation20 + $0xf8] sm:$0xff]
    %v2141 = vld [vmem:[#allocation20 + $0x100] sm:$0xff]
    %v2142 = vld [vmem:[#allocation20 + $0x108] sm:$0xff]
    %v2143 = vld [vmem:[#allocation20 + $0x110] sm:$0xff]
    %v2144 = vld [vmem:[#allocation20 + $0x118] sm:$0xff]
    %v2145 = vld [vmem:[#allocation20 + $0x120] sm:$0xff]
    %v2146 = vld [vmem:[#allocation20 + $0x128] sm:$0xff]
    %v2147 = vld [vmem:[#allocation20 + $0x130] sm:$0xff]
    %v2148 = vld [vmem:[#allocation20 + $0x138] sm:$0xff]
    %v2149 = vld [vmem:[#allocation20 + $0x140] sm:$0xff]
    %v2150 = vld [vmem:[#allocation20 + $0x148] sm:$0xff]
    %v2151 = vld [vmem:[#allocation20 + $0x150] sm:$0xff]
    %v2152 = vld [vmem:[#allocation20 + $0x158] sm:$0xff]
    %v2153 = vld [vmem:[#allocation20 + $0x160] sm:$0xff]
    %v2154 = vld [vmem:[#allocation20 + $0x168] sm:$0xff]
    %v2155 = vld [vmem:[#allocation20 + $0x170] sm:$0xff]
    %v2156 = vld [vmem:[#allocation20 + $0x178] sm:$0xff]
    %v2157 = vld [vmem:[#allocation20 + $0x180] sm:$0xff]
    %v2158 = vld [vmem:[#allocation20 + $0x188] sm:$0xff]
    %v2159 = vld [vmem:[#allocation20 + $0x190] sm:$0xff]
    %v2160 = vld [vmem:[#allocation20 + $0x198] sm:$0xff]
    %v2161 = vld [vmem:[#allocation20 + $0x1a0] sm:$0xff]
    %v2162 = vld [vmem:[#allocation20 + $0x1a8] sm:$0xff]
    %v2163 = vld [vmem:[#allocation20 + $0x1b0] sm:$0xff]
    %v2164 = vld [vmem:[#allocation20 + $0x1b8] sm:$0xff]
    %v2165 = vld [vmem:[#allocation20 + $0x1c0] sm:$0xff]
    %v2166 = vld [vmem:[#allocation20 + $0x1c8] sm:$0xff]
    %v2167 = vld [vmem:[#allocation20 + $0x1d0] sm:$0xff]
    %v2168 = vld [vmem:[#allocation20 + $0x1d8] sm:$0xff]
    %v2169 = vld [vmem:[#allocation20 + $0x1e0] sm:$0xff]
    %v2170 = vld [vmem:[#allocation20 + $0x1e8] sm:$0xff]
    %v2171 = vld [vmem:[#allocation20 + $0x1f0] sm:$0xff]
    %v2172 = vld [vmem:[#allocation20 + $0x1f8] sm:$0xff]
    %v2173 = vld [vmem:[#allocation20 + $0x200] sm:$0xff]
    %v2174 = vld [vmem:[#allocation20 + $0x208] sm:$0xff]
    %v2175 = vld [vmem:[#allocation20 + $0x210] sm:$0xff]
    %v2176 = vld [vmem:[#allocation20 + $0x218] sm:$0xff]
    %v2177 = vld [vmem:[#allocation20 + $0x220] sm:$0xff]
    %v2178 = vld [vmem:[#allocation20 + $0x228] sm:$0xff]
    %v2179 = vld [vmem:[#allocation20 + $0x230] sm:$0xff]
    %v2180 = vld [vmem:[#allocation20 + $0x238] sm:$0xff]
    %v2181 = vld [vmem:[#allocation20 + $0x240] sm:$0xff]
    %v2182 = vld [vmem:[#allocation20 + $0x248] sm:$0xff]
    %v2183 = vld [vmem:[#allocation20 + $0x250] sm:$0xff]
    %v2184 = vld [vmem:[#allocation20 + $0x258] sm:$0xff]
    %v2185 = vld [vmem:[#allocation20 + $0x260] sm:$0xff]
    %v2186 = vld [vmem:[#allocation20 + $0x268] sm:$0xff]
    %v2187 = vld [vmem:[#allocation20 + $0x270] sm:$0xff]
    %v2188 = vld [vmem:[#allocation20 + $0x278] sm:$0xff]
    %v2189 = vld [vmem:[#allocation20 + $0x280] sm:$0xff]
    %v2190 = vld [vmem:[#allocation20 + $0x288] sm:$0xff]
    %v2191 = vld [vmem:[#allocation20 + $0x290] sm:$0xff]
    %v2192 = vld [vmem:[#allocation20 + $0x298] sm:$0xff]
    %v2193 = vld [vmem:[#allocation20 + $0x2a0] sm:$0xff]
    %v2194 = vld [vmem:[#allocation20 + $0x2a8] sm:$0xff]
    %v2195 = vld [vmem:[#allocation20 + $0x2b0] sm:$0xff]
    %v2196 = vld [vmem:[#allocation20 + $0x2b8] sm:$0xff]
    %v2197 = vld [vmem:[#allocation20 + $0x2c0] sm:$0xff]
    %v2198 = vld [vmem:[#allocation20 + $0x2c8] sm:$0xff]
    %v2199 = vld [vmem:[#allocation20 + $0x2d0] sm:$0xff]
    %v2200 = vld [vmem:[#allocation20 + $0x2d8] sm:$0xff]
    %v2201 = vld [vmem:[#allocation20 + $0x2e0] sm:$0xff]
    %v2202 = vld [vmem:[#allocation20 + $0x2e8] sm:$0xff]
    %v2203 = vld [vmem:[#allocation20 + $0x2f0] sm:$0xff]
    %v2204 = vld [vmem:[#allocation20 + $0x2f8] sm:$0xff]
    %v2205 = vld [vmem:[#allocation20 + $0x300] sm:$0xff]
    %v2206 = vld [vmem:[#allocation20 + $0x308] sm:$0xff]
    %v2207 = vld [vmem:[#allocation20 + $0x310] sm:$0xff]
    %v2208 = vld [vmem:[#allocation20 + $0x318] sm:$0xff]
    %v2209 = vld [vmem:[#allocation20 + $0x320] sm:$0xff]
    %v2210 = vld [vmem:[#allocation20 + $0x328] sm:$0xff]
    %v2211 = vld [vmem:[#allocation20 + $0x330] sm:$0xff]
    %v2212 = vld [vmem:[#allocation20 + $0x338] sm:$0xff]
    %v2213 = vld [vmem:[#allocation20 + $0x340] sm:$0xff]
    %v2214 = vld [vmem:[#allocation20 + $0x348] sm:$0xff]
    %v2215 = vld [vmem:[#allocation20 + $0x350] sm:$0xff]
    %v2216 = vld [vmem:[#allocation20 + $0x358] sm:$0xff]
    %v2217 = vld [vmem:[#allocation20 + $0x360] sm:$0xff]
    %v2218 = vld [vmem:[#allocation20 + $0x368] sm:$0xff]
    %v2219 = vld [vmem:[#allocation20 + $0x370] sm:$0xff]
    %v2220 = vld [vmem:[#allocation20 + $0x378] sm:$0xff]
    %v2221 = vld [vmem:[#allocation20 + $0x380] sm:$0xff]
    %v2222 = vld [vmem:[#allocation20 + $0x388] sm:$0xff]
    %v2223 = vld [vmem:[#allocation20 + $0x390] sm:$0xff]
    %v2224 = vld [vmem:[#allocation20 + $0x398] sm:$0xff]
    %v2225 = vld [vmem:[#allocation20 + $0x3a0] sm:$0xff]
    %v2226 = vld [vmem:[#allocation20 + $0x3a8] sm:$0xff]
    %v2227 = vld [vmem:[#allocation20 + $0x3b0] sm:$0xff]
    %v2228 = vld [vmem:[#allocation20 + $0x3b8] sm:$0xff]
    %v2229 = vld [vmem:[#allocation20 + $0x3c0] sm:$0xff]
    %v2230 = vld [vmem:[#allocation20 + $0x3c8] sm:$0xff]
    %v2231 = vld [vmem:[#allocation20 + $0x3d0] sm:$0xff]
    %v2232 = vld [vmem:[#allocation20 + $0x3d8] sm:$0xff]
    %v2233 = vld [vmem:[#allocation20 + $0x3e0] sm:$0xff]
    %v2234 = vld [vmem:[#allocation20 + $0x3e8] sm:$0xff]
    %v2235 = vld [vmem:[#allocation20 + $0x3f0] sm:$0xff]
    %v2236 = vld [vmem:[#allocation20 + $0x3f8] sm:$0xff]
    %v2237 = vld [vmem:[#allocation20 + $0x400] sm:$0xff]
    %v2238 = vld [vmem:[#allocation20 + $0x408] sm:$0xff]
    %v2239 = vld [vmem:[#allocation20 + $0x410] sm:$0xff]
    %v2240 = vld [vmem:[#allocation20 + $0x418] sm:$0xff]
    %v2241 = vld [vmem:[#allocation20 + $0x420] sm:$0xff]
    %v2242 = vld [vmem:[#allocation20 + $0x428] sm:$0xff]
    %v2243 = vld [vmem:[#allocation20 + $0x430] sm:$0xff]
    %v2244 = vld [vmem:[#allocation20 + $0x438] sm:$0xff]
    %v2245 = vld [vmem:[#allocation20 + $0x440] sm:$0xff]
    %v2246 = vld [vmem:[#allocation20 + $0x448] sm:$0xff]
    %v2247 = vld [vmem:[#allocation20 + $0x450] sm:$0xff]
    %v2248 = vld [vmem:[#allocation20 + $0x458] sm:$0xff]
    %v2249 = vld [vmem:[#allocation20 + $0x460] sm:$0xff]
    %v2250 = vld [vmem:[#allocation20 + $0x468] sm:$0xff]
    %v2251 = vld [vmem:[#allocation20 + $0x470] sm:$0xff]
    %v2252 = vld [vmem:[#allocation20 + $0x478] sm:$0xff]
    %v2253 = vld [vmem:[#allocation20 + $0x480] sm:$0xff]
    %v2254 = vld [vmem:[#allocation20 + $0x488] sm:$0xff]
    %v2255 = vld [vmem:[#allocation20 + $0x490] sm:$0xff]
    %v2256 = vld [vmem:[#allocation20 + $0x498] sm:$0xff]
    %v2257 = vld [vmem:[#allocation20 + $0x4a0] sm:$0xff]
    %v2258 = vld [vmem:[#allocation20 + $0x4a8] sm:$0xff]
    %v2259 = vld [vmem:[#allocation20 + $0x4b0] sm:$0xff]
    %v2260 = vld [vmem:[#allocation20 + $0x4b8] sm:$0xff]
    %v2261 = vld [vmem:[#allocation20 + $0x4c0] sm:$0xff]
    %v2262 = vld [vmem:[#allocation20 + $0x4c8] sm:$0xff]
    %v2263 = vld [vmem:[#allocation20 + $0x4d0] sm:$0xff]
    %v2264 = vld [vmem:[#allocation20 + $0x4d8] sm:$0xff]
    %v2265 = vld [vmem:[#allocation20 + $0x4e0] sm:$0xff]
    %v2266 = vld [vmem:[#allocation20 + $0x4e8] sm:$0xff]
    %v2267 = vld [vmem:[#allocation20 + $0x4f0] sm:$0xff]
    %v2268 = vld [vmem:[#allocation20 + $0x4f8] sm:$0xff]
    %v2269 = vld [vmem:[#allocation20 + $0x500] sm:$0xff]
    %v2270 = vld [vmem:[#allocation20 + $0x508] sm:$0xff]
    %v2271 = vld [vmem:[#allocation20 + $0x510] sm:$0xff]
    %v2272 = vld [vmem:[#allocation20 + $0x518] sm:$0xff]
    %v2273 = vld [vmem:[#allocation20 + $0x520] sm:$0xff]
    %v2274 = vld [vmem:[#allocation20 + $0x528] sm:$0xff]
    %v2275 = vld [vmem:[#allocation20 + $0x530] sm:$0xff]
    %v2276 = vld [vmem:[#allocation20 + $0x538] sm:$0xff]
    %v2277 = vld [vmem:[#allocation20 + $0x540] sm:$0xff]
    %v2278 = vld [vmem:[#allocation20 + $0x548] sm:$0xff]
    %v2279 = vld [vmem:[#allocation20 + $0x550] sm:$0xff]
    %v2280 = vld [vmem:[#allocation20 + $0x558] sm:$0xff]
    %v2281 = vld [vmem:[#allocation20 + $0x560] sm:$0xff]
    %v2282 = vld [vmem:[#allocation20 + $0x568] sm:$0xff]
    %v2283 = vld [vmem:[#allocation20 + $0x570] sm:$0xff]
    %v2284 = vld [vmem:[#allocation20 + $0x578] sm:$0xff]
    %v2285 = vld [vmem:[#allocation20 + $0x580] sm:$0xff]
    %v2286 = vld [vmem:[#allocation20 + $0x588] sm:$0xff]
    %v2287 = vld [vmem:[#allocation20 + $0x590] sm:$0xff]
    %v2288 = vld [vmem:[#allocation20 + $0x598] sm:$0xff]
    %v2289 = vld [vmem:[#allocation20 + $0x5a0] sm:$0xff]
    %v2290 = vld [vmem:[#allocation20 + $0x5a8] sm:$0xff]
    %v2291 = vld [vmem:[#allocation20 + $0x5b0] sm:$0xff]
    %v2292 = vld [vmem:[#allocation20 + $0x5b8] sm:$0xff]
    %v2293 = vld [vmem:[#allocation20 + $0x5c0] sm:$0xff]
    %v2294 = vld [vmem:[#allocation20 + $0x5c8] sm:$0xff]
    %v2295 = vld [vmem:[#allocation20 + $0x5d0] sm:$0xff]
    %v2296 = vld [vmem:[#allocation20 + $0x5d8] sm:$0xff]
    %v2297 = vld [vmem:[#allocation20 + $0x5e0] sm:$0xff]
    %v2298 = vld [vmem:[#allocation20 + $0x5e8] sm:$0xff]
    %v2299 = vld [vmem:[#allocation20 + $0x5f0] sm:$0xff]
    %v2300 = vld [vmem:[#allocation20 + $0x5f8] sm:$0xff]
    %v2301 = vld [vmem:[#allocation20 + $0x600] sm:$0xff]
    %v2302 = vld [vmem:[#allocation20 + $0x608] sm:$0xff]
    %v2303 = vld [vmem:[#allocation20 + $0x610] sm:$0xff]
    %v2304 = vld [vmem:[#allocation20 + $0x618] sm:$0xff]
    %v2305 = vld [vmem:[#allocation20 + $0x620] sm:$0xff]
    %v2306 = vld [vmem:[#allocation20 + $0x628] sm:$0xff]
    %v2307 = vld [vmem:[#allocation20 + $0x630] sm:$0xff]
    %v2308 = vld [vmem:[#allocation20 + $0x638] sm:$0xff]
    %v2309 = vld [vmem:[#allocation20 + $0x640] sm:$0xff]
    %v2310 = vld [vmem:[#allocation20 + $0x648] sm:$0xff]
    %v2311 = vld [vmem:[#allocation20 + $0x650] sm:$0xff]
    %v2312 = vld [vmem:[#allocation20 + $0x658] sm:$0xff]
    %v2313 = vld [vmem:[#allocation20 + $0x660] sm:$0xff]
    %v2314 = vld [vmem:[#allocation20 + $0x668] sm:$0xff]
    %v2315 = vld [vmem:[#allocation20 + $0x670] sm:$0xff]
    %v2316 = vld [vmem:[#allocation20 + $0x678] sm:$0xff]
    %v2317 = vld [vmem:[#allocation20 + $0x680] sm:$0xff]
    %v2318 = vld [vmem:[#allocation20 + $0x688] sm:$0xff]
    %v2319 = vld [vmem:[#allocation20 + $0x690] sm:$0xff]
    %v2320 = vld [vmem:[#allocation20 + $0x698] sm:$0xff]
    %v2321 = vld [vmem:[#allocation20 + $0x6a0] sm:$0xff]
    %v2322 = vld [vmem:[#allocation20 + $0x6a8] sm:$0xff]
    %v2323 = vld [vmem:[#allocation20 + $0x6b0] sm:$0xff]
    %v2324 = vld [vmem:[#allocation20 + $0x6b8] sm:$0xff]
    %v2325 = vld [vmem:[#allocation20 + $0x6c0] sm:$0xff]
    %v2326 = vld [vmem:[#allocation20 + $0x6c8] sm:$0xff]
    %v2327 = vld [vmem:[#allocation20 + $0x6d0] sm:$0xff]
    %v2328 = vld [vmem:[#allocation20 + $0x6d8] sm:$0xff]
    %v2329 = vld [vmem:[#allocation20 + $0x6e0] sm:$0xff]
    %v2330 = vld [vmem:[#allocation20 + $0x6e8] sm:$0xff]
    %v2331 = vld [vmem:[#allocation20 + $0x6f0] sm:$0xff]
    %v2332 = vld [vmem:[#allocation20 + $0x6f8] sm:$0xff]
    %v2333 = vld [vmem:[#allocation20 + $0x700] sm:$0xff]
    %v2334 = vld [vmem:[#allocation20 + $0x708] sm:$0xff]
    %v2335 = vld [vmem:[#allocation20 + $0x710] sm:$0xff]
    %v2336 = vld [vmem:[#allocation20 + $0x718] sm:$0xff]
    %v2337 = vld [vmem:[#allocation20 + $0x720] sm:$0xff]
    %v2338 = vld [vmem:[#allocation20 + $0x728] sm:$0xff]
    %v2339 = vld [vmem:[#allocation20 + $0x730] sm:$0xff]
    %v2340 = vld [vmem:[#allocation20 + $0x738] sm:$0xff]
    %v2341 = vld [vmem:[#allocation20 + $0x740] sm:$0xff]
    %v2342 = vld [vmem:[#allocation20 + $0x748] sm:$0xff]
    %v2343 = vld [vmem:[#allocation20 + $0x750] sm:$0xff]
    %v2344 = vld [vmem:[#allocation20 + $0x758] sm:$0xff]
    %v2345 = vld [vmem:[#allocation20 + $0x760] sm:$0xff]
    %v2346 = vld [vmem:[#allocation20 + $0x768] sm:$0xff]
    %v2347 = vld [vmem:[#allocation20 + $0x770] sm:$0xff]
    %v2348 = vld [vmem:[#allocation20 + $0x778] sm:$0xff]
    %v2349 = vld [vmem:[#allocation20 + $0x780] sm:$0xff]
    %v2350 = vld [vmem:[#allocation20 + $0x788] sm:$0xff]
    %v2351 = vld [vmem:[#allocation20 + $0x790] sm:$0xff]
    %v2352 = vld [vmem:[#allocation20 + $0x798] sm:$0xff]
    %v2353 = vld [vmem:[#allocation20 + $0x7a0] sm:$0xff]
    %v2354 = vld [vmem:[#allocation20 + $0x7a8] sm:$0xff]
    %v2355 = vld [vmem:[#allocation20 + $0x7b0] sm:$0xff]
    %v2356 = vld [vmem:[#allocation20 + $0x7b8] sm:$0xff]
    %v2357 = vld [vmem:[#allocation20 + $0x7c0] sm:$0xff]
    %v2358 = vld [vmem:[#allocation20 + $0x7c8] sm:$0xff]
    %v2359 = vld [vmem:[#allocation20 + $0x7d0] sm:$0xff]
    %v2360 = vld [vmem:[#allocation20 + $0x7d8] sm:$0xff]
    %v2361 = vld [vmem:[#allocation20 + $0x7e0] sm:$0xff]
    %v2362 = vld [vmem:[#allocation20 + $0x7e8] sm:$0xff]
    %v2363 = vld [vmem:[#allocation20 + $0x7f0] sm:$0xff]
    %v2364 = vld [vmem:[#allocation20 + $0x7f8] sm:$0xff]
    %v2367 = vcombine.high %v2107, %v2107
    %v2369 = vunpack.c.l.s4 1983009808
    %v2370 = vunpack.c.0.s8 %v2369
    %v2371 = vlaneseq
    %v2372 = vshrl.u32 %v2371, 7
    %v2373 = vsub.s32 %v2370, %v2372
    %v2374 = vrot.slane %v2107, %v2373
    %v2376 = vunpack.c.l.s4 1983009808
    %v2377 = vunpack.c.0.s8 %v2376
    %v2378 = vlaneseq
    %v2379 = vshrl.u32 %v2378, 7
    %v2380 = vsub.s32 %v2377, %v2379
    %v2381 = vrot.slane %v2367, %v2380
    %v2382 = vcombine.high %v2374, %v2374
    %v2383 = vcombine.high %v2381, %v2381
    %v2384 = vcombine.high %v2108, %v2108
    %v2386 = vunpack.c.l.s4 1983009808
    %v2387 = vunpack.c.0.s8 %v2386
    %v2388 = vlaneseq
    %v2389 = vshrl.u32 %v2388, 7
    %v2390 = vsub.s32 %v2387, %v2389
    %v2391 = vrot.slane %v2108, %v2390
    %v2393 = vunpack.c.l.s4 1983009808
    %v2394 = vunpack.c.0.s8 %v2393
    %v2395 = vlaneseq
    %v2396 = vshrl.u32 %v2395, 7
    %v2397 = vsub.s32 %v2394, %v2396
    %v2398 = vrot.slane %v2384, %v2397
    %v2399 = vcombine.high %v2391, %v2391
    %v2400 = vcombine.high %v2398, %v2398
    %2409 = vmatprep.subr.mxu0 %v2110
    %2410 = vmatpush1.msra.mxu0 %v2109
    %2411 = vmatprep.subr.mxu0 %v2112
    %2412 = vmatpush1.msra.mxu0 %v2111
    %2413 = vmatprep.subr.mxu0 %v2114
    %2414 = vmatpush1.msra.mxu0 %v2113
    %2415 = vmatprep.subr.mxu0 %v2116
    %2416 = vmatpush1.msra.mxu0 %v2115
    %2417 = vmatprep.subr.mxu0 %v2118
    %2418 = vmatpush1.msra.mxu0 %v2117
    %2419 = vmatprep.subr.mxu0 %v2120
    %2420 = vmatpush1.msra.mxu0 %v2119
    %2421 = vmatprep.subr.mxu0 %v2122
    %2422 = vmatpush1.msra.mxu0 %v2121
    %2423 = vmatprep.subr.mxu0 %v2124
    %2424 = vmatpush1.msra.mxu0 %v2123
    %2425 = vmatprep.subr.mxu0 %v2126
    %2426 = vmatpush1.msra.mxu0 %v2125
    %2427 = vmatprep.subr.mxu0 %v2128
    %2428 = vmatpush1.msra.mxu0 %v2127
    %2429 = vmatprep.subr.mxu0 %v2130
    %2430 = vmatpush1.msra.mxu0 %v2129
    %2431 = vmatprep.subr.mxu0 %v2132
    %2432 = vmatpush1.msra.mxu0 %v2131
    %2433 = vmatprep.subr.mxu0 %v2134
    %2434 = vmatpush1.msra.mxu0 %v2133
    %2435 = vmatprep.subr.mxu0 %v2136
    %2436 = vmatpush1.msra.mxu0 %v2135
    %2437 = vmatprep.subr.mxu0 %v2138
    %2438 = vmatpush1.msra.mxu0 %v2137
    %2439 = vmatprep.subr.mxu0 %v2140
    %2440 = vmatpush1.msra.mxu0 %v2139
    %2441 = vmatprep.subr.mxu0 %v2142
    %2442 = vmatpush1.msra.mxu0 %v2141
    %2443 = vmatprep.subr.mxu0 %v2144
    %2444 = vmatpush1.msra.mxu0 %v2143
    %2445 = vmatprep.subr.mxu0 %v2146
    %2446 = vmatpush1.msra.mxu0 %v2145
    %2447 = vmatprep.subr.mxu0 %v2148
    %2448 = vmatpush1.msra.mxu0 %v2147
    %2449 = vmatprep.subr.mxu0 %v2150
    %2450 = vmatpush1.msra.mxu0 %v2149
    %2451 = vmatprep.subr.mxu0 %v2152
    %2452 = vmatpush1.msra.mxu0 %v2151
    %2453 = vmatprep.subr.mxu0 %v2154
    %2454 = vmatpush1.msra.mxu0 %v2153
    %2455 = vmatprep.subr.mxu0 %v2156
    %2456 = vmatpush1.msra.mxu0 %v2155
    %2457 = vmatprep.subr.mxu0 %v2158
    %2458 = vmatpush1.msra.mxu0 %v2157
    %2459 = vmatprep.subr.mxu0 %v2160
    %2460 = vmatpush1.msra.mxu0 %v2159
    %2461 = vmatprep.subr.mxu0 %v2162
    %2462 = vmatpush1.msra.mxu0 %v2161
    %2463 = vmatprep.subr.mxu0 %v2164
    %2464 = vmatpush1.msra.mxu0 %v2163
    %2465 = vmatprep.subr.mxu0 %v2166
    %2466 = vmatpush1.msra.mxu0 %v2165
    %2467 = vmatprep.subr.mxu0 %v2168
    %2468 = vmatpush1.msra.mxu0 %v2167
    %2469 = vmatprep.subr.mxu0 %v2170
    %2470 = vmatpush1.msra.mxu0 %v2169
    %2471 = vmatprep.subr.mxu0 %v2172
    %2472 = vmatpush1.msra.mxu0 %v2171
    %2473 = vmatprep.mubr.f32.mxu0 %v2382
    %2474 = vmatmul.mubr.f32.gmra.mrb[0].mxu0 %v2374
    %v2475 = vpop.f32.mrb[0].mxu0
    %v2476 = vadd.f32 0.0, %v2475
    %v2477 = vpop.f32.mrb[0].mxu0
    %v2478 = vadd.f32 0.0, %v2477
    %2479 = vdwg.mxu0
    %2480 = vmatprep.subr.mxu0 %v2174
    %2481 = vmatpush1.msra.mxu0 %v2173
    %2482 = vmatprep.subr.mxu0 %v2176
    %2483 = vmatpush1.msra.mxu0 %v2175
    %2484 = vmatprep.subr.mxu0 %v2178
    %2485 = vmatpush1.msra.mxu0 %v2177
    %2486 = vmatprep.subr.mxu0 %v2180
    %2487 = vmatpush1.msra.mxu0 %v2179
    %2488 = vmatprep.subr.mxu0 %v2182
    %2489 = vmatpush1.msra.mxu0 %v2181
    %2490 = vmatprep.subr.mxu0 %v2184
    %2491 = vmatpush1.msra.mxu0 %v2183
    %2492 = vmatprep.subr.mxu0 %v2186
    %2493 = vmatpush1.msra.mxu0 %v2185
    %2494 = vmatprep.subr.mxu0 %v2188
    %2495 = vmatpush1.msra.mxu0 %v2187
    %2496 = vmatprep.subr.mxu0 %v2190
    %2497 = vmatpush1.msra.mxu0 %v2189
    %2498 = vmatprep.subr.mxu0 %v2192
    %2499 = vmatpush1.msra.mxu0 %v2191
    %2500 = vmatprep.subr.mxu0 %v2194
    %2501 = vmatpush1.msra.mxu0 %v2193
    %2502 = vmatprep.subr.mxu0 %v2196
    %2503 = vmatpush1.msra.mxu0 %v2195
    %2504 = vmatprep.subr.mxu0 %v2198
    %2505 = vmatpush1.msra.mxu0 %v2197
    %2506 = vmatprep.subr.mxu0 %v2200
    %2507 = vmatpush1.msra.mxu0 %v2199
    %2508 = vmatprep.subr.mxu0 %v2202
    %2509 = vmatpush1.msra.mxu0 %v2201
    %2510 = vmatprep.subr.mxu0 %v2204
    %2511 = vmatpush1.msra.mxu0 %v2203
    %2512 = vmatprep.subr.mxu0 %v2206
    %2513 = vmatpush1.msra.mxu0 %v2205
    %2514 = vmatprep.subr.mxu0 %v2208
    %2515 = vmatpush1.msra.mxu0 %v2207
    %2516 = vmatprep.subr.mxu0 %v2210
    %2517 = vmatpush1.msra.mxu0 %v2209
    %2518 = vmatprep.subr.mxu0 %v2212
    %2519 = vmatpush1.msra.mxu0 %v2211
    %2520 = vmatprep.subr.mxu0 %v2214
    %2521 = vmatpush1.msra.mxu0 %v2213
    %2522 = vmatprep.subr.mxu0 %v2216
    %2523 = vmatpush1.msra.mxu0 %v2215
    %2524 = vmatprep.subr.mxu0 %v2218
    %2525 = vmatpush1.msra.mxu0 %v2217
    %2526 = vmatprep.subr.mxu0 %v2220
    %2527 = vmatpush1.msra.mxu0 %v2219
    %2528 = vmatprep.subr.mxu0 %v2222
    %2529 = vmatpush1.msra.mxu0 %v2221
    %2530 = vmatprep.subr.mxu0 %v2224
    %2531 = vmatpush1.msra.mxu0 %v2223
    %2532 = vmatprep.subr.mxu0 %v2226
    %2533 = vmatpush1.msra.mxu0 %v2225
    %2534 = vmatprep.subr.mxu0 %v2228
    %2535 = vmatpush1.msra.mxu0 %v2227
    %2536 = vmatprep.subr.mxu0 %v2230
    %2537 = vmatpush1.msra.mxu0 %v2229
    %2538 = vmatprep.subr.mxu0 %v2232
    %2539 = vmatpush1.msra.mxu0 %v2231
    %2540 = vmatprep.subr.mxu0 %v2234
    %2541 = vmatpush1.msra.mxu0 %v2233
    %2542 = vmatprep.subr.mxu0 %v2236
    %2543 = vmatpush1.msra.mxu0 %v2235
    %2544 = vmatprep.mubr.f32.mxu0 %v2383
    %2545 = vmatmul.mubr.f32.gmra.mrb[0].mxu0 %v2381
    %v2546 = vpop.f32.mrb[0].mxu0
    %v2547 = vadd.f32 %v2476, %v2546
    %v2548 = vpop.f32.mrb[0].mxu0
    %v2549 = vadd.f32 %v2478, %v2548
    %2550 = vdwg.mxu0
    %2551 = vmatprep.subr.mxu0 %v2238
    %2552 = vmatpush1.msra.mxu0 %v2237
    %2553 = vmatprep.subr.mxu0 %v2240
    %2554 = vmatpush1.msra.mxu0 %v2239
    %2555 = vmatprep.subr.mxu0 %v2242
    %2556 = vmatpush1.msra.mxu0 %v2241
    %2557 = vmatprep.subr.mxu0 %v2244
    %2558 = vmatpush1.msra.mxu0 %v2243
    %2559 = vmatprep.subr.mxu0 %v2246
    %2560 = vmatpush1.msra.mxu0 %v2245
    %2561 = vmatprep.subr.mxu0 %v2248
    %2562 = vmatpush1.msra.mxu0 %v2247
    %2563 = vmatprep.subr.mxu0 %v2250
    %2564 = vmatpush1.msra.mxu0 %v2249
    %2565 = vmatprep.subr.mxu0 %v2252
    %2566 = vmatpush1.msra.mxu0 %v2251
    %2567 = vmatprep.subr.mxu0 %v2254
    %2568 = vmatpush1.msra.mxu0 %v2253
    %2569 = vmatprep.subr.mxu0 %v2256
    %2570 = vmatpush1.msra.mxu0 %v2255
    %2571 = vmatprep.subr.mxu0 %v2258
    %2572 = vmatpush1.msra.mxu0 %v2257
    %2573 = vmatprep.subr.mxu0 %v2260
    %2574 = vmatpush1.msra.mxu0 %v2259
    %2575 = vmatprep.subr.mxu0 %v2262
    %2576 = vmatpush1.msra.mxu0 %v2261
    %2577 = vmatprep.subr.mxu0 %v2264
    %2578 = vmatpush1.msra.mxu0 %v2263
    %2579 = vmatprep.subr.mxu0 %v2266
    %2580 = vmatpush1.msra.mxu0 %v2265
    %2581 = vmatprep.subr.mxu0 %v2268
    %2582 = vmatpush1.msra.mxu0 %v2267
    %2583 = vmatprep.subr.mxu0 %v2270
    %2584 = vmatpush1.msra.mxu0 %v2269
    %2585 = vmatprep.subr.mxu0 %v2272
    %2586 = vmatpush1.msra.mxu0 %v2271
    %2587 = vmatprep.subr.mxu0 %v2274
    %2588 = vmatpush1.msra.mxu0 %v2273
    %2589 = vmatprep.subr.mxu0 %v2276
    %2590 = vmatpush1.msra.mxu0 %v2275
    %2591 = vmatprep.subr.mxu0 %v2278
    %2592 = vmatpush1.msra.mxu0 %v2277
    %2593 = vmatprep.subr.mxu0 %v2280
    %2594 = vmatpush1.msra.mxu0 %v2279
    %2595 = vmatprep.subr.mxu0 %v2282
    %2596 = vmatpush1.msra.mxu0 %v2281
    %2597 = vmatprep.subr.mxu0 %v2284
    %2598 = vmatpush1.msra.mxu0 %v2283
    %2599 = vmatprep.subr.mxu0 %v2286
    %2600 = vmatpush1.msra.mxu0 %v2285
    %2601 = vmatprep.subr.mxu0 %v2288
    %2602 = vmatpush1.msra.mxu0 %v2287
    %2603 = vmatprep.subr.mxu0 %v2290
    %2604 = vmatpush1.msra.mxu0 %v2289
    %2605 = vmatprep.subr.mxu0 %v2292
    %2606 = vmatpush1.msra.mxu0 %v2291
    %2607 = vmatprep.subr.mxu0 %v2294
    %2608 = vmatpush1.msra.mxu0 %v2293
    %2609 = vmatprep.subr.mxu0 %v2296
    %2610 = vmatpush1.msra.mxu0 %v2295
    %2611 = vmatprep.subr.mxu0 %v2298
    %2612 = vmatpush1.msra.mxu0 %v2297
    %2613 = vmatprep.subr.mxu0 %v2300
    %2614 = vmatpush1.msra.mxu0 %v2299
    %2615 = vmatprep.mubr.f32.mxu0 %v2399
    %2616 = vmatmul.mubr.f32.gmra.mrb[0].mxu0 %v2391
    %v2617 = vpop.f32.mrb[0].mxu0
    %v2618 = vadd.f32 %v2547, %v2617
    %v2619 = vpop.f32.mrb[0].mxu0
    %v2620 = vadd.f32 %v2549, %v2619
    %2621 = vdwg.mxu0
    %2622 = vmatprep.subr.mxu0 %v2302
    %2623 = vmatpush1.msra.mxu0 %v2301
    %2624 = vmatprep.subr.mxu0 %v2304
    %2625 = vmatpush1.msra.mxu0 %v2303
    %2626 = vmatprep.subr.mxu0 %v2306
    %2627 = vmatpush1.msra.mxu0 %v2305
    %2628 = vmatprep.subr.mxu0 %v2308
    %2629 = vmatpush1.msra.mxu0 %v2307
    %2630 = vmatprep.subr.mxu0 %v2310
    %2631 = vmatpush1.msra.mxu0 %v2309
    %2632 = vmatprep.subr.mxu0 %v2312
    %2633 = vmatpush1.msra.mxu0 %v2311
    %2634 = vmatprep.subr.mxu0 %v2314
    %2635 = vmatpush1.msra.mxu0 %v2313
    %2636 = vmatprep.subr.mxu0 %v2316
    %2637 = vmatpush1.msra.mxu0 %v2315
    %2638 = vmatprep.subr.mxu0 %v2318
    %2639 = vmatpush1.msra.mxu0 %v2317
    %2640 = vmatprep.subr.mxu0 %v2320
    %2641 = vmatpush1.msra.mxu0 %v2319
    %2642 = vmatprep.subr.mxu0 %v2322
    %2643 = vmatpush1.msra.mxu0 %v2321
    %2644 = vmatprep.subr.mxu0 %v2324
    %2645 = vmatpush1.msra.mxu0 %v2323
    %2646 = vmatprep.subr.mxu0 %v2326
    %2647 = vmatpush1.msra.mxu0 %v2325
    %2648 = vmatprep.subr.mxu0 %v2328
    %2649 = vmatpush1.msra.mxu0 %v2327
    %2650 = vmatprep.subr.mxu0 %v2330
    %2651 = vmatpush1.msra.mxu0 %v2329
    %2652 = vmatprep.subr.mxu0 %v2332
    %2653 = vmatpush1.msra.mxu0 %v2331
    %2654 = vmatprep.subr.mxu0 %v2334
    %2655 = vmatpush1.msra.mxu0 %v2333
    %2656 = vmatprep.subr.mxu0 %v2336
    %2657 = vmatpush1.msra.mxu0 %v2335
    %2658 = vmatprep.subr.mxu0 %v2338
    %2659 = vmatpush1.msra.mxu0 %v2337
    %2660 = vmatprep.subr.mxu0 %v2340
    %2661 = vmatpush1.msra.mxu0 %v2339
    %2662 = vmatprep.subr.mxu0 %v2342
    %2663 = vmatpush1.msra.mxu0 %v2341
    %2664 = vmatprep.subr.mxu0 %v2344
    %2665 = vmatpush1.msra.mxu0 %v2343
    %2666 = vmatprep.subr.mxu0 %v2346
    %2667 = vmatpush1.msra.mxu0 %v2345
    %2668 = vmatprep.subr.mxu0 %v2348
    %2669 = vmatpush1.msra.mxu0 %v2347
    %2670 = vmatprep.subr.mxu0 %v2350
    %2671 = vmatpush1.msra.mxu0 %v2349
    %2672 = vmatprep.subr.mxu0 %v2352
    %2673 = vmatpush1.msra.mxu0 %v2351
    %2674 = vmatprep.subr.mxu0 %v2354
    %2675 = vmatpush1.msra.mxu0 %v2353
    %2676 = vmatprep.subr.mxu0 %v2356
    %2677 = vmatpush1.msra.mxu0 %v2355
    %2678 = vmatprep.subr.mxu0 %v2358
    %2679 = vmatpush1.msra.mxu0 %v2357
    %2680 = vmatprep.subr.mxu0 %v2360
    %2681 = vmatpush1.msra.mxu0 %v2359
    %2682 = vmatprep.subr.mxu0 %v2362
    %2683 = vmatpush1.msra.mxu0 %v2361
    %2684 = vmatprep.subr.mxu0 %v2364
    %2685 = vmatpush1.msra.mxu0 %v2363
    %2686 = vmatprep.mubr.f32.mxu0 %v2400
    %2687 = vmatmul.mubr.f32.gmra.mrb[0].mxu0 %v2398
    %v2688 = vpop.f32.mrb[0].mxu0
    %v2689 = vadd.f32 %v2618, %v2688
    %v2690 = vpop.f32.mrb[0].mxu0
    %v2691 = vadd.f32 %v2620, %v2690
    %2692 = vdwg.mxu0
    %v2693 = vld [vmem:[#allocation21] sm:$0x3]
    %v2695 = vlaneseq
    %v2696 = vshrl.u32 %v2695, 7
    %v2697 = vsub.s32 0, %v2696
    %v2698 = vrot.slane %v2693, %v2697
    %v2699 = vlaneseq
    %v2700 = vshrl.u32 %v2699, 7
    %v2701 = vsub.s32 1, %v2700
    %v2702 = vrot.slane %v2693, %v2701
    %v2705 = vmul.f32 %v2689, %v2698
    %v2706 = vmul.f32 %v2691, %v2702
    %v2707 = vld [vmem:[#allocation23] sm:$0x3]
    %v2709 = vlaneseq
    %v2710 = vshrl.u32 %v2709, 7
    %v2711 = vsub.s32 0, %v2710
    %v2712 = vrot.slane %v2707, %v2711
    %v2713 = vlaneseq
    %v2714 = vshrl.u32 %v2713, 7
    %v2715 = vsub.s32 1, %v2714
    %v2716 = vrot.slane %v2707, %v2715
    %v2719 = vadd.f32 %v2705, %v2712
    %v2720 = vadd.f32 %v2706, %v2716
    %v2721 = vmax.f32 %v2719, 0.0
    %v2722 = vmax.f32 %v2720, 0.0
    %v2723 = vld [vmem:[%s13] sm:$0xff]
    %v2724 = vld [vmem:[%s13 + $0x8] sm:$0xff]
    %v2725 = vld [vmem:[%s13 + $0x10] sm:$0xff]
    %v2726 = vld [vmem:[%s13 + $0x18] sm:$0xff]
    %v2727 = vld [vmem:[%s13 + $0x20] sm:$0xff]
    %v2728 = vld [vmem:[%s13 + $0x28] sm:$0xff]
    %v2729 = vld [vmem:[%s13 + $0x30] sm:$0xff]
    %v2730 = vld [vmem:[%s13 + $0x38] sm:$0xff]
    %v2731 = vld [vmem:[%s13 + $0x40] sm:$0xff]
    %v2732 = vld [vmem:[%s13 + $0x48] sm:$0xff]
    %v2733 = vld [vmem:[%s13 + $0x50] sm:$0xff]
    %v2734 = vld [vmem:[%s13 + $0x58] sm:$0xff]
    %v2735 = vld [vmem:[%s13 + $0x60] sm:$0xff]
    %v2736 = vld [vmem:[%s13 + $0x68] sm:$0xff]
    %v2737 = vld [vmem:[%s13 + $0x70] sm:$0xff]
    %v2738 = vld [vmem:[%s13 + $0x78] sm:$0xff]
    %v2739 = vld [vmem:[%s13 + $0x80] sm:$0xff]
    %v2740 = vld [vmem:[%s13 + $0x88] sm:$0xff]
    %v2741 = vld [vmem:[%s13 + $0x90] sm:$0xff]
    %v2742 = vld [vmem:[%s13 + $0x98] sm:$0xff]
    %v2743 = vld [vmem:[%s13 + $0xa0] sm:$0xff]
    %v2744 = vld [vmem:[%s13 + $0xa8] sm:$0xff]
    %v2745 = vld [vmem:[%s13 + $0xb0] sm:$0xff]
    %v2746 = vld [vmem:[%s13 + $0xb8] sm:$0xff]
    %v2747 = vld [vmem:[%s13 + $0xc0] sm:$0xff]
    %v2748 = vld [vmem:[%s13 + $0xc8] sm:$0xff]
    %v2749 = vld [vmem:[%s13 + $0xd0] sm:$0xff]
    %v2750 = vld [vmem:[%s13 + $0xd8] sm:$0xff]
    %v2751 = vld [vmem:[%s13 + $0xe0] sm:$0xff]
    %v2752 = vld [vmem:[%s13 + $0xe8] sm:$0xff]
    %v2753 = vld [vmem:[%s13 + $0xf0] sm:$0xff]
    %v2754 = vld [vmem:[%s13 + $0xf8] sm:$0xff]
    %2755 = vmatprep.subr.mxu0 0.0
    %2756 = vmatpush1.msra.mxu0 %v2723
    %2757 = vmatprep.subr.mxu0 0.0
    %2758 = vmatpush1.msra.mxu0 %v2724
    %2759 = vmatprep.subr.mxu0 0.0
    %2760 = vmatpush1.msra.mxu0 %v2725
    %2761 = vmatprep.subr.mxu0 0.0
    %2762 = vmatpush1.msra.mxu0 %v2726
    %2763 = vmatprep.subr.mxu0 0.0
    %2764 = vmatpush1.msra.mxu0 %v2727
    %2765 = vmatprep.subr.mxu0 0.0
    %2766 = vmatpush1.msra.mxu0 %v2728
    %2767 = vmatprep.subr.mxu0 0.0
    %2768 = vmatpush1.msra.mxu0 %v2729
    %2769 = vmatprep.subr.mxu0 0.0
    %2770 = vmatpush1.msra.mxu0 %v2730
    %2771 = vmatprep.subr.mxu0 0.0
    %2772 = vmatpush1.msra.mxu0 %v2731
    %2773 = vmatprep.subr.mxu0 0.0
    %2774 = vmatpush1.msra.mxu0 %v2732
    %2775 = vmatprep.subr.mxu0 0.0
    %2776 = vmatpush1.msra.mxu0 %v2733
    %2777 = vmatprep.subr.mxu0 0.0
    %2778 = vmatpush1.msra.mxu0 %v2734
    %2779 = vmatprep.subr.mxu0 0.0
    %2780 = vmatpush1.msra.mxu0 %v2735
    %2781 = vmatprep.subr.mxu0 0.0
    %2782 = vmatpush1.msra.mxu0 %v2736
    %2783 = vmatprep.subr.mxu0 0.0
    %2784 = vmatpush1.msra.mxu0 %v2737
    %2785 = vmatprep.subr.mxu0 0.0
    %2786 = vmatpush1.msra.mxu0 %v2738
    %2787 = vmatprep.subr.mxu0 0.0
    %2788 = vmatpush1.msra.mxu0 %v2739
    %2789 = vmatprep.subr.mxu0 0.0
    %2790 = vmatpush1.msra.mxu0 %v2740
    %2791 = vmatprep.subr.mxu0 0.0
    %2792 = vmatpush1.msra.mxu0 %v2741
    %2793 = vmatprep.subr.mxu0 0.0
    %2794 = vmatpush1.msra.mxu0 %v2742
    %2795 = vmatprep.subr.mxu0 0.0
    %2796 = vmatpush1.msra.mxu0 %v2743
    %2797 = vmatprep.subr.mxu0 0.0
    %2798 = vmatpush1.msra.mxu0 %v2744
    %2799 = vmatprep.subr.mxu0 0.0
    %2800 = vmatpush1.msra.mxu0 %v2745
    %2801 = vmatprep.subr.mxu0 0.0
    %2802 = vmatpush1.msra.mxu0 %v2746
    %2803 = vmatprep.subr.mxu0 0.0
    %2804 = vmatpush1.msra.mxu0 %v2747
    %2805 = vmatprep.subr.mxu0 0.0
    %2806 = vmatpush1.msra.mxu0 %v2748
    %2807 = vmatprep.subr.mxu0 0.0
    %2808 = vmatpush1.msra.mxu0 %v2749
    %2809 = vmatprep.subr.mxu0 0.0
    %2810 = vmatpush1.msra.mxu0 %v2750
    %2811 = vmatprep.subr.mxu0 0.0
    %2812 = vmatpush1.msra.mxu0 %v2751
    %2813 = vmatprep.subr.mxu0 0.0
    %2814 = vmatpush1.msra.mxu0 %v2752
    %2815 = vmatprep.subr.mxu0 0.0
    %2816 = vmatpush1.msra.mxu0 %v2753
    %2817 = vmatprep.subr.mxu0 0.0
    %2818 = vmatpush1.msra.mxu0 %v2754
    %2819 = vmatprep.mubr.f32.mxu0 %v2722
    %2820 = vmatmul.mubr.f32.gmra.mrb[0].mxu0 %v2721
    %v2821 = vpop.f32.mrb[0].mxu0
    %v2822 = vadd.f32 0.0, %v2821
    %v2823 = vpop.f32.mrb[0].mxu0
    %2824 = vdwg.mxu0
    %v2825 = vld [vmem:[#allocation24] sm:$0x1]
    %v2827 = vlaneseq
    %v2828 = vshrl.u32 %v2827, 7
    %v2829 = vsub.s32 0, %v2828
    %v2830 = vrot.slane %v2825, %v2829
    %v2832 = vmul.f32 %v2822, %v2830
    %v2833 = vld [vmem:[#allocation26] sm:$0x1]
    %v2835 = vlaneseq
    %v2836 = vshrl.u32 %v2835, 7
    %v2837 = vsub.s32 0, %v2836
    %v2838 = vrot.slane %v2833, %v2837
    %v2840 = vadd.f32 %v2832, %v2838
    %v2841 = vmax.f32 %v2840, 0.0
    %v2842 = vld [vmem:[%s16] sm:$0xff]
    %v2843 = vld [vmem:[%s16 + $0x8] sm:$0xff]
    %v2844 = vld [vmem:[%s16 + $0x10] sm:$0xff]
    %v2845 = vld [vmem:[%s16 + $0x18] sm:$0xff]
    %v2846 = vld [vmem:[%s16 + $0x20] sm:$0xff]
    %v2847 = vld [vmem:[%s16 + $0x28] sm:$0xff]
    %v2848 = vld [vmem:[%s16 + $0x30] sm:$0xff]
    %v2849 = vld [vmem:[%s16 + $0x38] sm:$0xff]
    %vm2850 = vcmask 523264
    %v2852 = vsel %vm2850, %v2841, 0
    %2854 = vmatprep.subr.mxu0 0.0
    %2855 = vmatpush1.msra.mxu0 %v2842
    %2856 = vmatprep.subr.mxu0 0.0
    %2857 = vmatpush1.msra.mxu0 %v2843
    %2858 = vmatprep.subr.mxu0 0.0
    %2859 = vmatpush1.msra.mxu0 %v2844
    %2860 = vmatprep.subr.mxu0 0.0
    %2861 = vmatpush1.msra.mxu0 %v2845
    %2862 = vmatprep.subr.mxu0 0.0
    %2863 = vmatpush1.msra.mxu0 %v2846
    %2864 = vmatprep.subr.mxu0 0.0
    %2865 = vmatpush1.msra.mxu0 %v2847
    %2866 = vmatprep.subr.mxu0 0.0
    %2867 = vmatpush1.msra.mxu0 %v2848
    %2868 = vmatprep.subr.mxu0 0.0
    %2869 = vmatpush1.msra.mxu0 %v2849
    %2870 = vmatprep.subr.mxu0 0.0
    %2871 = vmatpush1.msra.mxu0 0.0
    %2872 = vmatprep.subr.mxu0 0.0
    %2873 = vmatpush1.msra.mxu0 0.0
    %2874 = vmatprep.subr.mxu0 0.0
    %2875 = vmatpush1.msra.mxu0 0.0
    %2876 = vmatprep.subr.mxu0 0.0
    %2877 = vmatpush1.msra.mxu0 0.0
    %2878 = vmatprep.subr.mxu0 0.0
    %2879 = vmatpush1.msra.mxu0 0.0
    %2880 = vmatprep.subr.mxu0 0.0
    %2881 = vmatpush1.msra.mxu0 0.0
    %2882 = vmatprep.subr.mxu0 0.0
    %2883 = vmatpush1.msra.mxu0 0.0
    %2884 = vmatprep.subr.mxu0 0.0
    %2885 = vmatpush1.msra.mxu0 0.0
    %2886 = vmatprep.subr.mxu0 0.0
    %2887 = vmatpush1.msra.mxu0 0.0
    %2888 = vmatprep.subr.mxu0 0.0
    %2889 = vmatpush1.msra.mxu0 0.0
    %2890 = vmatprep.subr.mxu0 0.0
    %2891 = vmatpush1.msra.mxu0 0.0
    %2892 = vmatprep.subr.mxu0 0.0
    %2893 = vmatpush1.msra.mxu0 0.0
    %2894 = vmatprep.subr.mxu0 0.0
    %2895 = vmatpush1.msra.mxu0 0.0
    %2896 = vmatprep.subr.mxu0 0.0
    %2897 = vmatpush1.msra.mxu0 0.0
    %2898 = vmatprep.subr.mxu0 0.0
    %2899 = vmatpush1.msra.mxu0 0.0
    %2900 = vmatprep.subr.mxu0 0.0
    %2901 = vmatpush1.msra.mxu0 0.0
    %2902 = vmatprep.subr.mxu0 0.0
    %2903 = vmatpush1.msra.mxu0 0.0
    %2904 = vmatprep.subr.mxu0 0.0
    %2905 = vmatpush1.msra.mxu0 0.0
    %2906 = vmatprep.subr.mxu0 0.0
    %2907 = vmatpush1.msra.mxu0 0.0
    %2908 = vmatprep.subr.mxu0 0.0
    %2909 = vmatpush1.msra.mxu0 0.0
    %2910 = vmatprep.subr.mxu0 0.0
    %2911 = vmatpush1.msra.mxu0 0.0
    %2912 = vmatprep.subr.mxu0 0.0
    %2913 = vmatpush1.msra.mxu0 0.0
    %2914 = vmatprep.subr.mxu0 0.0
    %2915 = vmatpush1.msra.mxu0 0.0
    %2916 = vmatprep.subr.mxu0 0.0
    %2917 = vmatpush1.msra.mxu0 0.0
    %2918 = vmatprep.mubr.f32.mxu0 0.0
    %2919 = vmatmul.mubr.f32.gmra.mrb[0].mxu0 %v2852
    %v2920 = vpop.f32.mrb[0].mxu0
    %v2921 = vadd.f32 0.0, %v2920
    %v2922 = vpop.f32.mrb[0].mxu0
    %2923 = vdwg.mxu0
    %v2924 = vld [vmem:[#allocation27] sm:$0x1]
    %v2926 = vlaneseq
    %v2927 = vshrl.u32 %v2926, 7
    %v2928 = vsub.s32 0, %v2927
    %v2929 = vrot.slane %v2924, %v2928
    %v2931 = vmul.f32 %v2921, %v2929
    %v2932 = vld [vmem:[#allocation29] sm:$0x1]
    %v2934 = vlaneseq
    %v2935 = vshrl.u32 %v2934, 7
    %v2936 = vsub.s32 0, %v2935
    %v2937 = vrot.slane %v2932, %v2936
    %v2939 = vadd.f32 %v2931, %v2937
    %v2940 = vmax.f32 %v2939, 0.0
    %v2941 = vld [vmem:[%s19] sm:$0xff]
    %v2942 = vld [vmem:[%s19 + $0x8] sm:$0xff]
    %v2943 = vld [vmem:[#allocation30] sm:$0x1]
    %v2945 = vlaneseq
    %v2946 = vshrl.u32 %v2945, 7
    %v2947 = vsub.s32 0, %v2946
    %v2948 = vrot.slane %v2943, %v2947
    %vm2950 = vcmask 130048
    %v2952 = vsel %vm2950, %v2940, 0
    %2954 = vmatprep.subr.mxu0 0.0
    %2955 = vmatpush1.msra.mxu0 %v2941
    %2956 = vmatprep.subr.mxu0 0.0
    %2957 = vmatpush1.msra.mxu0 %v2942
    %2958 = vmatprep.subr.mxu0 0.0
    %2959 = vmatpush1.msra.mxu0 0.0
    %2960 = vmatprep.subr.mxu0 0.0
    %2961 = vmatpush1.msra.mxu0 0.0
    %2962 = vmatprep.subr.mxu0 0.0
    %2963 = vmatpush1.msra.mxu0 0.0
    %2964 = vmatprep.subr.mxu0 0.0
    %2965 = vmatpush1.msra.mxu0 0.0
    %2966 = vmatprep.subr.mxu0 0.0
    %2967 = vmatpush1.msra.mxu0 0.0
    %2968 = vmatprep.subr.mxu0 0.0
    %2969 = vmatpush1.msra.mxu0 0.0
    %2970 = vmatprep.subr.mxu0 0.0
    %2971 = vmatpush1.msra.mxu0 0.0
    %2972 = vmatprep.subr.mxu0 0.0
    %2973 = vmatpush1.msra.mxu0 0.0
    %2974 = vmatprep.subr.mxu0 0.0
    %2975 = vmatpush1.msra.mxu0 0.0
    %2976 = vmatprep.subr.mxu0 0.0
    %2977 = vmatpush1.msra.mxu0 0.0
    %2978 = vmatprep.subr.mxu0 0.0
    %2979 = vmatpush1.msra.mxu0 0.0
    %2980 = vmatprep.subr.mxu0 0.0
    %2981 = vmatpush1.msra.mxu0 0.0
    %2982 = vmatprep.subr.mxu0 0.0
    %2983 = vmatpush1.msra.mxu0 0.0
    %2984 = vmatprep.subr.mxu0 0.0
    %2985 = vmatpush1.msra.mxu0 0.0
    %2986 = vmatprep.subr.mxu0 0.0
    %2987 = vmatpush1.msra.mxu0 0.0
    %2988 = vmatprep.subr.mxu0 0.0
    %2989 = vmatpush1.msra.mxu0 0.0
    %2990 = vmatprep.subr.mxu0 0.0
    %2991 = vmatpush1.msra.mxu0 0.0
    %2992 = vmatprep.subr.mxu0 0.0
    %2993 = vmatpush1.msra.mxu0 0.0
    %2994 = vmatprep.subr.mxu0 0.0
    %2995 = vmatpush1.msra.mxu0 0.0
    %2996 = vmatprep.subr.mxu0 0.0
    %2997 = vmatpush1.msra.mxu0 0.0
    %2998 = vmatprep.subr.mxu0 0.0
    %2999 = vmatpush1.msra.mxu0 0.0
    %3000 = vmatprep.subr.mxu0 0.0
    %3001 = vmatpush1.msra.mxu0 0.0
    %3002 = vmatprep.subr.mxu0 0.0
    %3003 = vmatpush1.msra.mxu0 0.0
    %3004 = vmatprep.subr.mxu0 0.0
    %3005 = vmatpush1.msra.mxu0 0.0
    %3006 = vmatprep.subr.mxu0 0.0
    %3007 = vmatpush1.msra.mxu0 0.0
    %3008 = vmatprep.subr.mxu0 0.0
    %3009 = vmatpush1.msra.mxu0 0.0
    %3010 = vmatprep.subr.mxu0 0.0
    %3011 = vmatpush1.msra.mxu0 0.0
    %3012 = vmatprep.subr.mxu0 0.0
    %3013 = vmatpush1.msra.mxu0 0.0
    %3014 = vmatprep.subr.mxu0 0.0
    %3015 = vmatpush1.msra.mxu0 0.0
    %3016 = vmatprep.subr.mxu0 0.0
    %3017 = vmatpush1.msra.mxu0 0.0
    %3018 = vmatprep.mubr.f32.mxu0 0.0
    %3019 = vmatmul.mubr.f32.gmra.mrb[0].mxu0 %v2952
    %v3020 = vpop.f32.mrb[0].mxu0
    %v3021 = vadd.f32 %v2948, %v3020
    %v3022 = vpop.f32.mrb[0].mxu0
    %3023 = vdwg.mxu0
    %vm3024 = vcmask 66560
    %v3025 = vsel %vm3024, %v3021, -inf
    %3026 = vmax.xlane.f32.xlu0 %v3025
    %v3027 = vpop.xlane.xlu0 %3026
    %v3028 = vsub.f32 %v3021, %v3027
    %v3029 = vmul.f32 %v3028, 1.442695
    %v3030 = vpow.pop %v3029
    %v3031 = vsel %vm3024, %v3030, 0.0
    %3032 = vadd.xlane.f32.xlu0 %v3031
    %v3033 = vpop.xlane.xlu0 %3032
    %v3034 = vlog2.pop %v3033
    %v3035 = vmul.f32 %v3034, 0.6931472
    %v3036 = vsub.f32 %v3028, %v3035
    %3037 = vst.msk [vmem:[#allocation32] sm:$0x3] %vm3024, %v3036
    // Predicated region
    $region150: #{cnn_forward.1} parent=1 // pred_check
      _
    $region151: #{cnn_forward.1} parent=1 // pred_check_branch
      %3039 = sbr.rel (0) target = $region153
    $region152: #{cnn_forward.1} parent=1 // pred_region
      %s3041 = ssub.s32 32, 32
      %3042 = vsyncadd [#allocation8], %s3041
      %s3044 = sshll.u32 [#allocation32], 4
      %s3045 = int_to_ptr.vmem [resolvable:$true] %s3044
      %3047 = dma.vmem_to_hbm [thread:$0]  %s3045, 32, %s21, [#allocation8]
    $region153: #{cnn_forward.1} parent=1 // pred_fallthru
      _
    // Predicated region
    $region154: #{cnn_forward.1} parent=1 // pred_check
      _
    $region155: #{cnn_forward.1} parent=1 // pred_check_branch
      %3049 = sbr.rel (0) target = $region157
    $region156: #{cnn_forward.1} parent=1 // pred_region
      _
    $region157: #{cnn_forward.1} parent=1 // pred_fallthru
      _
    // Predicated region
    $region158: #{cnn_forward.1} parent=1 // pred_check
      _
    $region159: #{cnn_forward.1} parent=1 // pred_check_branch
      %3051 = sbr.rel (0) target = $region161
    $region160: #{cnn_forward.1} parent=1 // pred_region
      %3052 = dma.done [#allocation8], 32
    $region161: #{cnn_forward.1} parent=1 // pred_fallthru
      _
    // Predicated region
    $region162: #{cnn_forward.1} parent=1 // pred_check
      _
    $region163: #{cnn_forward.1} parent=1 // pred_check_branch
      %3054 = sbr.rel (0) target = $region165
    $region164: #{cnn_forward.1} parent=1 // pred_region
      _
    $region165: #{cnn_forward.1} parent=1 // pred_fallthru
      _
    %3055 = vsyncpa [#allocation7], 1
    %3056 = vsyncpa [#allocation10], 1
    %3057 = vsyncpa [#allocation13], 1
    %3058 = vsyncpa [#allocation16], 1
    %3059 = vsyncpa [#allocation19], 1
    %3060 = vsyncpa [#allocation22], 1
    %3061 = vsyncpa [#allocation25], 1
    %3062 = vsyncpa [#allocation28], 1
    %3063 = vsyncpa [#allocation31], 1
    %3064 = vsyncpa [#allocation8], 1

</llo_original>
